<compile_context>
chip_gen: v7x
topology: tpu7x:2x2x1
jax: 0.10.0
libtpu: 0.0.40
codegen_flags: <defaults>
</compile_context>

<pallas_src>
import functools

import jax
import jax.numpy as jnp
from jax.experimental import pallas as pl
from jax.experimental.pallas import tpu as pltpu

# ---------------------------------------------------------------------------
# Model hyper-parameters (small, consistent with the module)
# ---------------------------------------------------------------------------
DIM      = 32                      # channel dim (C)
HEADS    = 4
DIM_HEAD = 8
INNER    = HEADS * DIM_HEAD        # 32
MLP_DIM  = 64
SCALE    = DIM_HEAD ** (-0.5)
BN_EPS   = 1e-5

N_BATCH  = 2
H_SP = W_SP = D_SP = 4             # spatial extents
L_TOKENS = H_SP * W_SP * D_SP      # 64
SEQ      = L_TOKENS + 1            # 65 (patch tokens + cls token)


# ---------------------------------------------------------------------------
# Fused kernel: cls-concat + attention + BN1 + FFN + BN2 + layout split
# ---------------------------------------------------------------------------
def _fused_kernel(x_ref, cls_ref, wqkv_ref, wout_ref, w1_ref, b1_ref, w2_ref,
                  aux_ref, xo_ref, co_ref, xs_ref, ao_ref,
                  *, n_batch, seq, seq_pad, l_tok):
    """x_ref: (N, C, L); cls_ref: (N, 1, C); xo_ref: (N, C, L); co_ref: (N, 1, C).

    In-kernel token layout (batch stride = seq_pad, sublane aligned):
        rows [b*seq_pad, b*seq_pad + L)        : patch tokens of batch b
        row   b*seq_pad + L                    : cls token of batch b
        rows (b*seq_pad + L, (b+1)*seq_pad)    : zero padding (masked out of BN stats)
    Attention softmax (per query over all real keys) and BatchNorm stats are
    token-order invariant, so this reordering is mathematically identical to the
    module's cat((cls, patches), dim=1).
    """
    # Zero scratch so padding rows stay finite (they are masked out of BN stats).
    xs_ref[...] = jnp.zeros_like(xs_ref)
    ao_ref[...] = jnp.zeros_like(ao_ref)

    # ---- 1) assemble the (N*S_pad, C) token matrix in VMEM -------------------
    for b in range(n_batch):                                     # static unroll
        r0 = b * seq_pad
        xs_ref[r0:r0 + l_tok, :] = x_ref[b].T                    # (L, C) aligned
        xs_ref[r0 + l_tok:r0 + l_tok + 1, :] = cls_ref[b]        # (1, C)

    x = xs_ref[...]                                              # (N*Sp, C) f32

    # ---- 2) attention: fused QKV projection over all tokens ------------------
    qkv = jnp.dot(x, wqkv_ref[...], preferred_element_type=jnp.float32)
    q_all = qkv[:, 0:INNER] * SCALE                              # (N*Sp, INNER)
    k_all = qkv[:, INNER:2 * INNER]
    v_all = qkv[:, 2 * INNER:3 * INNER]

    # per (batch, head): contract over dim_head -> no explicit K transpose
    dn = (((1,), (1,)), ((), ()))
    for b in range(n_batch):                                     # static unroll
        r0 = b * seq_pad
        for h in range(HEADS):
            lo = h * DIM_HEAD
            qh = q_all[r0:r0 + seq, lo:lo + DIM_HEAD]            # (S, dh)
            kh = k_all[r0:r0 + seq, lo:lo + DIM_HEAD]            # (S, dh)
            vh = v_all[r0:r0 + seq, lo:lo + DIM_HEAD]            # (S, dh)

            dots = jax.lax.dot_general(qh, kh, dn,
                                       preferred_element_type=jnp.float32)
            dots = dots - jnp.max(dots, axis=-1, keepdims=True)
            e = jnp.exp(dots)
            p = e / jnp.sum(e, axis=-1, keepdims=True)
            # head output goes straight into its lane slice (no concatenate)
            ao_ref[r0:r0 + seq, lo:lo + DIM_HEAD] = jnp.dot(
                p, vh, preferred_element_type=jnp.float32)

    aux = aux_ref[...]                                           # (6, C) packed
    b_out, g1, beta1 = aux[0:1], aux[1:2], aux[2:3]
    b2, g2, beta2 = aux[3:4], aux[4:5], aux[5:6]

    # ---- 3) output projection + BatchNorm1d #1 (training-mode batch stats) ---
    # TODO(synk): running_mean / running_var momentum buffer updates are not tracked;
    #             batch statistics are applied directly (module.forward semantics).
    y = jnp.dot(ao_ref[...], wout_ref[...],
                preferred_element_type=jnp.float32) + b_out      # (N*Sp, C)

    total = n_batch * seq_pad
    rows = jax.lax.broadcasted_iota(jnp.int32, (total, 1), 0)
    valid = jnp.zeros((total, 1), jnp.float32)
    for b in range(n_batch):                                     # static, no int-mod
        lo_r, hi_r = b * seq_pad, b * seq_pad + seq
        valid = valid + ((rows >= lo_r) & (rows < hi_r)).astype(jnp.float32)
    inv_cnt = 1.0 / float(n_batch * seq)

    mean1 = jnp.sum(y * valid, axis=0, keepdims=True) * inv_cnt
    d1 = (y - mean1) * valid
    var1 = jnp.sum(d1 * d1, axis=0, keepdims=True) * inv_cnt
    y = (y - mean1) * jax.lax.rsqrt(var1 + BN_EPS) * g1 + beta1

    # ---- 4) FeedForward: Linear -> GELU(exact erf) -> Linear -----------------
    hdn = jnp.dot(y, w1_ref[...], preferred_element_type=jnp.float32) + b1_ref[...]
    hdn = 0.5 * hdn * (1.0 + jax.lax.erf(hdn * 0.7071067811865476))
    z = jnp.dot(hdn, w2_ref[...], preferred_element_type=jnp.float32) + b2

    # ---- 5) BatchNorm1d #2 ----------------------------------------------------
    mean2 = jnp.sum(z * valid, axis=0, keepdims=True) * inv_cnt
    d2 = (z - mean2) * valid
    var2 = jnp.sum(d2 * d2, axis=0, keepdims=True) * inv_cnt
    z = (z - mean2) * jax.lax.rsqrt(var2 + BN_EPS) * g2 + beta2

    # ---- 6) split back: (N, C, L) volume + (N, 1, C) cls ----------------------
    for b in range(n_batch):
        r0 = b * seq_pad
        xo_ref[b] = z[r0:r0 + l_tok, :].T.astype(xo_ref.dtype)
        co_ref[b] = z[r0 + l_tok:r0 + l_tok + 1, :].astype(co_ref.dtype)


# ---------------------------------------------------------------------------
# Wrapper
# ---------------------------------------------------------------------------
def _pack_aux(p):
    """Pack the six (C,)-sized affine/bias params into a single (6, C) tensor."""
    return jnp.concatenate(
        [p["b_out"],
         p["g1"].reshape(1, -1), p["beta1"].reshape(1, -1),
         p["b2"],
         p["g2"].reshape(1, -1), p["beta2"].reshape(1, -1)], axis=0)


@jax.jit
def deep_attention_cls_forward(x5, cls_token, p):
    n, c, h, w, d = x5.shape
    l = h * w * d
    s = l + 1
    s_pad = ((s + 7) // 8) * 8          # sublane-aligned per-batch token stride
    x_ncl = x5.reshape(n, c, l)         # free view reshape; transpose done in-kernel
    aux = _pack_aux(p)

    kernel = functools.partial(_fused_kernel, n_batch=n, seq=s,
                               seq_pad=s_pad, l_tok=l)
    x_out_ncl, cls_out = pl.pallas_call(
        kernel,
        out_shape=(jax.ShapeDtypeStruct((n, c, l), x5.dtype),
                   jax.ShapeDtypeStruct((n, 1, c), x5.dtype)),
        scratch_shapes=[pltpu.VMEM((n * s_pad, c), jnp.float32),       # token matrix
                        pltpu.VMEM((n * s_pad, INNER), jnp.float32)],  # head outputs
    )(x_ncl, cls_token, p["w_qkv"], p["w_out"], p["w1"], p["b1"], p["w2"], aux)

    return x_out_ncl.reshape(n, c, h, w, d), cls_out


# ---------------------------------------------------------------------------
# Pure-JAX reference (independent ground truth)
# ---------------------------------------------------------------------------
def _ref_forward(x5, cls_token, p):
    hp = jax.lax.Precision.HIGHEST
    n, c, h, w, d = x5.shape
    x = x5.reshape(n, c, -1).transpose(0, 2, 1)                  # (N, L, C)
    x = jnp.concatenate([cls_token, x], axis=1)                  # (N, S, C)
    s = x.shape[1]

    qkv = jnp.einsum("nsc,cm->nsm", x, p["w_qkv"], precision=hp)
    q, k, v = jnp.split(qkv, 3, axis=-1)

    def heads(t):
        return t.reshape(n, s, HEADS, DIM_HEAD).transpose(0, 2, 1, 3)

    q, k, v = heads(q), heads(k), heads(v)
    dots = jnp.einsum("bhnd,bhmd->bhnm", q, k, precision=hp) * SCALE
    attn = jax.nn.softmax(dots, axis=-1)
    out = jnp.einsum("bhnm,bhmd->bhnd", attn, v, precision=hp)
    out = out.transpose(0, 2, 1, 3).reshape(n, s, INNER)
    x = jnp.einsum("nsi,ic->nsc", out, p["w_out"], precision=hp) + p["b_out"]

    def bn(t, g, b):
        mean = jnp.mean(t, axis=(0, 1), keepdims=True)
        var = jnp.mean((t - mean) ** 2, axis=(0, 1), keepdims=True)
        return (t - mean) / jnp.sqrt(var + BN_EPS) * g + b

    x = bn(x, p["g1"], p["beta1"])
    hdn = jnp.einsum("nsc,cm->nsm", x, p["w1"], precision=hp) + p["b1"]
    hdn = 0.5 * hdn * (1.0 + jax.lax.erf(hdn * 0.7071067811865476))
    x = jnp.einsum("nsm,mc->nsc", hdn, p["w2"], precision=hp) + p["b2"]
    x = bn(x, p["g2"], p["beta2"])

    cls_out = x[:, 0:1, :]
    x_out = x[:, 1:, :].transpose(0, 2, 1).reshape(n, c, h, w, d)
    return x_out, cls_out


# ---------------------------------------------------------------------------
def _init_params(key):
    ks = jax.random.split(key, 7)

    def lin(kw, fan_in, fan_out, kb=None):
        bound = 1.0 / (fan_in ** 0.5)
        w = jax.random.uniform(kw, (fan_in, fan_out), jnp.float32, -bound, bound)
        if kb is None:
            return w, None
        b = jax.random.uniform(kb, (1, fan_out), jnp.float32, -bound, bound)
        return w, b

    w_qkv, _   = lin(ks[0], DIM, 3 * INNER)            # to_qkv (bias=False)
    w_out, b_o = lin(ks[1], INNER, DIM, ks[2])         # to_out Linear
    w1, b1     = lin(ks[3], DIM, MLP_DIM, ks[4])       # FFN Linear 1
    w2, b2     = lin(ks[5], MLP_DIM, DIM, ks[6])       # FFN Linear 2
    return dict(
        w_qkv=w_qkv, w_out=w_out, b_out=b_o, w1=w1, b1=b1, w2=w2, b2=b2,
        g1=jnp.ones((DIM,), jnp.float32), beta1=jnp.zeros((DIM,), jnp.float32),
        # spec: nn.init.constant_(norm2.weight, 0); nn.init.constant_(norm2.bias, 0)
        g2=jnp.zeros((DIM,), jnp.float32), beta2=jnp.zeros((DIM,), jnp.float32),
    )


if __name__ == "__main__":
    key = jax.random.PRNGKey(0)
    k_x, k_cls, k_p, k_g2, k_b2 = jax.random.split(key, 5)

    x5 = jax.random.normal(k_x, (N_BATCH, DIM, H_SP, W_SP, D_SP), jnp.float32)
    cls_token = jax.random.normal(k_cls, (N_BATCH, 1, DIM), jnp.float32)
    params = _init_params(k_p)                 # spec-faithful: norm2 gamma=beta=0

    x_out, cls_out = deep_attention_cls_forward(x5, cls_token, params)
    jax.block_until_ready((x_out, cls_out))
    assert x_out.shape == (N_BATCH, DIM, H_SP, W_SP, D_SP)
    assert cls_out.shape == (N_BATCH, 1, DIM)

    x_ref, cls_ref = _ref_forward(x5, cls_token, params)
    assert jnp.allclose(x_out, x_ref, atol=1e-5), "x mismatch vs reference"
    assert jnp.allclose(cls_out, cls_ref, atol=1e-5), "cls mismatch vs reference"

    # Stronger numerical check: the spec's gamma2 = beta2 = 0 makes the official
    # output identically zero, so also validate with non-degenerate BN2 params.
    params_chk = dict(params)
    params_chk["g2"] = jax.random.uniform(k_g2, (DIM,), jnp.float32, 0.5, 1.5)
    params_chk["beta2"] = jax.random.normal(k_b2, (DIM,), jnp.float32)
    x_out2, cls_out2 = deep_attention_cls_forward(x5, cls_token, params_chk)
    jax.block_until_ready((x_out2, cls_out2))
    x_ref2, cls_ref2 = _ref_forward(x5, cls_token, params_chk)
    # tolerance covers MXU pass-count differences vs XLA HIGHEST-precision reference
    assert jnp.allclose(x_out2, x_ref2, atol=2e-2, rtol=2e-2), "x mismatch (BN2 != 0)"
    assert jnp.allclose(cls_out2, cls_ref2, atol=2e-2, rtol=2e-2), "cls mismatch (BN2 != 0)"

    print("KERNEL_OK")
</pallas_src>

<mosaic_0001>
module attributes {stable_mosaic.version = 11 : i64} {
  func.func @_fused_kernel(%arg0: memref<2x32x64xf32, #tpu.memory_space<vmem>>, %arg1: memref<2x1x32xf32, #tpu.memory_space<vmem>>, %arg2: memref<32x96xf32, #tpu.memory_space<vmem>>, %arg3: memref<32x32xf32, #tpu.memory_space<vmem>>, %arg4: memref<32x64xf32, #tpu.memory_space<vmem>>, %arg5: memref<1x64xf32, #tpu.memory_space<vmem>>, %arg6: memref<64x32xf32, #tpu.memory_space<vmem>>, %arg7: memref<6x32xf32, #tpu.memory_space<vmem>>, %arg8: memref<2x32x64xf32, #tpu.memory_space<vmem>>, %arg9: memref<2x1x32xf32, #tpu.memory_space<vmem>>, %arg10: memref<144x32xf32, #tpu.memory_space<vmem>>, %arg11: memref<144x32xf32, #tpu.memory_space<vmem>>) attributes {dimension_semantics = [], scalar_prefetch = 0 : i64, scratch_operands = 2 : i64, tpu.core_type = #tpu.core_type<tc>} {
    %cst = arith.constant 0.000000e+00 : f32
    %0 = vector.broadcast %cst : f32 to vector<144x32xf32>
    %c0 = arith.constant 0 : index
    %c0_0 = arith.constant 0 : index
    %1 = vector.load %arg10[%c0, %c0_0] : memref<144x32xf32, #tpu.memory_space<vmem>>, vector<144x32xf32>
    tpu.vector_store %arg10[%c0, %c0_0], %0 {strides = array<i32>} : memref<144x32xf32, #tpu.memory_space<vmem>>, vector<144x32xf32>,
    %cst_1 = arith.constant 0.000000e+00 : f32
    %2 = vector.broadcast %cst_1 : f32 to vector<144x32xf32>
    %c0_2 = arith.constant 0 : index
    %c0_3 = arith.constant 0 : index
    %3 = vector.load %arg11[%c0_2, %c0_3] : memref<144x32xf32, #tpu.memory_space<vmem>>, vector<144x32xf32>
    tpu.vector_store %arg11[%c0_2, %c0_3], %2 {strides = array<i32>} : memref<144x32xf32, #tpu.memory_space<vmem>>, vector<144x32xf32>,
    %c0_4 = arith.constant 0 : index
    %c0_5 = arith.constant 0 : index
    %c0_6 = arith.constant 0 : index
    %4 = vector.load %arg0[%c0_4, %c0_5, %c0_6] : memref<2x32x64xf32, #tpu.memory_space<vmem>>, vector<1x32x64xf32>
    %5 = vector.shape_cast %4 : vector<1x32x64xf32> to vector<32x64xf32>
    %6 = tpu.transpose %5, [1, 0] : vector<32x64xf32> -> vector<64x32xf32>
    %c0_7 = arith.constant 0 : index
    %c0_8 = arith.constant 0 : index
    %7 = vector.load %arg10[%c0_7, %c0_8] : memref<144x32xf32, #tpu.memory_space<vmem>>, vector<64x32xf32>
    tpu.vector_store %arg10[%c0_7, %c0_8], %6 {strides = array<i32>} : memref<144x32xf32, #tpu.memory_space<vmem>>, vector<64x32xf32>,
    %c0_9 = arith.constant 0 : index
    %c0_10 = arith.constant 0 : index
    %c0_11 = arith.constant 0 : index
    %8 = vector.load %arg1[%c0_9, %c0_10, %c0_11] : memref<2x1x32xf32, #tpu.memory_space<vmem>>, vector<1x1x32xf32>
    %9 = vector.shape_cast %8 : vector<1x1x32xf32> to vector<1x32xf32>
    %c64 = arith.constant 64 : index
    %c0_12 = arith.constant 0 : index
    %10 = vector.load %arg10[%c64, %c0_12] : memref<144x32xf32, #tpu.memory_space<vmem>>, vector<1x32xf32>
    tpu.vector_store %arg10[%c64, %c0_12], %9 {strides = array<i32>} : memref<144x32xf32, #tpu.memory_space<vmem>>, vector<1x32xf32>,
    %c1 = arith.constant 1 : index
    %c0_13 = arith.constant 0 : index
    %c0_14 = arith.constant 0 : index
    %11 = vector.load %arg0[%c1, %c0_13, %c0_14] : memref<2x32x64xf32, #tpu.memory_space<vmem>>, vector<1x32x64xf32>
    %12 = vector.shape_cast %11 : vector<1x32x64xf32> to vector<32x64xf32>
    %13 = tpu.transpose %12, [1, 0] : vector<32x64xf32> -> vector<64x32xf32>
    %c72 = arith.constant 72 : index
    %c0_15 = arith.constant 0 : index
    %14 = vector.load %arg10[%c72, %c0_15] : memref<144x32xf32, #tpu.memory_space<vmem>>, vector<64x32xf32>
    tpu.vector_store %arg10[%c72, %c0_15], %13 {strides = array<i32>} : memref<144x32xf32, #tpu.memory_space<vmem>>, vector<64x32xf32>,
    %c1_16 = arith.constant 1 : index
    %c0_17 = arith.constant 0 : index
    %c0_18 = arith.constant 0 : index
    %15 = vector.load %arg1[%c1_16, %c0_17, %c0_18] : memref<2x1x32xf32, #tpu.memory_space<vmem>>, vector<1x1x32xf32>
    %16 = vector.shape_cast %15 : vector<1x1x32xf32> to vector<1x32xf32>
    %c136 = arith.constant 136 : index
    %c0_19 = arith.constant 0 : index
    %17 = vector.load %arg10[%c136, %c0_19] : memref<144x32xf32, #tpu.memory_space<vmem>>, vector<1x32xf32>
    tpu.vector_store %arg10[%c136, %c0_19], %16 {strides = array<i32>} : memref<144x32xf32, #tpu.memory_space<vmem>>, vector<1x32xf32>,
    %c0_20 = arith.constant 0 : index
    %c0_21 = arith.constant 0 : index
    %18 = vector.load %arg10[%c0_20, %c0_21] : memref<144x32xf32, #tpu.memory_space<vmem>>, vector<144x32xf32>
    %c0_22 = arith.constant 0 : index
    %c0_23 = arith.constant 0 : index
    %19 = vector.load %arg2[%c0_22, %c0_23] : memref<32x96xf32, #tpu.memory_space<vmem>>, vector<32x96xf32>
    %cst_24 = arith.constant dense<0.000000e+00> : vector<144x96xf32>
    %20 = tpu.matmul %18, %19, %cst_24 {dimension_numbers = #tpu.dot_dimension_numbers<[1], [0], [0], [1], [0, 0, 1, 1], [], []>} : vector<144x32xf32>, vector<32x96xf32>, vector<144x96xf32> -> vector<144x96xf32>
    %21 = vector.extract_strided_slice %20 {offsets = [0, 0], sizes = [144, 32], strides = [1, 1]} : vector<144x96xf32> to vector<144x32xf32>
    %cst_25 = arith.constant 0.353553385 : f32
    %22 = vector.broadcast %cst_25 : f32 to vector<144x32xf32>
    %23 = arith.mulf %21, %22 : vector<144x32xf32>
    %24 = vector.extract_strided_slice %20 {offsets = [0, 32], sizes = [144, 32], strides = [1, 1]} : vector<144x96xf32> to vector<144x32xf32>
    %25 = vector.extract_strided_slice %20 {offsets = [0, 64], sizes = [144, 32], strides = [1, 1]} : vector<144x96xf32> to vector<144x32xf32>
    %26 = vector.extract_strided_slice %23 {offsets = [0, 0], sizes = [65, 8], strides = [1, 1]} : vector<144x32xf32> to vector<65x8xf32>
    %27 = vector.extract_strided_slice %24 {offsets = [0, 0], sizes = [65, 8], strides = [1, 1]} : vector<144x32xf32> to vector<65x8xf32>
    %28 = vector.extract_strided_slice %25 {offsets = [0, 0], sizes = [65, 8], strides = [1, 1]} : vector<144x32xf32> to vector<65x8xf32>
    %cst_26 = arith.constant dense<0.000000e+00> : vector<65x65xf32>
    %29 = tpu.matmul %26, %27, %cst_26 {dimension_numbers = #tpu.dot_dimension_numbers<[1], [1], [0], [0], [0, 0, 1, 0], [], []>} : vector<65x8xf32>, vector<65x8xf32>, vector<65x65xf32> -> vector<65x65xf32>
    %cst_27 = arith.constant dense<0xFF800000> : vector<65xf32>
    %30 = vector.multi_reduction <maximumf>, %29, %cst_27 [1] : vector<65x65xf32> to vector<65xf32>
    %31 = vector.shape_cast %30 : vector<65xf32> to vector<65x1xf32>
    %32 = vector.broadcast %31 : vector<65x1xf32> to vector<65x65xf32>
    %33 = arith.subf %29, %32 : vector<65x65xf32>
    %34 = math.exp %33 : vector<65x65xf32>
    %cst_28 = arith.constant dense<0.000000e+00> : vector<65xf32>
    %35 = vector.multi_reduction <add>, %34, %cst_28 [1] : vector<65x65xf32> to vector<65xf32>
    %36 = vector.shape_cast %35 : vector<65xf32> to vector<65x1xf32>
    %37 = vector.broadcast %36 : vector<65x1xf32> to vector<65x65xf32>
    %38 = arith.divf %34, %37 : vector<65x65xf32>
    %cst_29 = arith.constant dense<0.000000e+00> : vector<65x8xf32>
    %39 = tpu.matmul %38, %28, %cst_29 {dimension_numbers = #tpu.dot_dimension_numbers<[1], [0], [0], [1], [0, 0, 1, 1], [], []>} : vector<65x65xf32>, vector<65x8xf32>, vector<65x8xf32> -> vector<65x8xf32>
    %c0_30 = arith.constant 0 : index
    %c0_31 = arith.constant 0 : index
    %40 = vector.load %arg11[%c0_30, %c0_31] : memref<144x32xf32, #tpu.memory_space<vmem>>, vector<65x8xf32>
    tpu.vector_store %arg11[%c0_30, %c0_31], %39 {strides = array<i32>} : memref<144x32xf32, #tpu.memory_space<vmem>>, vector<65x8xf32>,
    %41 = vector.extract_strided_slice %23 {offsets = [0, 8], sizes = [65, 8], strides = [1, 1]} : vector<144x32xf32> to vector<65x8xf32>
    %42 = vector.extract_strided_slice %24 {offsets = [0, 8], sizes = [65, 8], strides = [1, 1]} : vector<144x32xf32> to vector<65x8xf32>
    %43 = vector.extract_strided_slice %25 {offsets = [0, 8], sizes = [65, 8], strides = [1, 1]} : vector<144x32xf32> to vector<65x8xf32>
    %cst_32 = arith.constant dense<0.000000e+00> : vector<65x65xf32>
    %44 = tpu.matmul %41, %42, %cst_32 {dimension_numbers = #tpu.dot_dimension_numbers<[1], [1], [0], [0], [0, 0, 1, 0], [], []>} : vector<65x8xf32>, vector<65x8xf32>, vector<65x65xf32> -> vector<65x65xf32>
    %cst_33 = arith.constant dense<0xFF800000> : vector<65xf32>
    %45 = vector.multi_reduction <maximumf>, %44, %cst_33 [1] : vector<65x65xf32> to vector<65xf32>
    %46 = vector.shape_cast %45 : vector<65xf32> to vector<65x1xf32>
    %47 = vector.broadcast %46 : vector<65x1xf32> to vector<65x65xf32>
    %48 = arith.subf %44, %47 : vector<65x65xf32>
    %49 = math.exp %48 : vector<65x65xf32>
    %cst_34 = arith.constant dense<0.000000e+00> : vector<65xf32>
    %50 = vector.multi_reduction <add>, %49, %cst_34 [1] : vector<65x65xf32> to vector<65xf32>
    %51 = vector.shape_cast %50 : vector<65xf32> to vector<65x1xf32>
    %52 = vector.broadcast %51 : vector<65x1xf32> to vector<65x65xf32>
    %53 = arith.divf %49, %52 : vector<65x65xf32>
    %cst_35 = arith.constant dense<0.000000e+00> : vector<65x8xf32>
    %54 = tpu.matmul %53, %43, %cst_35 {dimension_numbers = #tpu.dot_dimension_numbers<[1], [0], [0], [1], [0, 0, 1, 1], [], []>} : vector<65x65xf32>, vector<65x8xf32>, vector<65x8xf32> -> vector<65x8xf32>
    %c0_36 = arith.constant 0 : index
    %c8 = arith.constant 8 : index
    %55 = vector.load %arg11[%c0_36, %c8] : memref<144x32xf32, #tpu.memory_space<vmem>>, vector<65x8xf32>
    tpu.vector_store %arg11[%c0_36, %c8], %54 {strides = array<i32>} : memref<144x32xf32, #tpu.memory_space<vmem>>, vector<65x8xf32>,
    %56 = vector.extract_strided_slice %23 {offsets = [0, 16], sizes = [65, 8], strides = [1, 1]} : vector<144x32xf32> to vector<65x8xf32>
    %57 = vector.extract_strided_slice %24 {offsets = [0, 16], sizes = [65, 8], strides = [1, 1]} : vector<144x32xf32> to vector<65x8xf32>
    %58 = vector.extract_strided_slice %25 {offsets = [0, 16], sizes = [65, 8], strides = [1, 1]} : vector<144x32xf32> to vector<65x8xf32>
    %cst_37 = arith.constant dense<0.000000e+00> : vector<65x65xf32>
    %59 = tpu.matmul %56, %57, %cst_37 {dimension_numbers = #tpu.dot_dimension_numbers<[1], [1], [0], [0], [0, 0, 1, 0], [], []>} : vector<65x8xf32>, vector<65x8xf32>, vector<65x65xf32> -> vector<65x65xf32>
    %cst_38 = arith.constant dense<0xFF800000> : vector<65xf32>
    %60 = vector.multi_reduction <maximumf>, %59, %cst_38 [1] : vector<65x65xf32> to vector<65xf32>
    %61 = vector.shape_cast %60 : vector<65xf32> to vector<65x1xf32>
    %62 = vector.broadcast %61 : vector<65x1xf32> to vector<65x65xf32>
    %63 = arith.subf %59, %62 : vector<65x65xf32>
    %64 = math.exp %63 : vector<65x65xf32>
    %cst_39 = arith.constant dense<0.000000e+00> : vector<65xf32>
    %65 = vector.multi_reduction <add>, %64, %cst_39 [1] : vector<65x65xf32> to vector<65xf32>
    %66 = vector.shape_cast %65 : vector<65xf32> to vector<65x1xf32>
    %67 = vector.broadcast %66 : vector<65x1xf32> to vector<65x65xf32>
    %68 = arith.divf %64, %67 : vector<65x65xf32>
    %cst_40 = arith.constant dense<0.000000e+00> : vector<65x8xf32>
    %69 = tpu.matmul %68, %58, %cst_40 {dimension_numbers = #tpu.dot_dimension_numbers<[1], [0], [0], [1], [0, 0, 1, 1], [], []>} : vector<65x65xf32>, vector<65x8xf32>, vector<65x8xf32> -> vector<65x8xf32>
    %c0_41 = arith.constant 0 : index
    %c16 = arith.constant 16 : index
    %70 = vector.load %arg11[%c0_41, %c16] : memref<144x32xf32, #tpu.memory_space<vmem>>, vector<65x8xf32>
    tpu.vector_store %arg11[%c0_41, %c16], %69 {strides = array<i32>} : memref<144x32xf32, #tpu.memory_space<vmem>>, vector<65x8xf32>,
    %71 = vector.extract_strided_slice %23 {offsets = [0, 24], sizes = [65, 8], strides = [1, 1]} : vector<144x32xf32> to vector<65x8xf32>
    %72 = vector.extract_strided_slice %24 {offsets = [0, 24], sizes = [65, 8], strides = [1, 1]} : vector<144x32xf32> to vector<65x8xf32>
    %73 = vector.extract_strided_slice %25 {offsets = [0, 24], sizes = [65, 8], strides = [1, 1]} : vector<144x32xf32> to vector<65x8xf32>
    %cst_42 = arith.constant dense<0.000000e+00> : vector<65x65xf32>
    %74 = tpu.matmul %71, %72, %cst_42 {dimension_numbers = #tpu.dot_dimension_numbers<[1], [1], [0], [0], [0, 0, 1, 0], [], []>} : vector<65x8xf32>, vector<65x8xf32>, vector<65x65xf32> -> vector<65x65xf32>
    %cst_43 = arith.constant dense<0xFF800000> : vector<65xf32>
    %75 = vector.multi_reduction <maximumf>, %74, %cst_43 [1] : vector<65x65xf32> to vector<65xf32>
    %76 = vector.shape_cast %75 : vector<65xf32> to vector<65x1xf32>
    %77 = vector.broadcast %76 : vector<65x1xf32> to vector<65x65xf32>
    %78 = arith.subf %74, %77 : vector<65x65xf32>
    %79 = math.exp %78 : vector<65x65xf32>
    %cst_44 = arith.constant dense<0.000000e+00> : vector<65xf32>
    %80 = vector.multi_reduction <add>, %79, %cst_44 [1] : vector<65x65xf32> to vector<65xf32>
    %81 = vector.shape_cast %80 : vector<65xf32> to vector<65x1xf32>
    %82 = vector.broadcast %81 : vector<65x1xf32> to vector<65x65xf32>
    %83 = arith.divf %79, %82 : vector<65x65xf32>
    %cst_45 = arith.constant dense<0.000000e+00> : vector<65x8xf32>
    %84 = tpu.matmul %83, %73, %cst_45 {dimension_numbers = #tpu.dot_dimension_numbers<[1], [0], [0], [1], [0, 0, 1, 1], [], []>} : vector<65x65xf32>, vector<65x8xf32>, vector<65x8xf32> -> vector<65x8xf32>
    %c0_46 = arith.constant 0 : index
    %c24 = arith.constant 24 : index
    %85 = vector.load %arg11[%c0_46, %c24] : memref<144x32xf32, #tpu.memory_space<vmem>>, vector<65x8xf32>
    tpu.vector_store %arg11[%c0_46, %c24], %84 {strides = array<i32>} : memref<144x32xf32, #tpu.memory_space<vmem>>, vector<65x8xf32>,
    %86 = vector.extract_strided_slice %23 {offsets = [72, 0], sizes = [65, 8], strides = [1, 1]} : vector<144x32xf32> to vector<65x8xf32>
    %87 = vector.extract_strided_slice %24 {offsets = [72, 0], sizes = [65, 8], strides = [1, 1]} : vector<144x32xf32> to vector<65x8xf32>
    %88 = vector.extract_strided_slice %25 {offsets = [72, 0], sizes = [65, 8], strides = [1, 1]} : vector<144x32xf32> to vector<65x8xf32>
    %cst_47 = arith.constant dense<0.000000e+00> : vector<65x65xf32>
    %89 = tpu.matmul %86, %87, %cst_47 {dimension_numbers = #tpu.dot_dimension_numbers<[1], [1], [0], [0], [0, 0, 1, 0], [], []>} : vector<65x8xf32>, vector<65x8xf32>, vector<65x65xf32> -> vector<65x65xf32>
    %cst_48 = arith.constant dense<0xFF800000> : vector<65xf32>
    %90 = vector.multi_reduction <maximumf>, %89, %cst_48 [1] : vector<65x65xf32> to vector<65xf32>
    %91 = vector.shape_cast %90 : vector<65xf32> to vector<65x1xf32>
    %92 = vector.broadcast %91 : vector<65x1xf32> to vector<65x65xf32>
    %93 = arith.subf %89, %92 : vector<65x65xf32>
    %94 = math.exp %93 : vector<65x65xf32>
    %cst_49 = arith.constant dense<0.000000e+00> : vector<65xf32>
    %95 = vector.multi_reduction <add>, %94, %cst_49 [1] : vector<65x65xf32> to vector<65xf32>
    %96 = vector.shape_cast %95 : vector<65xf32> to vector<65x1xf32>
    %97 = vector.broadcast %96 : vector<65x1xf32> to vector<65x65xf32>
    %98 = arith.divf %94, %97 : vector<65x65xf32>
    %cst_50 = arith.constant dense<0.000000e+00> : vector<65x8xf32>
    %99 = tpu.matmul %98, %88, %cst_50 {dimension_numbers = #tpu.dot_dimension_numbers<[1], [0], [0], [1], [0, 0, 1, 1], [], []>} : vector<65x65xf32>, vector<65x8xf32>, vector<65x8xf32> -> vector<65x8xf32>
    %c72_51 = arith.constant 72 : index
    %c0_52 = arith.constant 0 : index
    %100 = vector.load %arg11[%c72_51, %c0_52] : memref<144x32xf32, #tpu.memory_space<vmem>>, vector<65x8xf32>
    tpu.vector_store %arg11[%c72_51, %c0_52], %99 {strides = array<i32>} : memref<144x32xf32, #tpu.memory_space<vmem>>, vector<65x8xf32>,
    %101 = vector.extract_strided_slice %23 {offsets = [72, 8], sizes = [65, 8], strides = [1, 1]} : vector<144x32xf32> to vector<65x8xf32>
    %102 = vector.extract_strided_slice %24 {offsets = [72, 8], sizes = [65, 8], strides = [1, 1]} : vector<144x32xf32> to vector<65x8xf32>
    %103 = vector.extract_strided_slice %25 {offsets = [72, 8], sizes = [65, 8], strides = [1, 1]} : vector<144x32xf32> to vector<65x8xf32>
    %cst_53 = arith.constant dense<0.000000e+00> : vector<65x65xf32>
    %104 = tpu.matmul %101, %102, %cst_53 {dimension_numbers = #tpu.dot_dimension_numbers<[1], [1], [0], [0], [0, 0, 1, 0], [], []>} : vector<65x8xf32>, vector<65x8xf32>, vector<65x65xf32> -> vector<65x65xf32>
    %cst_54 = arith.constant dense<0xFF800000> : vector<65xf32>
    %105 = vector.multi_reduction <maximumf>, %104, %cst_54 [1] : vector<65x65xf32> to vector<65xf32>
    %106 = vector.shape_cast %105 : vector<65xf32> to vector<65x1xf32>
    %107 = vector.broadcast %106 : vector<65x1xf32> to vector<65x65xf32>
    %108 = arith.subf %104, %107 : vector<65x65xf32>
    %109 = math.exp %108 : vector<65x65xf32>
    %cst_55 = arith.constant dense<0.000000e+00> : vector<65xf32>
    %110 = vector.multi_reduction <add>, %109, %cst_55 [1] : vector<65x65xf32> to vector<65xf32>
    %111 = vector.shape_cast %110 : vector<65xf32> to vector<65x1xf32>
    %112 = vector.broadcast %111 : vector<65x1xf32> to vector<65x65xf32>
    %113 = arith.divf %109, %112 : vector<65x65xf32>
    %cst_56 = arith.constant dense<0.000000e+00> : vector<65x8xf32>
    %114 = tpu.matmul %113, %103, %cst_56 {dimension_numbers = #tpu.dot_dimension_numbers<[1], [0], [0], [1], [0, 0, 1, 1], [], []>} : vector<65x65xf32>, vector<65x8xf32>, vector<65x8xf32> -> vector<65x8xf32>
    %c72_57 = arith.constant 72 : index
    %c8_58 = arith.constant 8 : index
    %115 = vector.load %arg11[%c72_57, %c8_58] : memref<144x32xf32, #tpu.memory_space<vmem>>, vector<65x8xf32>
    tpu.vector_store %arg11[%c72_57, %c8_58], %114 {strides = array<i32>} : memref<144x32xf32, #tpu.memory_space<vmem>>, vector<65x8xf32>,
    %116 = vector.extract_strided_slice %23 {offsets = [72, 16], sizes = [65, 8], strides = [1, 1]} : vector<144x32xf32> to vector<65x8xf32>
    %117 = vector.extract_strided_slice %24 {offsets = [72, 16], sizes = [65, 8], strides = [1, 1]} : vector<144x32xf32> to vector<65x8xf32>
    %118 = vector.extract_strided_slice %25 {offsets = [72, 16], sizes = [65, 8], strides = [1, 1]} : vector<144x32xf32> to vector<65x8xf32>
    %cst_59 = arith.constant dense<0.000000e+00> : vector<65x65xf32>
    %119 = tpu.matmul %116, %117, %cst_59 {dimension_numbers = #tpu.dot_dimension_numbers<[1], [1], [0], [0], [0, 0, 1, 0], [], []>} : vector<65x8xf32>, vector<65x8xf32>, vector<65x65xf32> -> vector<65x65xf32>
    %cst_60 = arith.constant dense<0xFF800000> : vector<65xf32>
    %120 = vector.multi_reduction <maximumf>, %119, %cst_60 [1] : vector<65x65xf32> to vector<65xf32>
    %121 = vector.shape_cast %120 : vector<65xf32> to vector<65x1xf32>
    %122 = vector.broadcast %121 : vector<65x1xf32> to vector<65x65xf32>
    %123 = arith.subf %119, %122 : vector<65x65xf32>
    %124 = math.exp %123 : vector<65x65xf32>
    %cst_61 = arith.constant dense<0.000000e+00> : vector<65xf32>
    %125 = vector.multi_reduction <add>, %124, %cst_61 [1] : vector<65x65xf32> to vector<65xf32>
    %126 = vector.shape_cast %125 : vector<65xf32> to vector<65x1xf32>
    %127 = vector.broadcast %126 : vector<65x1xf32> to vector<65x65xf32>
    %128 = arith.divf %124, %127 : vector<65x65xf32>
    %cst_62 = arith.constant dense<0.000000e+00> : vector<65x8xf32>
    %129 = tpu.matmul %128, %118, %cst_62 {dimension_numbers = #tpu.dot_dimension_numbers<[1], [0], [0], [1], [0, 0, 1, 1], [], []>} : vector<65x65xf32>, vector<65x8xf32>, vector<65x8xf32> -> vector<65x8xf32>
    %c72_63 = arith.constant 72 : index
    %c16_64 = arith.constant 16 : index
    %130 = vector.load %arg11[%c72_63, %c16_64] : memref<144x32xf32, #tpu.memory_space<vmem>>, vector<65x8xf32>
    tpu.vector_store %arg11[%c72_63, %c16_64], %129 {strides = array<i32>} : memref<144x32xf32, #tpu.memory_space<vmem>>, vector<65x8xf32>,
    %131 = vector.extract_strided_slice %23 {offsets = [72, 24], sizes = [65, 8], strides = [1, 1]} : vector<144x32xf32> to vector<65x8xf32>
    %132 = vector.extract_strided_slice %24 {offsets = [72, 24], sizes = [65, 8], strides = [1, 1]} : vector<144x32xf32> to vector<65x8xf32>
    %133 = vector.extract_strided_slice %25 {offsets = [72, 24], sizes = [65, 8], strides = [1, 1]} : vector<144x32xf32> to vector<65x8xf32>
    %cst_65 = arith.constant dense<0.000000e+00> : vector<65x65xf32>
    %134 = tpu.matmul %131, %132, %cst_65 {dimension_numbers = #tpu.dot_dimension_numbers<[1], [1], [0], [0], [0, 0, 1, 0], [], []>} : vector<65x8xf32>, vector<65x8xf32>, vector<65x65xf32> -> vector<65x65xf32>
    %cst_66 = arith.constant dense<0xFF800000> : vector<65xf32>
    %135 = vector.multi_reduction <maximumf>, %134, %cst_66 [1] : vector<65x65xf32> to vector<65xf32>
    %136 = vector.shape_cast %135 : vector<65xf32> to vector<65x1xf32>
    %137 = vector.broadcast %136 : vector<65x1xf32> to vector<65x65xf32>
    %138 = arith.subf %134, %137 : vector<65x65xf32>
    %139 = math.exp %138 : vector<65x65xf32>
    %cst_67 = arith.constant dense<0.000000e+00> : vector<65xf32>
    %140 = vector.multi_reduction <add>, %139, %cst_67 [1] : vector<65x65xf32> to vector<65xf32>
    %141 = vector.shape_cast %140 : vector<65xf32> to vector<65x1xf32>
    %142 = vector.broadcast %141 : vector<65x1xf32> to vector<65x65xf32>
    %143 = arith.divf %139, %142 : vector<65x65xf32>
    %cst_68 = arith.constant dense<0.000000e+00> : vector<65x8xf32>
    %144 = tpu.matmul %143, %133, %cst_68 {dimension_numbers = #tpu.dot_dimension_numbers<[1], [0], [0], [1], [0, 0, 1, 1], [], []>} : vector<65x65xf32>, vector<65x8xf32>, vector<65x8xf32> -> vector<65x8xf32>
    %c72_69 = arith.constant 72 : index
    %c24_70 = arith.constant 24 : index
    %145 = vector.load %arg11[%c72_69, %c24_70] : memref<144x32xf32, #tpu.memory_space<vmem>>, vector<65x8xf32>
    tpu.vector_store %arg11[%c72_69, %c24_70], %144 {strides = array<i32>} : memref<144x32xf32, #tpu.memory_space<vmem>>, vector<65x8xf32>,
    %c0_71 = arith.constant 0 : index
    %c0_72 = arith.constant 0 : index
    %146 = vector.load %arg7[%c0_71, %c0_72] : memref<6x32xf32, #tpu.memory_space<vmem>>, vector<6x32xf32>
    %147 = vector.extract_strided_slice %146 {offsets = [0, 0], sizes = [1, 32], strides = [1, 1]} : vector<6x32xf32> to vector<1x32xf32>
    %148 = vector.extract_strided_slice %146 {offsets = [1, 0], sizes = [1, 32], strides = [1, 1]} : vector<6x32xf32> to vector<1x32xf32>
    %149 = vector.extract_strided_slice %146 {offsets = [2, 0], sizes = [1, 32], strides = [1, 1]} : vector<6x32xf32> to vector<1x32xf32>
    %150 = vector.extract_strided_slice %146 {offsets = [3, 0], sizes = [1, 32], strides = [1, 1]} : vector<6x32xf32> to vector<1x32xf32>
    %151 = vector.extract_strided_slice %146 {offsets = [4, 0], sizes = [1, 32], strides = [1, 1]} : vector<6x32xf32> to vector<1x32xf32>
    %152 = vector.extract_strided_slice %146 {offsets = [5, 0], sizes = [1, 32], strides = [1, 1]} : vector<6x32xf32> to vector<1x32xf32>
    %c0_73 = arith.constant 0 : index
    %c0_74 = arith.constant 0 : index
    %153 = vector.load %arg11[%c0_73, %c0_74] : memref<144x32xf32, #tpu.memory_space<vmem>>, vector<144x32xf32>
    %c0_75 = arith.constant 0 : index
    %c0_76 = arith.constant 0 : index
    %154 = vector.load %arg3[%c0_75, %c0_76] : memref<32x32xf32, #tpu.memory_space<vmem>>, vector<32x32xf32>
    %cst_77 = arith.constant dense<0.000000e+00> : vector<144x32xf32>
    %155 = tpu.matmul %153, %154, %cst_77 {dimension_numbers = #tpu.dot_dimension_numbers<[1], [0], [0], [1], [0, 0, 1, 1], [], []>} : vector<144x32xf32>, vector<32x32xf32>, vector<144x32xf32> -> vector<144x32xf32>
    %156 = vector.broadcast %147 : vector<1x32xf32> to vector<144x32xf32>
    %157 = arith.addf %155, %156 : vector<144x32xf32>
    %158 = tpu.iota {dimensions = array<i32: 0>} : vector<144x1xi32>
    %cst_78 = arith.constant 0.000000e+00 : f32
    %159 = vector.broadcast %cst_78 : f32 to vector<144x1xf32>
    %c0_i32 = arith.constant 0 : i32
    %160 = vector.broadcast %c0_i32 : i32 to vector<144x1xi32>
    %161 = arith.cmpi sge, %158, %160 : vector<144x1xi32>
    %c65_i32 = arith.constant 65 : i32
    %162 = vector.broadcast %c65_i32 : i32 to vector<144x1xi32>
    %163 = arith.cmpi slt, %158, %162 : vector<144x1xi32>
    %164 = arith.andi %161, %163 : vector<144x1xi1>
    %165 = arith.extui %164 : vector<144x1xi1> to vector<144x1xi32>
    %166 = arith.sitofp %165 : vector<144x1xi32> to vector<144x1xf32>
    %167 = arith.addf %159, %166 : vector<144x1xf32>
    %c72_i32 = arith.constant 72 : i32
    %168 = vector.broadcast %c72_i32 : i32 to vector<144x1xi32>
    %169 = arith.cmpi sge, %158, %168 : vector<144x1xi32>
    %c137_i32 = arith.constant 137 : i32
    %170 = vector.broadcast %c137_i32 : i32 to vector<144x1xi32>
    %171 = arith.cmpi slt, %158, %170 : vector<144x1xi32>
    %172 = arith.andi %169, %171 : vector<144x1xi1>
    %173 = arith.extui %172 : vector<144x1xi1> to vector<144x1xi32>
    %174 = arith.sitofp %173 : vector<144x1xi32> to vector<144x1xf32>
    %175 = arith.addf %167, %174 : vector<144x1xf32>
    %176 = vector.broadcast %175 : vector<144x1xf32> to vector<144x32xf32>
    %177 = arith.mulf %157, %176 : vector<144x32xf32>
    %cst_79 = arith.constant dense<0.000000e+00> : vector<32xf32>
    %178 = vector.multi_reduction <add>, %177, %cst_79 [0] : vector<144x32xf32> to vector<32xf32>
    %179 = vector.shape_cast %178 : vector<32xf32> to vector<1x32xf32>
    %cst_80 = arith.constant 0.0076923077 : f32
    %180 = vector.broadcast %cst_80 : f32 to vector<1x32xf32>
    %181 = arith.mulf %179, %180 : vector<1x32xf32>
    %182 = vector.broadcast %181 : vector<1x32xf32> to vector<144x32xf32>
    %183 = arith.subf %157, %182 : vector<144x32xf32>
    %184 = vector.broadcast %175 : vector<144x1xf32> to vector<144x32xf32>
    %185 = arith.mulf %183, %184 : vector<144x32xf32>
    %186 = arith.mulf %185, %185 : vector<144x32xf32>
    %cst_81 = arith.constant dense<0.000000e+00> : vector<32xf32>
    %187 = vector.multi_reduction <add>, %186, %cst_81 [0] : vector<144x32xf32> to vector<32xf32>
    %188 = vector.shape_cast %187 : vector<32xf32> to vector<1x32xf32>
    %cst_82 = arith.constant 0.0076923077 : f32
    %189 = vector.broadcast %cst_82 : f32 to vector<1x32xf32>
    %190 = arith.mulf %188, %189 : vector<1x32xf32>
    %191 = vector.broadcast %181 : vector<1x32xf32> to vector<144x32xf32>
    %192 = arith.subf %157, %191 : vector<144x32xf32>
    %cst_83 = arith.constant 9.99999974E-6 : f32
    %193 = vector.broadcast %cst_83 : f32 to vector<1x32xf32>
    %194 = arith.addf %190, %193 : vector<1x32xf32>
    %195 = math.rsqrt %194 : vector<1x32xf32>
    %196 = vector.broadcast %195 : vector<1x32xf32> to vector<144x32xf32>
    %197 = arith.mulf %192, %196 : vector<144x32xf32>
    %198 = vector.broadcast %148 : vector<1x32xf32> to vector<144x32xf32>
    %199 = arith.mulf %197, %198 : vector<144x32xf32>
    %200 = vector.broadcast %149 : vector<1x32xf32> to vector<144x32xf32>
    %201 = arith.addf %199, %200 : vector<144x32xf32>
    %c0_84 = arith.constant 0 : index
    %c0_85 = arith.constant 0 : index
    %202 = vector.load %arg4[%c0_84, %c0_85] : memref<32x64xf32, #tpu.memory_space<vmem>>, vector<32x64xf32>
    %cst_86 = arith.constant dense<0.000000e+00> : vector<144x64xf32>
    %203 = tpu.matmul %201, %202, %cst_86 {dimension_numbers = #tpu.dot_dimension_numbers<[1], [0], [0], [1], [0, 0, 1, 1], [], []>} : vector<144x32xf32>, vector<32x64xf32>, vector<144x64xf32> -> vector<144x64xf32>
    %c0_87 = arith.constant 0 : index
    %c0_88 = arith.constant 0 : index
    %204 = vector.load %arg5[%c0_87, %c0_88] : memref<1x64xf32, #tpu.memory_space<vmem>>, vector<1x64xf32>
    %205 = vector.broadcast %204 : vector<1x64xf32> to vector<144x64xf32>
    %206 = arith.addf %203, %205 : vector<144x64xf32>
    %cst_89 = arith.constant 5.000000e-01 : f32
    %207 = vector.broadcast %cst_89 : f32 to vector<144x64xf32>
    %208 = arith.mulf %207, %206 : vector<144x64xf32>
    %cst_90 = arith.constant 0.707106769 : f32
    %209 = vector.broadcast %cst_90 : f32 to vector<144x64xf32>
    %210 = arith.mulf %206, %209 : vector<144x64xf32>
    %211 = math.erf %210 : vector<144x64xf32>
    %cst_91 = arith.constant 1.000000e+00 : f32
    %212 = vector.broadcast %cst_91 : f32 to vector<144x64xf32>
    %213 = arith.addf %212, %211 : vector<144x64xf32>
    %214 = arith.mulf %208, %213 : vector<144x64xf32>
    %c0_92 = arith.constant 0 : index
    %c0_93 = arith.constant 0 : index
    %215 = vector.load %arg6[%c0_92, %c0_93] : memref<64x32xf32, #tpu.memory_space<vmem>>, vector<64x32xf32>
    %cst_94 = arith.constant dense<0.000000e+00> : vector<144x32xf32>
    %216 = tpu.matmul %214, %215, %cst_94 {dimension_numbers = #tpu.dot_dimension_numbers<[1], [0], [0], [1], [0, 0, 1, 1], [], []>} : vector<144x64xf32>, vector<64x32xf32>, vector<144x32xf32> -> vector<144x32xf32>
    %217 = vector.broadcast %150 : vector<1x32xf32> to vector<144x32xf32>
    %218 = arith.addf %216, %217 : vector<144x32xf32>
    %219 = vector.broadcast %175 : vector<144x1xf32> to vector<144x32xf32>
    %220 = arith.mulf %218, %219 : vector<144x32xf32>
    %cst_95 = arith.constant dense<0.000000e+00> : vector<32xf32>
    %221 = vector.multi_reduction <add>, %220, %cst_95 [0] : vector<144x32xf32> to vector<32xf32>
    %222 = vector.shape_cast %221 : vector<32xf32> to vector<1x32xf32>
    %cst_96 = arith.constant 0.0076923077 : f32
    %223 = vector.broadcast %cst_96 : f32 to vector<1x32xf32>
    %224 = arith.mulf %222, %223 : vector<1x32xf32>
    %225 = vector.broadcast %224 : vector<1x32xf32> to vector<144x32xf32>
    %226 = arith.subf %218, %225 : vector<144x32xf32>
    %227 = vector.broadcast %175 : vector<144x1xf32> to vector<144x32xf32>
    %228 = arith.mulf %226, %227 : vector<144x32xf32>
    %229 = arith.mulf %228, %228 : vector<144x32xf32>
    %cst_97 = arith.constant dense<0.000000e+00> : vector<32xf32>
    %230 = vector.multi_reduction <add>, %229, %cst_97 [0] : vector<144x32xf32> to vector<32xf32>
    %231 = vector.shape_cast %230 : vector<32xf32> to vector<1x32xf32>
    %cst_98 = arith.constant 0.0076923077 : f32
    %232 = vector.broadcast %cst_98 : f32 to vector<1x32xf32>
    %233 = arith.mulf %231, %232 : vector<1x32xf32>
    %234 = vector.broadcast %224 : vector<1x32xf32> to vector<144x32xf32>
    %235 = arith.subf %218, %234 : vector<144x32xf32>
    %cst_99 = arith.constant 9.99999974E-6 : f32
    %236 = vector.broadcast %cst_99 : f32 to vector<1x32xf32>
    %237 = arith.addf %233, %236 : vector<1x32xf32>
    %238 = math.rsqrt %237 : vector<1x32xf32>
    %239 = vector.broadcast %238 : vector<1x32xf32> to vector<144x32xf32>
    %240 = arith.mulf %235, %239 : vector<144x32xf32>
    %241 = vector.broadcast %151 : vector<1x32xf32> to vector<144x32xf32>
    %242 = arith.mulf %240, %241 : vector<144x32xf32>
    %243 = vector.broadcast %152 : vector<1x32xf32> to vector<144x32xf32>
    %244 = arith.addf %242, %243 : vector<144x32xf32>
    %245 = vector.extract_strided_slice %244 {offsets = [0, 0], sizes = [64, 32], strides = [1, 1]} : vector<144x32xf32> to vector<64x32xf32>
    %246 = tpu.transpose %245, [1, 0] : vector<64x32xf32> -> vector<32x64xf32>
    %c0_100 = arith.constant 0 : index
    %c0_101 = arith.constant 0 : index
    %c0_102 = arith.constant 0 : index
    %247 = vector.load %arg8[%c0_100, %c0_101, %c0_102] : memref<2x32x64xf32, #tpu.memory_space<vmem>>, vector<1x32x64xf32>
    %248 = vector.shape_cast %247 : vector<1x32x64xf32> to vector<32x64xf32>
    %249 = vector.shape_cast %246 : vector<32x64xf32> to vector<1x32x64xf32>
    tpu.vector_store %arg8[%c0_100, %c0_101, %c0_102], %249 {strides = array<i32>} : memref<2x32x64xf32, #tpu.memory_space<vmem>>, vector<1x32x64xf32>,
    %250 = vector.extract_strided_slice %244 {offsets = [64, 0], sizes = [1, 32], strides = [1, 1]} : vector<144x32xf32> to vector<1x32xf32>
    %c0_103 = arith.constant 0 : index
    %c0_104 = arith.constant 0 : index
    %c0_105 = arith.constant 0 : index
    %251 = vector.load %arg9[%c0_103, %c0_104, %c0_105] : memref<2x1x32xf32, #tpu.memory_space<vmem>>, vector<1x1x32xf32>
    %252 = vector.shape_cast %251 : vector<1x1x32xf32> to vector<1x32xf32>
    %253 = vector.shape_cast %250 : vector<1x32xf32> to vector<1x1x32xf32>
    tpu.vector_store %arg9[%c0_103, %c0_104, %c0_105], %253 {strides = array<i32>} : memref<2x1x32xf32, #tpu.memory_space<vmem>>, vector<1x1x32xf32>,
    %254 = vector.extract_strided_slice %244 {offsets = [72, 0], sizes = [64, 32], strides = [1, 1]} : vector<144x32xf32> to vector<64x32xf32>
    %255 = tpu.transpose %254, [1, 0] : vector<64x32xf32> -> vector<32x64xf32>
    %c1_106 = arith.constant 1 : index
    %c0_107 = arith.constant 0 : index
    %c0_108 = arith.constant 0 : index
    %256 = vector.load %arg8[%c1_106, %c0_107, %c0_108] : memref<2x32x64xf32, #tpu.memory_space<vmem>>, vector<1x32x64xf32>
    %257 = vector.shape_cast %256 : vector<1x32x64xf32> to vector<32x64xf32>
    %258 = vector.shape_cast %255 : vector<32x64xf32> to vector<1x32x64xf32>
    tpu.vector_store %arg8[%c1_106, %c0_107, %c0_108], %258 {strides = array<i32>} : memref<2x32x64xf32, #tpu.memory_space<vmem>>, vector<1x32x64xf32>,
    %259 = vector.extract_strided_slice %244 {offsets = [136, 0], sizes = [1, 32], strides = [1, 1]} : vector<144x32xf32> to vector<1x32xf32>
    %c1_109 = arith.constant 1 : index
    %c0_110 = arith.constant 0 : index
    %c0_111 = arith.constant 0 : index
    %260 = vector.load %arg9[%c1_109, %c0_110, %c0_111] : memref<2x1x32xf32, #tpu.memory_space<vmem>>, vector<1x1x32xf32>
    %261 = vector.shape_cast %260 : vector<1x1x32xf32> to vector<1x32xf32>
    %262 = vector.shape_cast %259 : vector<1x32xf32> to vector<1x1x32xf32>
    tpu.vector_store %arg9[%c1_109, %c0_110, %c0_111], %262 {strides = array<i32>} : memref<2x1x32xf32, #tpu.memory_space<vmem>>, vector<1x1x32xf32>,
    return
  }
}

</mosaic_0001>

<llo_original>
// kernel: deep_attention_cls_forward.1
$region0: #{deep_attention_cls_forward.1}
  #allocation0 [shape = 'u32[]', space=smem, size = 0x4, offset = 0x4, fixed_abs, tag = 'smem constant byte address 0x4 - core index']
  #allocation1 [shape = 'u32[144,128]{1,0:T(1,128)}', space=vmem, size = 0x12000, scoped, tag = 'internal scratch']
  #allocation2 [shape = 'f32[144,32]{1,0:T(8,128)}', space=vmem, size = 0x12000, scoped, tag = 'scratch operand']
  #allocation3 [shape = 'f32[144,32]{1,0:T(8,128)}', space=vmem, size = 0x12000, scoped, tag = 'scratch operand']
  %s0 = inlined_call_operand.vmem [shape: f32[2,32,64], index: 0, kind: input, shape index: {}]
  %s1 = inlined_call_operand.vmem [shape: f32[2,1,32], index: 1, kind: input, shape index: {}]
  %s2 = inlined_call_operand.vmem [shape: f32[32,96], index: 2, kind: input, shape index: {}]
  %s3 = inlined_call_operand.vmem [shape: f32[32,32], index: 3, kind: input, shape index: {}]
  %s4 = inlined_call_operand.vmem [shape: f32[32,64], index: 4, kind: input, shape index: {}]
  %s5 = inlined_call_operand.vmem [shape: f32[1,64], index: 5, kind: input, shape index: {}]
  %s6 = inlined_call_operand.vmem [shape: f32[64,32], index: 6, kind: input, shape index: {}]
  %s7 = inlined_call_operand.vmem [shape: f32[6,32], index: 7, kind: input, shape index: {}]
  %s8 = inlined_call_operand.vmem [shape: f32[2,32,64], index: 8, kind: output, shape index: {0}]
  %s9 = inlined_call_operand.hbm [shape: f32[2,1,32], index: 9, kind: output, shape index: {1}]
  %10 = xla_tuple %s8, %s9
  %s11 = sld [smem:[#allocation0]]
  $region50: #{deep_attention_cls_forward.1} parent=0
    _
  %s13 = ssub.s32 1, %s11
  %s14 = scalar_select 0, %s13, %s11
  $region1: #{deep_attention_cls_forward.1} parent=0
    #allocation4 [shape = 'u8[1024]{0}', space=vmem, size = 0x400, scoped, tag = 'output window, operand 1, single buffered']
    #allocation5 [shape = 's32[1]{0}', space=sflag, size = 0x4, scoped, tag = 'scoped memory for deep_attention_cls_forward.1']
    %15 = vsyncpa [#allocation5], 0
    // Predicated region
    $region2: #{deep_attention_cls_forward.1} parent=1 // pred_check
      _
    $region3: #{deep_attention_cls_forward.1} parent=1 // pred_check_branch
      %17 = sbr.rel (0) target = $region5
    $region4: #{deep_attention_cls_forward.1} parent=1 // pred_region
      _
    $region5: #{deep_attention_cls_forward.1} parent=1 // pred_fallthru
      _
    // Predicated region
    $region6: #{deep_attention_cls_forward.1} parent=1 // pred_check
      _
    $region7: #{deep_attention_cls_forward.1} parent=1 // pred_check_branch
      %19 = sbr.rel (0) target = $region9
    $region8: #{deep_attention_cls_forward.1} parent=1 // pred_region
      _
    $region9: #{deep_attention_cls_forward.1} parent=1 // pred_fallthru
      _
    // Predicated region
    $region10: #{deep_attention_cls_forward.1} parent=1 // pred_check
      _
    $region11: #{deep_attention_cls_forward.1} parent=1 // pred_check_branch
      %21 = sbr.rel (0) target = $region13
    $region12: #{deep_attention_cls_forward.1} parent=1 // pred_region
      _
    $region13: #{deep_attention_cls_forward.1} parent=1 // pred_fallthru
      _
    // Predicated region
    $region14: #{deep_attention_cls_forward.1} parent=1 // pred_check
      _
    $region15: #{deep_attention_cls_forward.1} parent=1 // pred_check_branch
      %23 = sbr.rel (0) target = $region17
    $region16: #{deep_attention_cls_forward.1} parent=1 // pred_region
      _
    $region17: #{deep_attention_cls_forward.1} parent=1 // pred_fallthru
      _
    // Predicated region
    $region18: #{deep_attention_cls_forward.1} parent=1 // pred_check
      _
    $region19: #{deep_attention_cls_forward.1} parent=1 // pred_check_branch
      %25 = sbr.rel (0) target = $region21
    $region20: #{deep_attention_cls_forward.1} parent=1 // pred_region
      _
    $region21: #{deep_attention_cls_forward.1} parent=1 // pred_fallthru
      _
    // Predicated region
    $region22: #{deep_attention_cls_forward.1} parent=1 // pred_check
      _
    $region23: #{deep_attention_cls_forward.1} parent=1 // pred_check_branch
      %27 = sbr.rel (0) target = $region25
    $region24: #{deep_attention_cls_forward.1} parent=1 // pred_region
      _
    $region25: #{deep_attention_cls_forward.1} parent=1 // pred_fallthru
      _
    // Predicated region
    $region26: #{deep_attention_cls_forward.1} parent=1 // pred_check
      _
    $region27: #{deep_attention_cls_forward.1} parent=1 // pred_check_branch
      %29 = sbr.rel (0) target = $region29
    $region28: #{deep_attention_cls_forward.1} parent=1 // pred_region
      _
    $region29: #{deep_attention_cls_forward.1} parent=1 // pred_fallthru
      _
    // Predicated region
    $region30: #{deep_attention_cls_forward.1} parent=1 // pred_check
      _
    $region31: #{deep_attention_cls_forward.1} parent=1 // pred_check_branch
      %31 = sbr.rel (0) target = $region33
    $region32: #{deep_attention_cls_forward.1} parent=1 // pred_region
      _
    $region33: #{deep_attention_cls_forward.1} parent=1 // pred_fallthru
      _
    %vm32 = vcmask 261120
    %33 = vst.msk [vmem:[#allocation2] sm:$0xff] %vm32, 0.0
    %34 = vst.msk [vmem:[#allocation2 + $0x8] sm:$0xff] %vm32, 0.0
    %35 = vst.msk [vmem:[#allocation2 + $0x10] sm:$0xff] %vm32, 0.0
    %36 = vst.msk [vmem:[#allocation2 + $0x18] sm:$0xff] %vm32, 0.0
    %37 = vst.msk [vmem:[#allocation2 + $0x20] sm:$0xff] %vm32, 0.0
    %38 = vst.msk [vmem:[#allocation2 + $0x28] sm:$0xff] %vm32, 0.0
    %39 = vst.msk [vmem:[#allocation2 + $0x30] sm:$0xff] %vm32, 0.0
    %40 = vst.msk [vmem:[#allocation2 + $0x38] sm:$0xff] %vm32, 0.0
    %41 = vst.msk [vmem:[#allocation2 + $0x40] sm:$0xff] %vm32, 0.0
    %42 = vst.msk [vmem:[#allocation2 + $0x48] sm:$0xff] %vm32, 0.0
    %43 = vst.msk [vmem:[#allocation2 + $0x50] sm:$0xff] %vm32, 0.0
    %44 = vst.msk [vmem:[#allocation2 + $0x58] sm:$0xff] %vm32, 0.0
    %45 = vst.msk [vmem:[#allocation2 + $0x60] sm:$0xff] %vm32, 0.0
    %46 = vst.msk [vmem:[#allocation2 + $0x68] sm:$0xff] %vm32, 0.0
    %47 = vst.msk [vmem:[#allocation2 + $0x70] sm:$0xff] %vm32, 0.0
    %48 = vst.msk [vmem:[#allocation2 + $0x78] sm:$0xff] %vm32, 0.0
    %49 = vst.msk [vmem:[#allocation2 + $0x80] sm:$0xff] %vm32, 0.0
    %50 = vst.msk [vmem:[#allocation2 + $0x88] sm:$0xff] %vm32, 0.0
    %51 = vst.msk [vmem:[#allocation3] sm:$0xff] %vm32, 0.0
    %52 = vst.msk [vmem:[#allocation3 + $0x8] sm:$0xff] %vm32, 0.0
    %53 = vst.msk [vmem:[#allocation3 + $0x10] sm:$0xff] %vm32, 0.0
    %54 = vst.msk [vmem:[#allocation3 + $0x18] sm:$0xff] %vm32, 0.0
    %55 = vst.msk [vmem:[#allocation3 + $0x20] sm:$0xff] %vm32, 0.0
    %56 = vst.msk [vmem:[#allocation3 + $0x28] sm:$0xff] %vm32, 0.0
    %57 = vst.msk [vmem:[#allocation3 + $0x30] sm:$0xff] %vm32, 0.0
    %58 = vst.msk [vmem:[#allocation3 + $0x38] sm:$0xff] %vm32, 0.0
    %59 = vst.msk [vmem:[#allocation3 + $0x40] sm:$0xff] %vm32, 0.0
    %60 = vst.msk [vmem:[#allocation3 + $0x48] sm:$0xff] %vm32, 0.0
    %61 = vst.msk [vmem:[#allocation3 + $0x50] sm:$0xff] %vm32, 0.0
    %62 = vst.msk [vmem:[#allocation3 + $0x58] sm:$0xff] %vm32, 0.0
    %63 = vst.msk [vmem:[#allocation3 + $0x60] sm:$0xff] %vm32, 0.0
    %64 = vst.msk [vmem:[#allocation3 + $0x68] sm:$0xff] %vm32, 0.0
    %65 = vst.msk [vmem:[#allocation3 + $0x70] sm:$0xff] %vm32, 0.0
    %66 = vst.msk [vmem:[#allocation3 + $0x78] sm:$0xff] %vm32, 0.0
    %67 = vst.msk [vmem:[#allocation3 + $0x80] sm:$0xff] %vm32, 0.0
    %68 = vst.msk [vmem:[#allocation3 + $0x88] sm:$0xff] %vm32, 0.0
    %v69 = vld [vmem:[%s0] sm:$0xff]
    %v70 = vld [vmem:[%s0 + $0x8] sm:$0xff]
    %v71 = vld [vmem:[%s0 + $0x10] sm:$0xff]
    %v72 = vld [vmem:[%s0 + $0x18] sm:$0xff]
    %73 = vxpose.xlu0.b32.start [1/16] %v69, 128
    %74 = vxpose.xlu0.b32.cont [2/16] %v70, 128
    %75 = vxpose.xlu0.b32.cont [3/16] %v71, 128
    %76 = vxpose.xlu0.b32.cont [4/16] %v72, 128
    %77 = vxpose.xlu0.b32.cont [5/16] 0.0, 128
    %78 = vxpose.xlu0.b32.cont [6/16] 0.0, 128
    %79 = vxpose.xlu0.b32.cont [7/16] 0.0, 128
    %80 = vxpose.xlu0.b32.cont [8/16] 0.0, 128
    %81 = vxpose.xlu0.b32.cont [9/16] 0.0, 128
    %82 = vxpose.xlu0.b32.cont [10/16] 0.0, 128
    %83 = vxpose.xlu0.b32.cont [11/16] 0.0, 128
    %84 = vxpose.xlu0.b32.cont [12/16] 0.0, 128
    %85 = vxpose.xlu0.b32.cont [13/16] 0.0, 128
    %86 = vxpose.xlu0.b32.cont [14/16] 0.0, 128
    %87 = vxpose.xlu0.b32.cont [15/16] 0.0, 128
    %88 = vxpose.xlu0.b32.end [16/16] 0.0, 128
    %v89 = vpop.trf.xlu0
    %v90 = vpop.trf.xlu0
    %v91 = vpop.trf.xlu0
    %v92 = vpop.trf.xlu0
    %v93 = vpop.trf.xlu0
    %v94 = vpop.trf.xlu0
    %v95 = vpop.trf.xlu0
    %v96 = vpop.trf.xlu0
    %v97 = vpop.trf.xlu0
    %v98 = vpop.trf.xlu0
    %v99 = vpop.trf.xlu0
    %v100 = vpop.trf.xlu0
    %v101 = vpop.trf.xlu0
    %v102 = vpop.trf.xlu0
    %v103 = vpop.trf.xlu0
    %v104 = vpop.trf.xlu0
    %105 = vst.msk [vmem:[#allocation2] sm:$0xff] %vm32, %v89
    %106 = vst.msk [vmem:[#allocation2 + $0x8] sm:$0xff] %vm32, %v90
    %107 = vst.msk [vmem:[#allocation2 + $0x10] sm:$0xff] %vm32, %v91
    %108 = vst.msk [vmem:[#allocation2 + $0x18] sm:$0xff] %vm32, %v92
    %109 = vst.msk [vmem:[#allocation2 + $0x20] sm:$0xff] %vm32, %v93
    %110 = vst.msk [vmem:[#allocation2 + $0x28] sm:$0xff] %vm32, %v94
    %111 = vst.msk [vmem:[#allocation2 + $0x30] sm:$0xff] %vm32, %v95
    %112 = vst.msk [vmem:[#allocation2 + $0x38] sm:$0xff] %vm32, %v96
    %v113 = vld [vmem:[%s1] sm:$0x1]
    %vm114 = vcmask 253952
    %115 = vst.msk [vmem:[#allocation2 + $0x40] sm:$0x1] %vm114, %v113
    %s116 = scalar_lea.vmem %s0, 32
    %v117 = vld [vmem:[%s116] sm:$0xff]
    %v118 = vld [vmem:[%s116 + $0x8] sm:$0xff]
    %v119 = vld [vmem:[%s116 + $0x10] sm:$0xff]
    %v120 = vld [vmem:[%s116 + $0x18] sm:$0xff]
    %121 = vxpose.xlu0.b32.start [1/16] %v117, 128
    %122 = vxpose.xlu0.b32.cont [2/16] %v118, 128
    %123 = vxpose.xlu0.b32.cont [3/16] %v119, 128
    %124 = vxpose.xlu0.b32.cont [4/16] %v120, 128
    %125 = vxpose.xlu0.b32.cont [5/16] 0.0, 128
    %126 = vxpose.xlu0.b32.cont [6/16] 0.0, 128
    %127 = vxpose.xlu0.b32.cont [7/16] 0.0, 128
    %128 = vxpose.xlu0.b32.cont [8/16] 0.0, 128
    %129 = vxpose.xlu0.b32.cont [9/16] 0.0, 128
    %130 = vxpose.xlu0.b32.cont [10/16] 0.0, 128
    %131 = vxpose.xlu0.b32.cont [11/16] 0.0, 128
    %132 = vxpose.xlu0.b32.cont [12/16] 0.0, 128
    %133 = vxpose.xlu0.b32.cont [13/16] 0.0, 128
    %134 = vxpose.xlu0.b32.cont [14/16] 0.0, 128
    %135 = vxpose.xlu0.b32.cont [15/16] 0.0, 128
    %136 = vxpose.xlu0.b32.end [16/16] 0.0, 128
    %v137 = vpop.trf.xlu0
    %v138 = vpop.trf.xlu0
    %v139 = vpop.trf.xlu0
    %v140 = vpop.trf.xlu0
    %v141 = vpop.trf.xlu0
    %v142 = vpop.trf.xlu0
    %v143 = vpop.trf.xlu0
    %v144 = vpop.trf.xlu0
    %v145 = vpop.trf.xlu0
    %v146 = vpop.trf.xlu0
    %v147 = vpop.trf.xlu0
    %v148 = vpop.trf.xlu0
    %v149 = vpop.trf.xlu0
    %v150 = vpop.trf.xlu0
    %v151 = vpop.trf.xlu0
    %v152 = vpop.trf.xlu0
    %153 = vst.msk [vmem:[#allocation2 + $0x48] sm:$0xff] %vm32, %v137
    %154 = vst.msk [vmem:[#allocation2 + $0x50] sm:$0xff] %vm32, %v138
    %155 = vst.msk [vmem:[#allocation2 + $0x58] sm:$0xff] %vm32, %v139
    %156 = vst.msk [vmem:[#allocation2 + $0x60] sm:$0xff] %vm32, %v140
    %157 = vst.msk [vmem:[#allocation2 + $0x68] sm:$0xff] %vm32, %v141
    %158 = vst.msk [vmem:[#allocation2 + $0x70] sm:$0xff] %vm32, %v142
    %159 = vst.msk [vmem:[#allocation2 + $0x78] sm:$0xff] %vm32, %v143
    %160 = vst.msk [vmem:[#allocation2 + $0x80] sm:$0xff] %vm32, %v144
    %s161 = scalar_lea.vmem %s1, 1
    %v162 = vld [vmem:[%s161] sm:$0x1]
    %163 = vst.msk [vmem:[#allocation2 + $0x88] sm:$0x1] %vm114, %v162
    %v164 = vld [vmem:[#allocation2] sm:$0xff]
    %v165 = vld [vmem:[#allocation2 + $0x8] sm:$0xff]
    %v166 = vld [vmem:[#allocation2 + $0x10] sm:$0xff]
    %v167 = vld [vmem:[#allocation2 + $0x18] sm:$0xff]
    %v168 = vld [vmem:[#allocation2 + $0x20] sm:$0xff]
    %v169 = vld [vmem:[#allocation2 + $0x28] sm:$0xff]
    %v170 = vld [vmem:[#allocation2 + $0x30] sm:$0xff]
    %v171 = vld [vmem:[#allocation2 + $0x38] sm:$0xff]
    %v172 = vld [vmem:[#allocation2 + $0x40] sm:$0xff]
    %v173 = vld [vmem:[#allocation2 + $0x48] sm:$0xff]
    %v174 = vld [vmem:[#allocation2 + $0x50] sm:$0xff]
    %v175 = vld [vmem:[#allocation2 + $0x58] sm:$0xff]
    %v176 = vld [vmem:[#allocation2 + $0x60] sm:$0xff]
    %v177 = vld [vmem:[#allocation2 + $0x68] sm:$0xff]
    %v178 = vld [vmem:[#allocation2 + $0x70] sm:$0xff]
    %v179 = vld [vmem:[#allocation2 + $0x78] sm:$0xff]
    %v180 = vld [vmem:[#allocation2 + $0x80] sm:$0xff]
    %v181 = vld [vmem:[#allocation2 + $0x88] sm:$0xff]
    %v182 = vld [vmem:[%s2] sm:$0xff]
    %v183 = vld [vmem:[%s2 + $0x8] sm:$0xff]
    %v184 = vld [vmem:[%s2 + $0x10] sm:$0xff]
    %v185 = vld [vmem:[%s2 + $0x18] sm:$0xff]
    %v187 = vsel %vm32, %v164, 0
    %v190 = vsel %vm32, %v165, 0
    %v193 = vsel %vm32, %v166, 0
    %v196 = vsel %vm32, %v167, 0
    %v199 = vsel %vm32, %v168, 0
    %v202 = vsel %vm32, %v169, 0
    %v205 = vsel %vm32, %v170, 0
    %v208 = vsel %vm32, %v171, 0
    %v211 = vsel %vm32, %v172, 0
    %v214 = vsel %vm32, %v173, 0
    %v217 = vsel %vm32, %v174, 0
    %v220 = vsel %vm32, %v175, 0
    %v223 = vsel %vm32, %v176, 0
    %v226 = vsel %vm32, %v177, 0
    %v229 = vsel %vm32, %v178, 0
    %v232 = vsel %vm32, %v179, 0
    %v235 = vsel %vm32, %v180, 0
    %v238 = vsel %vm32, %v181, 0
    %240 = vmatprep.subr.mxu0 0.0
    %241 = vmatpush1.msra.mxu0 %v182
    %242 = vmatprep.subr.mxu0 0.0
    %243 = vmatpush1.msra.mxu0 %v183
    %244 = vmatprep.subr.mxu0 0.0
    %245 = vmatpush1.msra.mxu0 %v184
    %246 = vmatprep.subr.mxu0 0.0
    %247 = vmatpush1.msra.mxu0 %v185
    %248 = vmatprep.subr.mxu0 0.0
    %249 = vmatpush1.msra.mxu0 0.0
    %250 = vmatprep.subr.mxu0 0.0
    %251 = vmatpush1.msra.mxu0 0.0
    %252 = vmatprep.subr.mxu0 0.0
    %253 = vmatpush1.msra.mxu0 0.0
    %254 = vmatprep.subr.mxu0 0.0
    %255 = vmatpush1.msra.mxu0 0.0
    %256 = vmatprep.subr.mxu0 0.0
    %257 = vmatpush1.msra.mxu0 0.0
    %258 = vmatprep.subr.mxu0 0.0
    %259 = vmatpush1.msra.mxu0 0.0
    %260 = vmatprep.subr.mxu0 0.0
    %261 = vmatpush1.msra.mxu0 0.0
    %262 = vmatprep.subr.mxu0 0.0
    %263 = vmatpush1.msra.mxu0 0.0
    %264 = vmatprep.subr.mxu0 0.0
    %265 = vmatpush1.msra.mxu0 0.0
    %266 = vmatprep.subr.mxu0 0.0
    %267 = vmatpush1.msra.mxu0 0.0
    %268 = vmatprep.subr.mxu0 0.0
    %269 = vmatpush1.msra.mxu0 0.0
    %270 = vmatprep.subr.mxu0 0.0
    %271 = vmatpush1.msra.mxu0 0.0
    %272 = vmatprep.subr.mxu0 0.0
    %273 = vmatpush1.msra.mxu0 0.0
    %274 = vmatprep.subr.mxu0 0.0
    %275 = vmatpush1.msra.mxu0 0.0
    %276 = vmatprep.subr.mxu0 0.0
    %277 = vmatpush1.msra.mxu0 0.0
    %278 = vmatprep.subr.mxu0 0.0
    %279 = vmatpush1.msra.mxu0 0.0
    %280 = vmatprep.subr.mxu0 0.0
    %281 = vmatpush1.msra.mxu0 0.0
    %282 = vmatprep.subr.mxu0 0.0
    %283 = vmatpush1.msra.mxu0 0.0
    %284 = vmatprep.subr.mxu0 0.0
    %285 = vmatpush1.msra.mxu0 0.0
    %286 = vmatprep.subr.mxu0 0.0
    %287 = vmatpush1.msra.mxu0 0.0
    %288 = vmatprep.subr.mxu0 0.0
    %289 = vmatpush1.msra.mxu0 0.0
    %290 = vmatprep.subr.mxu0 0.0
    %291 = vmatpush1.msra.mxu0 0.0
    %292 = vmatprep.subr.mxu0 0.0
    %293 = vmatpush1.msra.mxu0 0.0
    %294 = vmatprep.subr.mxu0 0.0
    %295 = vmatpush1.msra.mxu0 0.0
    %296 = vmatprep.subr.mxu0 0.0
    %297 = vmatpush1.msra.mxu0 0.0
    %298 = vmatprep.subr.mxu0 0.0
    %299 = vmatpush1.msra.mxu0 0.0
    %300 = vmatprep.subr.mxu0 0.0
    %301 = vmatpush1.msra.mxu0 0.0
    %302 = vmatprep.subr.mxu0 0.0
    %303 = vmatpush1.msra.mxu0 0.0
    %304 = vmatprep.mubr.f32.mxu0 0.0
    %305 = vmatmul.mubr.f32.gmra.mrb[0].mxu0 %v187
    %v306 = vpop.f32.mrb[0].mxu0
    %v307 = vadd.f32 0.0, %v306
    %v308 = vpop.f32.mrb[0].mxu0
    %309 = vmatprep.mubr.f32.mxu0 0.0
    %310 = vmatmul.mubr.f32.gmra.mrb[0].mxu0 %v190
    %v311 = vpop.f32.mrb[0].mxu0
    %v312 = vadd.f32 0.0, %v311
    %v313 = vpop.f32.mrb[0].mxu0
    %314 = vmatprep.mubr.f32.mxu0 0.0
    %315 = vmatmul.mubr.f32.gmra.mrb[0].mxu0 %v193
    %v316 = vpop.f32.mrb[0].mxu0
    %v317 = vadd.f32 0.0, %v316
    %v318 = vpop.f32.mrb[0].mxu0
    %319 = vmatprep.mubr.f32.mxu0 0.0
    %320 = vmatmul.mubr.f32.gmra.mrb[0].mxu0 %v196
    %v321 = vpop.f32.mrb[0].mxu0
    %v322 = vadd.f32 0.0, %v321
    %v323 = vpop.f32.mrb[0].mxu0
    %324 = vmatprep.mubr.f32.mxu0 0.0
    %325 = vmatmul.mubr.f32.gmra.mrb[0].mxu0 %v199
    %v326 = vpop.f32.mrb[0].mxu0
    %v327 = vadd.f32 0.0, %v326
    %v328 = vpop.f32.mrb[0].mxu0
    %329 = vmatprep.mubr.f32.mxu0 0.0
    %330 = vmatmul.mubr.f32.gmra.mrb[0].mxu0 %v202
    %v331 = vpop.f32.mrb[0].mxu0
    %v332 = vadd.f32 0.0, %v331
    %v333 = vpop.f32.mrb[0].mxu0
    %334 = vmatprep.mubr.f32.mxu0 0.0
    %335 = vmatmul.mubr.f32.gmra.mrb[0].mxu0 %v205
    %v336 = vpop.f32.mrb[0].mxu0
    %v337 = vadd.f32 0.0, %v336
    %v338 = vpop.f32.mrb[0].mxu0
    %339 = vmatprep.mubr.f32.mxu0 0.0
    %340 = vmatmul.mubr.f32.gmra.mrb[0].mxu0 %v208
    %v341 = vpop.f32.mrb[0].mxu0
    %v342 = vadd.f32 0.0, %v341
    %v343 = vpop.f32.mrb[0].mxu0
    %344 = vmatprep.mubr.f32.mxu0 0.0
    %345 = vmatmul.mubr.f32.gmra.mrb[0].mxu0 %v211
    %v346 = vpop.f32.mrb[0].mxu0
    %v347 = vadd.f32 0.0, %v346
    %v348 = vpop.f32.mrb[0].mxu0
    %349 = vmatprep.mubr.f32.mxu0 0.0
    %350 = vmatmul.mubr.f32.gmra.mrb[0].mxu0 %v214
    %v351 = vpop.f32.mrb[0].mxu0
    %v352 = vadd.f32 0.0, %v351
    %v353 = vpop.f32.mrb[0].mxu0
    %354 = vmatprep.mubr.f32.mxu0 0.0
    %355 = vmatmul.mubr.f32.gmra.mrb[0].mxu0 %v217
    %v356 = vpop.f32.mrb[0].mxu0
    %v357 = vadd.f32 0.0, %v356
    %v358 = vpop.f32.mrb[0].mxu0
    %359 = vmatprep.mubr.f32.mxu0 0.0
    %360 = vmatmul.mubr.f32.gmra.mrb[0].mxu0 %v220
    %v361 = vpop.f32.mrb[0].mxu0
    %v362 = vadd.f32 0.0, %v361
    %v363 = vpop.f32.mrb[0].mxu0
    %364 = vmatprep.mubr.f32.mxu0 0.0
    %365 = vmatmul.mubr.f32.gmra.mrb[0].mxu0 %v223
    %v366 = vpop.f32.mrb[0].mxu0
    %v367 = vadd.f32 0.0, %v366
    %v368 = vpop.f32.mrb[0].mxu0
    %369 = vmatprep.mubr.f32.mxu0 0.0
    %370 = vmatmul.mubr.f32.gmra.mrb[0].mxu0 %v226
    %v371 = vpop.f32.mrb[0].mxu0
    %v372 = vadd.f32 0.0, %v371
    %v373 = vpop.f32.mrb[0].mxu0
    %374 = vmatprep.mubr.f32.mxu0 0.0
    %375 = vmatmul.mubr.f32.gmra.mrb[0].mxu0 %v229
    %v376 = vpop.f32.mrb[0].mxu0
    %v377 = vadd.f32 0.0, %v376
    %v378 = vpop.f32.mrb[0].mxu0
    %379 = vmatprep.mubr.f32.mxu0 0.0
    %380 = vmatmul.mubr.f32.gmra.mrb[0].mxu0 %v232
    %v381 = vpop.f32.mrb[0].mxu0
    %v382 = vadd.f32 0.0, %v381
    %v383 = vpop.f32.mrb[0].mxu0
    %384 = vmatprep.mubr.f32.mxu0 0.0
    %385 = vmatmul.mubr.f32.gmra.mrb[0].mxu0 %v235
    %v386 = vpop.f32.mrb[0].mxu0
    %v387 = vadd.f32 0.0, %v386
    %v388 = vpop.f32.mrb[0].mxu0
    %389 = vmatprep.mubr.f32.mxu0 0.0
    %390 = vmatmul.mubr.f32.gmra.mrb[0].mxu0 %v238
    %v391 = vpop.f32.mrb[0].mxu0
    %v392 = vadd.f32 0.0, %v391
    %v393 = vpop.f32.mrb[0].mxu0
    %394 = vdwg.mxu0
    %v395 = vmul.f32 %v307, 0.35355338
    %v396 = vmul.f32 %v312, 0.35355338
    %v397 = vmul.f32 %v317, 0.35355338
    %v398 = vmul.f32 %v322, 0.35355338
    %v399 = vmul.f32 %v327, 0.35355338
    %v400 = vmul.f32 %v332, 0.35355338
    %v401 = vmul.f32 %v337, 0.35355338
    %v402 = vmul.f32 %v342, 0.35355338
    %v403 = vmul.f32 %v347, 0.35355338
    %v404 = vmul.f32 %v352, 0.35355338
    %v405 = vmul.f32 %v357, 0.35355338
    %v406 = vmul.f32 %v362, 0.35355338
    %v407 = vmul.f32 %v367, 0.35355338
    %v408 = vmul.f32 %v372, 0.35355338
    %v409 = vmul.f32 %v377, 0.35355338
    %v410 = vmul.f32 %v382, 0.35355338
    %v411 = vmul.f32 %v387, 0.35355338
    %v412 = vmul.f32 %v392, 0.35355338
    %422 = vrot.lane.b32.xlu0 %v307, 96
    %v423 = vpop.permute.xlu0 %422
    %424 = vrot.lane.b32.xlu0 %v312, 96
    %v425 = vpop.permute.xlu0 %424
    %426 = vrot.lane.b32.xlu0 %v317, 96
    %v427 = vpop.permute.xlu0 %426
    %428 = vrot.lane.b32.xlu0 %v322, 96
    %v429 = vpop.permute.xlu0 %428
    %430 = vrot.lane.b32.xlu0 %v327, 96
    %v431 = vpop.permute.xlu0 %430
    %432 = vrot.lane.b32.xlu0 %v332, 96
    %v433 = vpop.permute.xlu0 %432
    %434 = vrot.lane.b32.xlu0 %v337, 96
    %v435 = vpop.permute.xlu0 %434
    %436 = vrot.lane.b32.xlu0 %v342, 96
    %v437 = vpop.permute.xlu0 %436
    %438 = vrot.lane.b32.xlu0 %v347, 96
    %v439 = vpop.permute.xlu0 %438
    %vm440 = vcmask 64512
    %v442 = vsel %vm440, %v395, 0
    %v445 = vsel %vm440, %v396, 0
    %v448 = vsel %vm440, %v397, 0
    %v451 = vsel %vm440, %v398, 0
    %v454 = vsel %vm440, %v399, 0
    %v457 = vsel %vm440, %v400, 0
    %v460 = vsel %vm440, %v401, 0
    %v463 = vsel %vm440, %v402, 0
    %v466 = vsel %vm440, %v403, 0
    %v468 = vsel %vm440, %v423, 0
    %v470 = vsel %vm440, %v425, 0
    %v472 = vsel %vm440, %v427, 0
    %v474 = vsel %vm440, %v429, 0
    %v476 = vsel %vm440, %v431, 0
    %v478 = vsel %vm440, %v433, 0
    %v480 = vsel %vm440, %v435, 0
    %v482 = vsel %vm440, %v437, 0
    %v484 = vsel %vm440, %v439, 0
    %486 = vmatprep.subr.mxu0 0.0
    %487 = vmatpush1.xpose.msra.mxu0 %v468
    %488 = vmatprep.subr.mxu0 0.0
    %489 = vmatpush1.xpose.msra.mxu0 %v470
    %490 = vmatprep.subr.mxu0 0.0
    %491 = vmatpush1.xpose.msra.mxu0 %v472
    %492 = vmatprep.subr.mxu0 0.0
    %493 = vmatpush1.xpose.msra.mxu0 %v474
    %494 = vmatprep.subr.mxu0 0.0
    %495 = vmatpush1.xpose.msra.mxu0 %v476
    %496 = vmatprep.subr.mxu0 0.0
    %497 = vmatpush1.xpose.msra.mxu0 %v478
    %498 = vmatprep.subr.mxu0 0.0
    %499 = vmatpush1.xpose.msra.mxu0 %v480
    %500 = vmatprep.subr.mxu0 0.0
    %501 = vmatpush1.xpose.msra.mxu0 %v482
    %502 = vmatprep.subr.mxu0 0.0
    %503 = vmatpush1.xpose.msra.mxu0 %v484
    %504 = vmatprep.subr.mxu0 0.0
    %505 = vmatpush1.xpose.msra.mxu0 0.0
    %506 = vmatprep.subr.mxu0 0.0
    %507 = vmatpush1.xpose.msra.mxu0 0.0
    %508 = vmatprep.subr.mxu0 0.0
    %509 = vmatpush1.xpose.msra.mxu0 0.0
    %510 = vmatprep.subr.mxu0 0.0
    %511 = vmatpush1.xpose.msra.mxu0 0.0
    %512 = vmatprep.subr.mxu0 0.0
    %513 = vmatpush1.xpose.msra.mxu0 0.0
    %514 = vmatprep.subr.mxu0 0.0
    %515 = vmatpush1.xpose.msra.mxu0 0.0
    %516 = vmatprep.subr.mxu0 0.0
    %517 = vmatpush1.xpose.msra.mxu0 0.0
    %518 = vmatprep.subr.mxu0 0.0
    %519 = vmatpush1.xpose.msra.mxu0 0.0
    %520 = vmatprep.subr.mxu0 0.0
    %521 = vmatpush1.xpose.msra.mxu0 0.0
    %522 = vmatprep.subr.mxu0 0.0
    %523 = vmatpush1.xpose.msra.mxu0 0.0
    %524 = vmatprep.subr.mxu0 0.0
    %525 = vmatpush1.xpose.msra.mxu0 0.0
    %526 = vmatprep.subr.mxu0 0.0
    %527 = vmatpush1.xpose.msra.mxu0 0.0
    %528 = vmatprep.subr.mxu0 0.0
    %529 = vmatpush1.xpose.msra.mxu0 0.0
    %530 = vmatprep.subr.mxu0 0.0
    %531 = vmatpush1.xpose.msra.mxu0 0.0
    %532 = vmatprep.subr.mxu0 0.0
    %533 = vmatpush1.xpose.msra.mxu0 0.0
    %534 = vmatprep.subr.mxu0 0.0
    %535 = vmatpush1.xpose.msra.mxu0 0.0
    %536 = vmatprep.subr.mxu0 0.0
    %537 = vmatpush1.xpose.msra.mxu0 0.0
    %538 = vmatprep.subr.mxu0 0.0
    %539 = vmatpush1.xpose.msra.mxu0 0.0
    %540 = vmatprep.subr.mxu0 0.0
    %541 = vmatpush1.xpose.msra.mxu0 0.0
    %542 = vmatprep.subr.mxu0 0.0
    %543 = vmatpush1.xpose.msra.mxu0 0.0
    %544 = vmatprep.subr.mxu0 0.0
    %545 = vmatpush1.xpose.msra.mxu0 0.0
    %546 = vmatprep.subr.mxu0 0.0
    %547 = vmatpush1.xpose.msra.mxu0 0.0
    %548 = vmatprep.subr.mxu0 0.0
    %549 = vmatpush1.xpose.msra.mxu0 0.0
    %550 = vmatprep.mubr.f32.mxu0 0.0
    %551 = vmatmul.mubr.f32.gmra.mrb[0].mxu0 %v442
    %v552 = vpop.f32.mrb[0].mxu0
    %v553 = vadd.f32 0.0, %v552
    %v554 = vpop.f32.mrb[0].mxu0
    %555 = vmatprep.mubr.f32.mxu0 0.0
    %556 = vmatmul.mubr.f32.gmra.mrb[0].mxu0 %v445
    %v557 = vpop.f32.mrb[0].mxu0
    %v558 = vadd.f32 0.0, %v557
    %v559 = vpop.f32.mrb[0].mxu0
    %560 = vmatprep.mubr.f32.mxu0 0.0
    %561 = vmatmul.mubr.f32.gmra.mrb[0].mxu0 %v448
    %v562 = vpop.f32.mrb[0].mxu0
    %v563 = vadd.f32 0.0, %v562
    %v564 = vpop.f32.mrb[0].mxu0
    %565 = vmatprep.mubr.f32.mxu0 0.0
    %566 = vmatmul.mubr.f32.gmra.mrb[0].mxu0 %v451
    %v567 = vpop.f32.mrb[0].mxu0
    %v568 = vadd.f32 0.0, %v567
    %v569 = vpop.f32.mrb[0].mxu0
    %570 = vmatprep.mubr.f32.mxu0 0.0
    %571 = vmatmul.mubr.f32.gmra.mrb[0].mxu0 %v454
    %v572 = vpop.f32.mrb[0].mxu0
    %v573 = vadd.f32 0.0, %v572
    %v574 = vpop.f32.mrb[0].mxu0
    %575 = vmatprep.mubr.f32.mxu0 0.0
    %576 = vmatmul.mubr.f32.gmra.mrb[0].mxu0 %v457
    %v577 = vpop.f32.mrb[0].mxu0
    %v578 = vadd.f32 0.0, %v577
    %v579 = vpop.f32.mrb[0].mxu0
    %580 = vmatprep.mubr.f32.mxu0 0.0
    %581 = vmatmul.mubr.f32.gmra.mrb[0].mxu0 %v460
    %v582 = vpop.f32.mrb[0].mxu0
    %v583 = vadd.f32 0.0, %v582
    %v584 = vpop.f32.mrb[0].mxu0
    %585 = vmatprep.mubr.f32.mxu0 0.0
    %586 = vmatmul.mubr.f32.gmra.mrb[0].mxu0 %v463
    %v587 = vpop.f32.mrb[0].mxu0
    %v588 = vadd.f32 0.0, %v587
    %v589 = vpop.f32.mrb[0].mxu0
    %590 = vmatprep.mubr.f32.mxu0 0.0
    %591 = vmatmul.mubr.f32.gmra.mrb[0].mxu0 %v466
    %v592 = vpop.f32.mrb[0].mxu0
    %v593 = vadd.f32 0.0, %v592
    %v594 = vpop.f32.mrb[0].mxu0
    %595 = vdwg.mxu0
    %vm596 = vcmask 531456
    %v597 = vsel %vm596, %v553, -inf
    %598 = vmax.xlane.f32.xlu0 %v597
    %v599 = vpop.xlane.xlu0 %598
    %v600 = vsel %vm596, %v558, -inf
    %601 = vmax.xlane.f32.xlu0 %v600
    %v602 = vpop.xlane.xlu0 %601
    %v603 = vsel %vm596, %v563, -inf
    %604 = vmax.xlane.f32.xlu0 %v603
    %v605 = vpop.xlane.xlu0 %604
    %v606 = vsel %vm596, %v568, -inf
    %607 = vmax.xlane.f32.xlu0 %v606
    %v608 = vpop.xlane.xlu0 %607
    %v609 = vsel %vm596, %v573, -inf
    %610 = vmax.xlane.f32.xlu0 %v609
    %v611 = vpop.xlane.xlu0 %610
    %v612 = vsel %vm596, %v578, -inf
    %613 = vmax.xlane.f32.xlu0 %v612
    %v614 = vpop.xlane.xlu0 %613
    %v615 = vsel %vm596, %v583, -inf
    %616 = vmax.xlane.f32.xlu0 %v615
    %v617 = vpop.xlane.xlu0 %616
    %v618 = vsel %vm596, %v588, -inf
    %619 = vmax.xlane.f32.xlu0 %v618
    %v620 = vpop.xlane.xlu0 %619
    %vm621 = vcmask 524288
    %v622 = vsel %vm621, %v593, -inf
    %623 = vmax.xlane.f32.xlu0 %v622
    %v624 = vpop.xlane.xlu0 %623
    %v625 = vsub.f32 %v553, %v599
    %v626 = vsub.f32 %v558, %v602
    %v627 = vsub.f32 %v563, %v605
    %v628 = vsub.f32 %v568, %v608
    %v629 = vsub.f32 %v573, %v611
    %v630 = vsub.f32 %v578, %v614
    %v631 = vsub.f32 %v583, %v617
    %v632 = vsub.f32 %v588, %v620
    %v633 = vsub.f32 %v593, %v624
    %v634 = vmul.f32 %v625, 1.442695
    %v635 = vpow.pop %v634
    %v636 = vmul.f32 %v626, 1.442695
    %v637 = vpow.pop %v636
    %v638 = vmul.f32 %v627, 1.442695
    %v639 = vpow.pop %v638
    %v640 = vmul.f32 %v628, 1.442695
    %v641 = vpow.pop %v640
    %v642 = vmul.f32 %v629, 1.442695
    %v643 = vpow.pop %v642
    %v644 = vmul.f32 %v630, 1.442695
    %v645 = vpow.pop %v644
    %v646 = vmul.f32 %v631, 1.442695
    %v647 = vpow.pop %v646
    %v648 = vmul.f32 %v632, 1.442695
    %v649 = vpow.pop %v648
    %v650 = vmul.f32 %v633, 1.442695
    %v651 = vpow.pop %v650
    %v652 = vsel %vm596, %v635, 0.0
    %653 = vadd.xlane.f32.xlu0 %v652
    %v654 = vpop.xlane.xlu0 %653
    %v655 = vsel %vm596, %v637, 0.0
    %656 = vadd.xlane.f32.xlu0 %v655
    %v657 = vpop.xlane.xlu0 %656
    %v658 = vsel %vm596, %v639, 0.0
    %659 = vadd.xlane.f32.xlu0 %v658
    %v660 = vpop.xlane.xlu0 %659
    %v661 = vsel %vm596, %v641, 0.0
    %662 = vadd.xlane.f32.xlu0 %v661
    %v663 = vpop.xlane.xlu0 %662
    %v664 = vsel %vm596, %v643, 0.0
    %665 = vadd.xlane.f32.xlu0 %v664
    %v666 = vpop.xlane.xlu0 %665
    %v667 = vsel %vm596, %v645, 0.0
    %668 = vadd.xlane.f32.xlu0 %v667
    %v669 = vpop.xlane.xlu0 %668
    %v670 = vsel %vm596, %v647, 0.0
    %671 = vadd.xlane.f32.xlu0 %v670
    %v672 = vpop.xlane.xlu0 %671
    %v673 = vsel %vm596, %v649, 0.0
    %674 = vadd.xlane.f32.xlu0 %v673
    %v675 = vpop.xlane.xlu0 %674
    %v676 = vsel %vm621, %v651, 0.0
    %677 = vadd.xlane.f32.xlu0 %v676
    %v678 = vpop.xlane.xlu0 %677
    %v679 = vrcp.pop %v654
    %v680 = vmul.f32 %v635, %v679
    %v681 = vrcp.pop %v657
    %v682 = vmul.f32 %v637, %v681
    %v683 = vrcp.pop %v660
    %v684 = vmul.f32 %v639, %v683
    %v685 = vrcp.pop %v663
    %v686 = vmul.f32 %v641, %v685
    %v687 = vrcp.pop %v666
    %v688 = vmul.f32 %v643, %v687
    %v689 = vrcp.pop %v669
    %v690 = vmul.f32 %v645, %v689
    %v691 = vrcp.pop %v672
    %v692 = vmul.f32 %v647, %v691
    %v693 = vrcp.pop %v675
    %v694 = vmul.f32 %v649, %v693
    %v695 = vrcp.pop %v678
    %v696 = vmul.f32 %v651, %v695
    %697 = vrot.lane.b32.xlu0 %v307, 64
    %v698 = vpop.permute.xlu0 %697
    %699 = vrot.lane.b32.xlu0 %v312, 64
    %v700 = vpop.permute.xlu0 %699
    %701 = vrot.lane.b32.xlu0 %v317, 64
    %v702 = vpop.permute.xlu0 %701
    %703 = vrot.lane.b32.xlu0 %v322, 64
    %v704 = vpop.permute.xlu0 %703
    %705 = vrot.lane.b32.xlu0 %v327, 64
    %v706 = vpop.permute.xlu0 %705
    %707 = vrot.lane.b32.xlu0 %v332, 64
    %v708 = vpop.permute.xlu0 %707
    %709 = vrot.lane.b32.xlu0 %v337, 64
    %v710 = vpop.permute.xlu0 %709
    %711 = vrot.lane.b32.xlu0 %v342, 64
    %v712 = vpop.permute.xlu0 %711
    %713 = vrot.lane.b32.xlu0 %v347, 64
    %v714 = vpop.permute.xlu0 %713
    %v724 = vsel %vm596, %v680, 0
    %v727 = vsel %vm596, %v682, 0
    %v730 = vsel %vm596, %v684, 0
    %v733 = vsel %vm596, %v686, 0
    %v736 = vsel %vm596, %v688, 0
    %v739 = vsel %vm596, %v690, 0
    %v742 = vsel %vm596, %v692, 0
    %v745 = vsel %vm596, %v694, 0
    %v748 = vsel %vm596, %v696, 0
    %vm750 = vcmask 1040384
    %v751 = vsel %vm750, %v714, 0
    %753 = vmatprep.subr.mxu0 0.0
    %754 = vmatpush1.msra.mxu0 %v698
    %755 = vmatprep.subr.mxu0 0.0
    %756 = vmatpush1.msra.mxu0 %v700
    %757 = vmatprep.subr.mxu0 0.0
    %758 = vmatpush1.msra.mxu0 %v702
    %759 = vmatprep.subr.mxu0 0.0
    %760 = vmatpush1.msra.mxu0 %v704
    %761 = vmatprep.subr.mxu0 0.0
    %762 = vmatpush1.msra.mxu0 %v706
    %763 = vmatprep.subr.mxu0 0.0
    %764 = vmatpush1.msra.mxu0 %v708
    %765 = vmatprep.subr.mxu0 0.0
    %766 = vmatpush1.msra.mxu0 %v710
    %767 = vmatprep.subr.mxu0 0.0
    %768 = vmatpush1.msra.mxu0 %v712
    %769 = vmatprep.subr.mxu0 0.0
    %770 = vmatpush1.msra.mxu0 %v751
    %771 = vmatprep.subr.mxu0 0.0
    %772 = vmatpush1.msra.mxu0 0.0
    %773 = vmatprep.subr.mxu0 0.0
    %774 = vmatpush1.msra.mxu0 0.0
    %775 = vmatprep.subr.mxu0 0.0
    %776 = vmatpush1.msra.mxu0 0.0
    %777 = vmatprep.subr.mxu0 0.0
    %778 = vmatpush1.msra.mxu0 0.0
    %779 = vmatprep.subr.mxu0 0.0
    %780 = vmatpush1.msra.mxu0 0.0
    %781 = vmatprep.subr.mxu0 0.0
    %782 = vmatpush1.msra.mxu0 0.0
    %783 = vmatprep.subr.mxu0 0.0
    %784 = vmatpush1.msra.mxu0 0.0
    %785 = vmatprep.subr.mxu0 0.0
    %786 = vmatpush1.msra.mxu0 0.0
    %787 = vmatprep.subr.mxu0 0.0
    %788 = vmatpush1.msra.mxu0 0.0
    %789 = vmatprep.subr.mxu0 0.0
    %790 = vmatpush1.msra.mxu0 0.0
    %791 = vmatprep.subr.mxu0 0.0
    %792 = vmatpush1.msra.mxu0 0.0
    %793 = vmatprep.subr.mxu0 0.0
    %794 = vmatpush1.msra.mxu0 0.0
    %795 = vmatprep.subr.mxu0 0.0
    %796 = vmatpush1.msra.mxu0 0.0
    %797 = vmatprep.subr.mxu0 0.0
    %798 = vmatpush1.msra.mxu0 0.0
    %799 = vmatprep.subr.mxu0 0.0
    %800 = vmatpush1.msra.mxu0 0.0
    %801 = vmatprep.subr.mxu0 0.0
    %802 = vmatpush1.msra.mxu0 0.0
    %803 = vmatprep.subr.mxu0 0.0
    %804 = vmatpush1.msra.mxu0 0.0
    %805 = vmatprep.subr.mxu0 0.0
    %806 = vmatpush1.msra.mxu0 0.0
    %807 = vmatprep.subr.mxu0 0.0
    %808 = vmatpush1.msra.mxu0 0.0
    %809 = vmatprep.subr.mxu0 0.0
    %810 = vmatpush1.msra.mxu0 0.0
    %811 = vmatprep.subr.mxu0 0.0
    %812 = vmatpush1.msra.mxu0 0.0
    %813 = vmatprep.subr.mxu0 0.0
    %814 = vmatpush1.msra.mxu0 0.0
    %815 = vmatprep.subr.mxu0 0.0
    %816 = vmatpush1.msra.mxu0 0.0
    %817 = vmatprep.mubr.f32.mxu0 0.0
    %818 = vmatmul.mubr.f32.gmra.mrb[0].mxu0 %v724
    %v819 = vpop.f32.mrb[0].mxu0
    %v820 = vadd.f32 0.0, %v819
    %v821 = vpop.f32.mrb[0].mxu0
    %822 = vmatprep.mubr.f32.mxu0 0.0
    %823 = vmatmul.mubr.f32.gmra.mrb[0].mxu0 %v727
    %v824 = vpop.f32.mrb[0].mxu0
    %v825 = vadd.f32 0.0, %v824
    %v826 = vpop.f32.mrb[0].mxu0
    %827 = vmatprep.mubr.f32.mxu0 0.0
    %828 = vmatmul.mubr.f32.gmra.mrb[0].mxu0 %v730
    %v829 = vpop.f32.mrb[0].mxu0
    %v830 = vadd.f32 0.0, %v829
    %v831 = vpop.f32.mrb[0].mxu0
    %832 = vmatprep.mubr.f32.mxu0 0.0
    %833 = vmatmul.mubr.f32.gmra.mrb[0].mxu0 %v733
    %v834 = vpop.f32.mrb[0].mxu0
    %v835 = vadd.f32 0.0, %v834
    %v836 = vpop.f32.mrb[0].mxu0
    %837 = vmatprep.mubr.f32.mxu0 0.0
    %838 = vmatmul.mubr.f32.gmra.mrb[0].mxu0 %v736
    %v839 = vpop.f32.mrb[0].mxu0
    %v840 = vadd.f32 0.0, %v839
    %v841 = vpop.f32.mrb[0].mxu0
    %842 = vmatprep.mubr.f32.mxu0 0.0
    %843 = vmatmul.mubr.f32.gmra.mrb[0].mxu0 %v739
    %v844 = vpop.f32.mrb[0].mxu0
    %v845 = vadd.f32 0.0, %v844
    %v846 = vpop.f32.mrb[0].mxu0
    %847 = vmatprep.mubr.f32.mxu0 0.0
    %848 = vmatmul.mubr.f32.gmra.mrb[0].mxu0 %v742
    %v849 = vpop.f32.mrb[0].mxu0
    %v850 = vadd.f32 0.0, %v849
    %v851 = vpop.f32.mrb[0].mxu0
    %852 = vmatprep.mubr.f32.mxu0 0.0
    %853 = vmatmul.mubr.f32.gmra.mrb[0].mxu0 %v745
    %v854 = vpop.f32.mrb[0].mxu0
    %v855 = vadd.f32 0.0, %v854
    %v856 = vpop.f32.mrb[0].mxu0
    %857 = vmatprep.mubr.f32.mxu0 0.0
    %858 = vmatmul.mubr.f32.gmra.mrb[0].mxu0 %v748
    %v859 = vpop.f32.mrb[0].mxu0
    %v860 = vadd.f32 0.0, %v859
    %v861 = vpop.f32.mrb[0].mxu0
    %862 = vdwg.mxu0
    %863 = vst.msk [vmem:[#allocation3] sm:$0xff] %vm440, %v820
    %864 = vst.msk [vmem:[#allocation3 + $0x8] sm:$0xff] %vm440, %v825
    %865 = vst.msk [vmem:[#allocation3 + $0x10] sm:$0xff] %vm440, %v830
    %866 = vst.msk [vmem:[#allocation3 + $0x18] sm:$0xff] %vm440, %v835
    %867 = vst.msk [vmem:[#allocation3 + $0x20] sm:$0xff] %vm440, %v840
    %868 = vst.msk [vmem:[#allocation3 + $0x28] sm:$0xff] %vm440, %v845
    %869 = vst.msk [vmem:[#allocation3 + $0x30] sm:$0xff] %vm440, %v850
    %870 = vst.msk [vmem:[#allocation3 + $0x38] sm:$0xff] %vm440, %v855
    %vm871 = vcmask 57344
    %872 = vst.msk [vmem:[#allocation3 + $0x40] sm:$0x1] %vm871, %v860
    %873 = vrot.lane.b32.xlu0 %v395, 120
    %v874 = vpop.permute.xlu0 %873
    %875 = vrot.lane.b32.xlu0 %v396, 120
    %v876 = vpop.permute.xlu0 %875
    %877 = vrot.lane.b32.xlu0 %v397, 120
    %v878 = vpop.permute.xlu0 %877
    %879 = vrot.lane.b32.xlu0 %v398, 120
    %v880 = vpop.permute.xlu0 %879
    %881 = vrot.lane.b32.xlu0 %v399, 120
    %v882 = vpop.permute.xlu0 %881
    %883 = vrot.lane.b32.xlu0 %v400, 120
    %v884 = vpop.permute.xlu0 %883
    %885 = vrot.lane.b32.xlu0 %v401, 120
    %v886 = vpop.permute.xlu0 %885
    %887 = vrot.lane.b32.xlu0 %v402, 120
    %v888 = vpop.permute.xlu0 %887
    %889 = vrot.lane.b32.xlu0 %v403, 120
    %v890 = vpop.permute.xlu0 %889
    %891 = vrot.lane.b32.xlu0 %v307, 88
    %v892 = vpop.permute.xlu0 %891
    %893 = vrot.lane.b32.xlu0 %v312, 88
    %v894 = vpop.permute.xlu0 %893
    %895 = vrot.lane.b32.xlu0 %v317, 88
    %v896 = vpop.permute.xlu0 %895
    %897 = vrot.lane.b32.xlu0 %v322, 88
    %v898 = vpop.permute.xlu0 %897
    %899 = vrot.lane.b32.xlu0 %v327, 88
    %v900 = vpop.permute.xlu0 %899
    %901 = vrot.lane.b32.xlu0 %v332, 88
    %v902 = vpop.permute.xlu0 %901
    %903 = vrot.lane.b32.xlu0 %v337, 88
    %v904 = vpop.permute.xlu0 %903
    %905 = vrot.lane.b32.xlu0 %v342, 88
    %v906 = vpop.permute.xlu0 %905
    %907 = vrot.lane.b32.xlu0 %v347, 88
    %v908 = vpop.permute.xlu0 %907
    %v909 = vsel %vm440, %v874, 0
    %v911 = vsel %vm440, %v876, 0
    %v913 = vsel %vm440, %v878, 0
    %v915 = vsel %vm440, %v880, 0
    %v917 = vsel %vm440, %v882, 0
    %v919 = vsel %vm440, %v884, 0
    %v921 = vsel %vm440, %v886, 0
    %v923 = vsel %vm440, %v888, 0
    %v925 = vsel %vm440, %v890, 0
    %v927 = vsel %vm440, %v892, 0
    %v929 = vsel %vm440, %v894, 0
    %v931 = vsel %vm440, %v896, 0
    %v933 = vsel %vm440, %v898, 0
    %v935 = vsel %vm440, %v900, 0
    %v937 = vsel %vm440, %v902, 0
    %v939 = vsel %vm440, %v904, 0
    %v941 = vsel %vm440, %v906, 0
    %v943 = vsel %vm440, %v908, 0
    %945 = vmatprep.subr.mxu0 0.0
    %946 = vmatpush1.xpose.msra.mxu0 %v927
    %947 = vmatprep.subr.mxu0 0.0
    %948 = vmatpush1.xpose.msra.mxu0 %v929
    %949 = vmatprep.subr.mxu0 0.0
    %950 = vmatpush1.xpose.msra.mxu0 %v931
    %951 = vmatprep.subr.mxu0 0.0
    %952 = vmatpush1.xpose.msra.mxu0 %v933
    %953 = vmatprep.subr.mxu0 0.0
    %954 = vmatpush1.xpose.msra.mxu0 %v935
    %955 = vmatprep.subr.mxu0 0.0
    %956 = vmatpush1.xpose.msra.mxu0 %v937
    %957 = vmatprep.subr.mxu0 0.0
    %958 = vmatpush1.xpose.msra.mxu0 %v939
    %959 = vmatprep.subr.mxu0 0.0
    %960 = vmatpush1.xpose.msra.mxu0 %v941
    %961 = vmatprep.subr.mxu0 0.0
    %962 = vmatpush1.xpose.msra.mxu0 %v943
    %963 = vmatprep.subr.mxu0 0.0
    %964 = vmatpush1.xpose.msra.mxu0 0.0
    %965 = vmatprep.subr.mxu0 0.0
    %966 = vmatpush1.xpose.msra.mxu0 0.0
    %967 = vmatprep.subr.mxu0 0.0
    %968 = vmatpush1.xpose.msra.mxu0 0.0
    %969 = vmatprep.subr.mxu0 0.0
    %970 = vmatpush1.xpose.msra.mxu0 0.0
    %971 = vmatprep.subr.mxu0 0.0
    %972 = vmatpush1.xpose.msra.mxu0 0.0
    %973 = vmatprep.subr.mxu0 0.0
    %974 = vmatpush1.xpose.msra.mxu0 0.0
    %975 = vmatprep.subr.mxu0 0.0
    %976 = vmatpush1.xpose.msra.mxu0 0.0
    %977 = vmatprep.subr.mxu0 0.0
    %978 = vmatpush1.xpose.msra.mxu0 0.0
    %979 = vmatprep.subr.mxu0 0.0
    %980 = vmatpush1.xpose.msra.mxu0 0.0
    %981 = vmatprep.subr.mxu0 0.0
    %982 = vmatpush1.xpose.msra.mxu0 0.0
    %983 = vmatprep.subr.mxu0 0.0
    %984 = vmatpush1.xpose.msra.mxu0 0.0
    %985 = vmatprep.subr.mxu0 0.0
    %986 = vmatpush1.xpose.msra.mxu0 0.0
    %987 = vmatprep.subr.mxu0 0.0
    %988 = vmatpush1.xpose.msra.mxu0 0.0
    %989 = vmatprep.subr.mxu0 0.0
    %990 = vmatpush1.xpose.msra.mxu0 0.0
    %991 = vmatprep.subr.mxu0 0.0
    %992 = vmatpush1.xpose.msra.mxu0 0.0
    %993 = vmatprep.subr.mxu0 0.0
    %994 = vmatpush1.xpose.msra.mxu0 0.0
    %995 = vmatprep.subr.mxu0 0.0
    %996 = vmatpush1.xpose.msra.mxu0 0.0
    %997 = vmatprep.subr.mxu0 0.0
    %998 = vmatpush1.xpose.msra.mxu0 0.0
    %999 = vmatprep.subr.mxu0 0.0
    %1000 = vmatpush1.xpose.msra.mxu0 0.0
    %1001 = vmatprep.subr.mxu0 0.0
    %1002 = vmatpush1.xpose.msra.mxu0 0.0
    %1003 = vmatprep.subr.mxu0 0.0
    %1004 = vmatpush1.xpose.msra.mxu0 0.0
    %1005 = vmatprep.subr.mxu0 0.0
    %1006 = vmatpush1.xpose.msra.mxu0 0.0
    %1007 = vmatprep.subr.mxu0 0.0
    %1008 = vmatpush1.xpose.msra.mxu0 0.0
    %1009 = vmatprep.mubr.f32.mxu0 0.0
    %1010 = vmatmul.mubr.f32.gmra.mrb[0].mxu0 %v909
    %v1011 = vpop.f32.mrb[0].mxu0
    %v1012 = vadd.f32 0.0, %v1011
    %v1013 = vpop.f32.mrb[0].mxu0
    %1014 = vmatprep.mubr.f32.mxu0 0.0
    %1015 = vmatmul.mubr.f32.gmra.mrb[0].mxu0 %v911
    %v1016 = vpop.f32.mrb[0].mxu0
    %v1017 = vadd.f32 0.0, %v1016
    %v1018 = vpop.f32.mrb[0].mxu0
    %1019 = vmatprep.mubr.f32.mxu0 0.0
    %1020 = vmatmul.mubr.f32.gmra.mrb[0].mxu0 %v913
    %v1021 = vpop.f32.mrb[0].mxu0
    %v1022 = vadd.f32 0.0, %v1021
    %v1023 = vpop.f32.mrb[0].mxu0
    %1024 = vmatprep.mubr.f32.mxu0 0.0
    %1025 = vmatmul.mubr.f32.gmra.mrb[0].mxu0 %v915
    %v1026 = vpop.f32.mrb[0].mxu0
    %v1027 = vadd.f32 0.0, %v1026
    %v1028 = vpop.f32.mrb[0].mxu0
    %1029 = vmatprep.mubr.f32.mxu0 0.0
    %1030 = vmatmul.mubr.f32.gmra.mrb[0].mxu0 %v917
    %v1031 = vpop.f32.mrb[0].mxu0
    %v1032 = vadd.f32 0.0, %v1031
    %v1033 = vpop.f32.mrb[0].mxu0
    %1034 = vmatprep.mubr.f32.mxu0 0.0
    %1035 = vmatmul.mubr.f32.gmra.mrb[0].mxu0 %v919
    %v1036 = vpop.f32.mrb[0].mxu0
    %v1037 = vadd.f32 0.0, %v1036
    %v1038 = vpop.f32.mrb[0].mxu0
    %1039 = vmatprep.mubr.f32.mxu0 0.0
    %1040 = vmatmul.mubr.f32.gmra.mrb[0].mxu0 %v921
    %v1041 = vpop.f32.mrb[0].mxu0
    %v1042 = vadd.f32 0.0, %v1041
    %v1043 = vpop.f32.mrb[0].mxu0
    %1044 = vmatprep.mubr.f32.mxu0 0.0
    %1045 = vmatmul.mubr.f32.gmra.mrb[0].mxu0 %v923
    %v1046 = vpop.f32.mrb[0].mxu0
    %v1047 = vadd.f32 0.0, %v1046
    %v1048 = vpop.f32.mrb[0].mxu0
    %1049 = vmatprep.mubr.f32.mxu0 0.0
    %1050 = vmatmul.mubr.f32.gmra.mrb[0].mxu0 %v925
    %v1051 = vpop.f32.mrb[0].mxu0
    %v1052 = vadd.f32 0.0, %v1051
    %v1053 = vpop.f32.mrb[0].mxu0
    %1054 = vdwg.mxu0
    %v1055 = vsel %vm596, %v1012, -inf
    %1056 = vmax.xlane.f32.xlu0 %v1055
    %v1057 = vpop.xlane.xlu0 %1056
    %v1058 = vsel %vm596, %v1017, -inf
    %1059 = vmax.xlane.f32.xlu0 %v1058
    %v1060 = vpop.xlane.xlu0 %1059
    %v1061 = vsel %vm596, %v1022, -inf
    %1062 = vmax.xlane.f32.xlu0 %v1061
    %v1063 = vpop.xlane.xlu0 %1062
    %v1064 = vsel %vm596, %v1027, -inf
    %1065 = vmax.xlane.f32.xlu0 %v1064
    %v1066 = vpop.xlane.xlu0 %1065
    %v1067 = vsel %vm596, %v1032, -inf
    %1068 = vmax.xlane.f32.xlu0 %v1067
    %v1069 = vpop.xlane.xlu0 %1068
    %v1070 = vsel %vm596, %v1037, -inf
    %1071 = vmax.xlane.f32.xlu0 %v1070
    %v1072 = vpop.xlane.xlu0 %1071
    %v1073 = vsel %vm596, %v1042, -inf
    %1074 = vmax.xlane.f32.xlu0 %v1073
    %v1075 = vpop.xlane.xlu0 %1074
    %v1076 = vsel %vm596, %v1047, -inf
    %1077 = vmax.xlane.f32.xlu0 %v1076
    %v1078 = vpop.xlane.xlu0 %1077
    %v1079 = vsel %vm621, %v1052, -inf
    %1080 = vmax.xlane.f32.xlu0 %v1079
    %v1081 = vpop.xlane.xlu0 %1080
    %v1082 = vsub.f32 %v1012, %v1057
    %v1083 = vsub.f32 %v1017, %v1060
    %v1084 = vsub.f32 %v1022, %v1063
    %v1085 = vsub.f32 %v1027, %v1066
    %v1086 = vsub.f32 %v1032, %v1069
    %v1087 = vsub.f32 %v1037, %v1072
    %v1088 = vsub.f32 %v1042, %v1075
    %v1089 = vsub.f32 %v1047, %v1078
    %v1090 = vsub.f32 %v1052, %v1081
    %v1091 = vmul.f32 %v1082, 1.442695
    %v1092 = vpow.pop %v1091
    %v1093 = vmul.f32 %v1083, 1.442695
    %v1094 = vpow.pop %v1093
    %v1095 = vmul.f32 %v1084, 1.442695
    %v1096 = vpow.pop %v1095
    %v1097 = vmul.f32 %v1085, 1.442695
    %v1098 = vpow.pop %v1097
    %v1099 = vmul.f32 %v1086, 1.442695
    %v1100 = vpow.pop %v1099
    %v1101 = vmul.f32 %v1087, 1.442695
    %v1102 = vpow.pop %v1101
    %v1103 = vmul.f32 %v1088, 1.442695
    %v1104 = vpow.pop %v1103
    %v1105 = vmul.f32 %v1089, 1.442695
    %v1106 = vpow.pop %v1105
    %v1107 = vmul.f32 %v1090, 1.442695
    %v1108 = vpow.pop %v1107
    %v1109 = vsel %vm596, %v1092, 0.0
    %1110 = vadd.xlane.f32.xlu0 %v1109
    %v1111 = vpop.xlane.xlu0 %1110
    %v1112 = vsel %vm596, %v1094, 0.0
    %1113 = vadd.xlane.f32.xlu0 %v1112
    %v1114 = vpop.xlane.xlu0 %1113
    %v1115 = vsel %vm596, %v1096, 0.0
    %1116 = vadd.xlane.f32.xlu0 %v1115
    %v1117 = vpop.xlane.xlu0 %1116
    %v1118 = vsel %vm596, %v1098, 0.0
    %1119 = vadd.xlane.f32.xlu0 %v1118
    %v1120 = vpop.xlane.xlu0 %1119
    %v1121 = vsel %vm596, %v1100, 0.0
    %1122 = vadd.xlane.f32.xlu0 %v1121
    %v1123 = vpop.xlane.xlu0 %1122
    %v1124 = vsel %vm596, %v1102, 0.0
    %1125 = vadd.xlane.f32.xlu0 %v1124
    %v1126 = vpop.xlane.xlu0 %1125
    %v1127 = vsel %vm596, %v1104, 0.0
    %1128 = vadd.xlane.f32.xlu0 %v1127
    %v1129 = vpop.xlane.xlu0 %1128
    %v1130 = vsel %vm596, %v1106, 0.0
    %1131 = vadd.xlane.f32.xlu0 %v1130
    %v1132 = vpop.xlane.xlu0 %1131
    %v1133 = vsel %vm621, %v1108, 0.0
    %1134 = vadd.xlane.f32.xlu0 %v1133
    %v1135 = vpop.xlane.xlu0 %1134
    %v1136 = vrcp.pop %v1111
    %v1137 = vmul.f32 %v1092, %v1136
    %v1138 = vrcp.pop %v1114
    %v1139 = vmul.f32 %v1094, %v1138
    %v1140 = vrcp.pop %v1117
    %v1141 = vmul.f32 %v1096, %v1140
    %v1142 = vrcp.pop %v1120
    %v1143 = vmul.f32 %v1098, %v1142
    %v1144 = vrcp.pop %v1123
    %v1145 = vmul.f32 %v1100, %v1144
    %v1146 = vrcp.pop %v1126
    %v1147 = vmul.f32 %v1102, %v1146
    %v1148 = vrcp.pop %v1129
    %v1149 = vmul.f32 %v1104, %v1148
    %v1150 = vrcp.pop %v1132
    %v1151 = vmul.f32 %v1106, %v1150
    %v1152 = vrcp.pop %v1135
    %v1153 = vmul.f32 %v1108, %v1152
    %1154 = vrot.lane.b32.xlu0 %v307, 56
    %v1155 = vpop.permute.xlu0 %1154
    %1156 = vrot.lane.b32.xlu0 %v312, 56
    %v1157 = vpop.permute.xlu0 %1156
    %1158 = vrot.lane.b32.xlu0 %v317, 56
    %v1159 = vpop.permute.xlu0 %1158
    %1160 = vrot.lane.b32.xlu0 %v322, 56
    %v1161 = vpop.permute.xlu0 %1160
    %1162 = vrot.lane.b32.xlu0 %v327, 56
    %v1163 = vpop.permute.xlu0 %1162
    %1164 = vrot.lane.b32.xlu0 %v332, 56
    %v1165 = vpop.permute.xlu0 %1164
    %1166 = vrot.lane.b32.xlu0 %v337, 56
    %v1167 = vpop.permute.xlu0 %1166
    %1168 = vrot.lane.b32.xlu0 %v342, 56
    %v1169 = vpop.permute.xlu0 %1168
    %1170 = vrot.lane.b32.xlu0 %v347, 56
    %v1171 = vpop.permute.xlu0 %1170
    %v1181 = vsel %vm596, %v1137, 0
    %v1184 = vsel %vm596, %v1139, 0
    %v1187 = vsel %vm596, %v1141, 0
    %v1190 = vsel %vm596, %v1143, 0
    %v1193 = vsel %vm596, %v1145, 0
    %v1196 = vsel %vm596, %v1147, 0
    %v1199 = vsel %vm596, %v1149, 0
    %v1202 = vsel %vm596, %v1151, 0
    %v1205 = vsel %vm596, %v1153, 0
    %v1207 = vsel %vm750, %v1171, 0
    %1209 = vmatprep.subr.mxu0 0.0
    %1210 = vmatpush1.msra.mxu0 %v1155
    %1211 = vmatprep.subr.mxu0 0.0
    %1212 = vmatpush1.msra.mxu0 %v1157
    %1213 = vmatprep.subr.mxu0 0.0
    %1214 = vmatpush1.msra.mxu0 %v1159
    %1215 = vmatprep.subr.mxu0 0.0
    %1216 = vmatpush1.msra.mxu0 %v1161
    %1217 = vmatprep.subr.mxu0 0.0
    %1218 = vmatpush1.msra.mxu0 %v1163
    %1219 = vmatprep.subr.mxu0 0.0
    %1220 = vmatpush1.msra.mxu0 %v1165
    %1221 = vmatprep.subr.mxu0 0.0
    %1222 = vmatpush1.msra.mxu0 %v1167
    %1223 = vmatprep.subr.mxu0 0.0
    %1224 = vmatpush1.msra.mxu0 %v1169
    %1225 = vmatprep.subr.mxu0 0.0
    %1226 = vmatpush1.msra.mxu0 %v1207
    %1227 = vmatprep.subr.mxu0 0.0
    %1228 = vmatpush1.msra.mxu0 0.0
    %1229 = vmatprep.subr.mxu0 0.0
    %1230 = vmatpush1.msra.mxu0 0.0
    %1231 = vmatprep.subr.mxu0 0.0
    %1232 = vmatpush1.msra.mxu0 0.0
    %1233 = vmatprep.subr.mxu0 0.0
    %1234 = vmatpush1.msra.mxu0 0.0
    %1235 = vmatprep.subr.mxu0 0.0
    %1236 = vmatpush1.msra.mxu0 0.0
    %1237 = vmatprep.subr.mxu0 0.0
    %1238 = vmatpush1.msra.mxu0 0.0
    %1239 = vmatprep.subr.mxu0 0.0
    %1240 = vmatpush1.msra.mxu0 0.0
    %1241 = vmatprep.subr.mxu0 0.0
    %1242 = vmatpush1.msra.mxu0 0.0
    %1243 = vmatprep.subr.mxu0 0.0
    %1244 = vmatpush1.msra.mxu0 0.0
    %1245 = vmatprep.subr.mxu0 0.0
    %1246 = vmatpush1.msra.mxu0 0.0
    %1247 = vmatprep.subr.mxu0 0.0
    %1248 = vmatpush1.msra.mxu0 0.0
    %1249 = vmatprep.subr.mxu0 0.0
    %1250 = vmatpush1.msra.mxu0 0.0
    %1251 = vmatprep.subr.mxu0 0.0
    %1252 = vmatpush1.msra.mxu0 0.0
    %1253 = vmatprep.subr.mxu0 0.0
    %1254 = vmatpush1.msra.mxu0 0.0
    %1255 = vmatprep.subr.mxu0 0.0
    %1256 = vmatpush1.msra.mxu0 0.0
    %1257 = vmatprep.subr.mxu0 0.0
    %1258 = vmatpush1.msra.mxu0 0.0
    %1259 = vmatprep.subr.mxu0 0.0
    %1260 = vmatpush1.msra.mxu0 0.0
    %1261 = vmatprep.subr.mxu0 0.0
    %1262 = vmatpush1.msra.mxu0 0.0
    %1263 = vmatprep.subr.mxu0 0.0
    %1264 = vmatpush1.msra.mxu0 0.0
    %1265 = vmatprep.subr.mxu0 0.0
    %1266 = vmatpush1.msra.mxu0 0.0
    %1267 = vmatprep.subr.mxu0 0.0
    %1268 = vmatpush1.msra.mxu0 0.0
    %1269 = vmatprep.subr.mxu0 0.0
    %1270 = vmatpush1.msra.mxu0 0.0
    %1271 = vmatprep.subr.mxu0 0.0
    %1272 = vmatpush1.msra.mxu0 0.0
    %1273 = vmatprep.mubr.f32.mxu0 0.0
    %1274 = vmatmul.mubr.f32.gmra.mrb[0].mxu0 %v1181
    %v1275 = vpop.f32.mrb[0].mxu0
    %v1276 = vadd.f32 0.0, %v1275
    %v1277 = vpop.f32.mrb[0].mxu0
    %1278 = vmatprep.mubr.f32.mxu0 0.0
    %1279 = vmatmul.mubr.f32.gmra.mrb[0].mxu0 %v1184
    %v1280 = vpop.f32.mrb[0].mxu0
    %v1281 = vadd.f32 0.0, %v1280
    %v1282 = vpop.f32.mrb[0].mxu0
    %1283 = vmatprep.mubr.f32.mxu0 0.0
    %1284 = vmatmul.mubr.f32.gmra.mrb[0].mxu0 %v1187
    %v1285 = vpop.f32.mrb[0].mxu0
    %v1286 = vadd.f32 0.0, %v1285
    %v1287 = vpop.f32.mrb[0].mxu0
    %1288 = vmatprep.mubr.f32.mxu0 0.0
    %1289 = vmatmul.mubr.f32.gmra.mrb[0].mxu0 %v1190
    %v1290 = vpop.f32.mrb[0].mxu0
    %v1291 = vadd.f32 0.0, %v1290
    %v1292 = vpop.f32.mrb[0].mxu0
    %1293 = vmatprep.mubr.f32.mxu0 0.0
    %1294 = vmatmul.mubr.f32.gmra.mrb[0].mxu0 %v1193
    %v1295 = vpop.f32.mrb[0].mxu0
    %v1296 = vadd.f32 0.0, %v1295
    %v1297 = vpop.f32.mrb[0].mxu0
    %1298 = vmatprep.mubr.f32.mxu0 0.0
    %1299 = vmatmul.mubr.f32.gmra.mrb[0].mxu0 %v1196
    %v1300 = vpop.f32.mrb[0].mxu0
    %v1301 = vadd.f32 0.0, %v1300
    %v1302 = vpop.f32.mrb[0].mxu0
    %1303 = vmatprep.mubr.f32.mxu0 0.0
    %1304 = vmatmul.mubr.f32.gmra.mrb[0].mxu0 %v1199
    %v1305 = vpop.f32.mrb[0].mxu0
    %v1306 = vadd.f32 0.0, %v1305
    %v1307 = vpop.f32.mrb[0].mxu0
    %1308 = vmatprep.mubr.f32.mxu0 0.0
    %1309 = vmatmul.mubr.f32.gmra.mrb[0].mxu0 %v1202
    %v1310 = vpop.f32.mrb[0].mxu0
    %v1311 = vadd.f32 0.0, %v1310
    %v1312 = vpop.f32.mrb[0].mxu0
    %1313 = vmatprep.mubr.f32.mxu0 0.0
    %1314 = vmatmul.mubr.f32.gmra.mrb[0].mxu0 %v1205
    %v1315 = vpop.f32.mrb[0].mxu0
    %v1316 = vadd.f32 0.0, %v1315
    %v1317 = vpop.f32.mrb[0].mxu0
    %1318 = vdwg.mxu0
    %1328 = vrot.lane.b32.xlu0 %v1276, 8
    %v1329 = vpop.permute.xlu0 %1328
    %1330 = vrot.lane.b32.xlu0 %v1281, 8
    %v1331 = vpop.permute.xlu0 %1330
    %1332 = vrot.lane.b32.xlu0 %v1286, 8
    %v1333 = vpop.permute.xlu0 %1332
    %1334 = vrot.lane.b32.xlu0 %v1291, 8
    %v1335 = vpop.permute.xlu0 %1334
    %1336 = vrot.lane.b32.xlu0 %v1296, 8
    %v1337 = vpop.permute.xlu0 %1336
    %1338 = vrot.lane.b32.xlu0 %v1301, 8
    %v1339 = vpop.permute.xlu0 %1338
    %1340 = vrot.lane.b32.xlu0 %v1306, 8
    %v1341 = vpop.permute.xlu0 %1340
    %1342 = vrot.lane.b32.xlu0 %v1311, 8
    %v1343 = vpop.permute.xlu0 %1342
    %1344 = vrot.lane.b32.xlu0 %v1316, 8
    %v1345 = vpop.permute.xlu0 %1344
    %vm1355 = vcmask 130112
    %1356 = vst.msk [vmem:[#allocation3] sm:$0xff] %vm1355, %v1329
    %1357 = vst.msk [vmem:[#allocation3 + $0x8] sm:$0xff] %vm1355, %v1331
    %1358 = vst.msk [vmem:[#allocation3 + $0x10] sm:$0xff] %vm1355, %v1333
    %1359 = vst.msk [vmem:[#allocation3 + $0x18] sm:$0xff] %vm1355, %v1335
    %1360 = vst.msk [vmem:[#allocation3 + $0x20] sm:$0xff] %vm1355, %v1337
    %1361 = vst.msk [vmem:[#allocation3 + $0x28] sm:$0xff] %vm1355, %v1339
    %1362 = vst.msk [vmem:[#allocation3 + $0x30] sm:$0xff] %vm1355, %v1341
    %1363 = vst.msk [vmem:[#allocation3 + $0x38] sm:$0xff] %vm1355, %v1343
    %vm1364 = vcmask 122944
    %1365 = vst.msk [vmem:[#allocation3 + $0x40] sm:$0x1] %vm1364, %v1345
    %1366 = vrot.lane.b32.xlu0 %v395, 112
    %v1367 = vpop.permute.xlu0 %1366
    %1368 = vrot.lane.b32.xlu0 %v396, 112
    %v1369 = vpop.permute.xlu0 %1368
    %1370 = vrot.lane.b32.xlu0 %v397, 112
    %v1371 = vpop.permute.xlu0 %1370
    %1372 = vrot.lane.b32.xlu0 %v398, 112
    %v1373 = vpop.permute.xlu0 %1372
    %1374 = vrot.lane.b32.xlu0 %v399, 112
    %v1375 = vpop.permute.xlu0 %1374
    %1376 = vrot.lane.b32.xlu0 %v400, 112
    %v1377 = vpop.permute.xlu0 %1376
    %1378 = vrot.lane.b32.xlu0 %v401, 112
    %v1379 = vpop.permute.xlu0 %1378
    %1380 = vrot.lane.b32.xlu0 %v402, 112
    %v1381 = vpop.permute.xlu0 %1380
    %1382 = vrot.lane.b32.xlu0 %v403, 112
    %v1383 = vpop.permute.xlu0 %1382
    %1384 = vrot.lane.b32.xlu0 %v307, 80
    %v1385 = vpop.permute.xlu0 %1384
    %1386 = vrot.lane.b32.xlu0 %v312, 80
    %v1387 = vpop.permute.xlu0 %1386
    %1388 = vrot.lane.b32.xlu0 %v317, 80
    %v1389 = vpop.permute.xlu0 %1388
    %1390 = vrot.lane.b32.xlu0 %v322, 80
    %v1391 = vpop.permute.xlu0 %1390
    %1392 = vrot.lane.b32.xlu0 %v327, 80
    %v1393 = vpop.permute.xlu0 %1392
    %1394 = vrot.lane.b32.xlu0 %v332, 80
    %v1395 = vpop.permute.xlu0 %1394
    %1396 = vrot.lane.b32.xlu0 %v337, 80
    %v1397 = vpop.permute.xlu0 %1396
    %1398 = vrot.lane.b32.xlu0 %v342, 80
    %v1399 = vpop.permute.xlu0 %1398
    %1400 = vrot.lane.b32.xlu0 %v347, 80
    %v1401 = vpop.permute.xlu0 %1400
    %v1402 = vsel %vm440, %v1367, 0
    %v1404 = vsel %vm440, %v1369, 0
    %v1406 = vsel %vm440, %v1371, 0
    %v1408 = vsel %vm440, %v1373, 0
    %v1410 = vsel %vm440, %v1375, 0
    %v1412 = vsel %vm440, %v1377, 0
    %v1414 = vsel %vm440, %v1379, 0
    %v1416 = vsel %vm440, %v1381, 0
    %v1418 = vsel %vm440, %v1383, 0
    %v1420 = vsel %vm440, %v1385, 0
    %v1422 = vsel %vm440, %v1387, 0
    %v1424 = vsel %vm440, %v1389, 0
    %v1426 = vsel %vm440, %v1391, 0
    %v1428 = vsel %vm440, %v1393, 0
    %v1430 = vsel %vm440, %v1395, 0
    %v1432 = vsel %vm440, %v1397, 0
    %v1434 = vsel %vm440, %v1399, 0
    %v1436 = vsel %vm440, %v1401, 0
    %1438 = vmatprep.subr.mxu0 0.0
    %1439 = vmatpush1.xpose.msra.mxu0 %v1420
    %1440 = vmatprep.subr.mxu0 0.0
    %1441 = vmatpush1.xpose.msra.mxu0 %v1422
    %1442 = vmatprep.subr.mxu0 0.0
    %1443 = vmatpush1.xpose.msra.mxu0 %v1424
    %1444 = vmatprep.subr.mxu0 0.0
    %1445 = vmatpush1.xpose.msra.mxu0 %v1426
    %1446 = vmatprep.subr.mxu0 0.0
    %1447 = vmatpush1.xpose.msra.mxu0 %v1428
    %1448 = vmatprep.subr.mxu0 0.0
    %1449 = vmatpush1.xpose.msra.mxu0 %v1430
    %1450 = vmatprep.subr.mxu0 0.0
    %1451 = vmatpush1.xpose.msra.mxu0 %v1432
    %1452 = vmatprep.subr.mxu0 0.0
    %1453 = vmatpush1.xpose.msra.mxu0 %v1434
    %1454 = vmatprep.subr.mxu0 0.0
    %1455 = vmatpush1.xpose.msra.mxu0 %v1436
    %1456 = vmatprep.subr.mxu0 0.0
    %1457 = vmatpush1.xpose.msra.mxu0 0.0
    %1458 = vmatprep.subr.mxu0 0.0
    %1459 = vmatpush1.xpose.msra.mxu0 0.0
    %1460 = vmatprep.subr.mxu0 0.0
    %1461 = vmatpush1.xpose.msra.mxu0 0.0
    %1462 = vmatprep.subr.mxu0 0.0
    %1463 = vmatpush1.xpose.msra.mxu0 0.0
    %1464 = vmatprep.subr.mxu0 0.0
    %1465 = vmatpush1.xpose.msra.mxu0 0.0
    %1466 = vmatprep.subr.mxu0 0.0
    %1467 = vmatpush1.xpose.msra.mxu0 0.0
    %1468 = vmatprep.subr.mxu0 0.0
    %1469 = vmatpush1.xpose.msra.mxu0 0.0
    %1470 = vmatprep.subr.mxu0 0.0
    %1471 = vmatpush1.xpose.msra.mxu0 0.0
    %1472 = vmatprep.subr.mxu0 0.0
    %1473 = vmatpush1.xpose.msra.mxu0 0.0
    %1474 = vmatprep.subr.mxu0 0.0
    %1475 = vmatpush1.xpose.msra.mxu0 0.0
    %1476 = vmatprep.subr.mxu0 0.0
    %1477 = vmatpush1.xpose.msra.mxu0 0.0
    %1478 = vmatprep.subr.mxu0 0.0
    %1479 = vmatpush1.xpose.msra.mxu0 0.0
    %1480 = vmatprep.subr.mxu0 0.0
    %1481 = vmatpush1.xpose.msra.mxu0 0.0
    %1482 = vmatprep.subr.mxu0 0.0
    %1483 = vmatpush1.xpose.msra.mxu0 0.0
    %1484 = vmatprep.subr.mxu0 0.0
    %1485 = vmatpush1.xpose.msra.mxu0 0.0
    %1486 = vmatprep.subr.mxu0 0.0
    %1487 = vmatpush1.xpose.msra.mxu0 0.0
    %1488 = vmatprep.subr.mxu0 0.0
    %1489 = vmatpush1.xpose.msra.mxu0 0.0
    %1490 = vmatprep.subr.mxu0 0.0
    %1491 = vmatpush1.xpose.msra.mxu0 0.0
    %1492 = vmatprep.subr.mxu0 0.0
    %1493 = vmatpush1.xpose.msra.mxu0 0.0
    %1494 = vmatprep.subr.mxu0 0.0
    %1495 = vmatpush1.xpose.msra.mxu0 0.0
    %1496 = vmatprep.subr.mxu0 0.0
    %1497 = vmatpush1.xpose.msra.mxu0 0.0
    %1498 = vmatprep.subr.mxu0 0.0
    %1499 = vmatpush1.xpose.msra.mxu0 0.0
    %1500 = vmatprep.subr.mxu0 0.0
    %1501 = vmatpush1.xpose.msra.mxu0 0.0
    %1502 = vmatprep.mubr.f32.mxu0 0.0
    %1503 = vmatmul.mubr.f32.gmra.mrb[0].mxu0 %v1402
    %v1504 = vpop.f32.mrb[0].mxu0
    %v1505 = vadd.f32 0.0, %v1504
    %v1506 = vpop.f32.mrb[0].mxu0
    %1507 = vmatprep.mubr.f32.mxu0 0.0
    %1508 = vmatmul.mubr.f32.gmra.mrb[0].mxu0 %v1404
    %v1509 = vpop.f32.mrb[0].mxu0
    %v1510 = vadd.f32 0.0, %v1509
    %v1511 = vpop.f32.mrb[0].mxu0
    %1512 = vmatprep.mubr.f32.mxu0 0.0
    %1513 = vmatmul.mubr.f32.gmra.mrb[0].mxu0 %v1406
    %v1514 = vpop.f32.mrb[0].mxu0
    %v1515 = vadd.f32 0.0, %v1514
    %v1516 = vpop.f32.mrb[0].mxu0
    %1517 = vmatprep.mubr.f32.mxu0 0.0
    %1518 = vmatmul.mubr.f32.gmra.mrb[0].mxu0 %v1408
    %v1519 = vpop.f32.mrb[0].mxu0
    %v1520 = vadd.f32 0.0, %v1519
    %v1521 = vpop.f32.mrb[0].mxu0
    %1522 = vmatprep.mubr.f32.mxu0 0.0
    %1523 = vmatmul.mubr.f32.gmra.mrb[0].mxu0 %v1410
    %v1524 = vpop.f32.mrb[0].mxu0
    %v1525 = vadd.f32 0.0, %v1524
    %v1526 = vpop.f32.mrb[0].mxu0
    %1527 = vmatprep.mubr.f32.mxu0 0.0
    %1528 = vmatmul.mubr.f32.gmra.mrb[0].mxu0 %v1412
    %v1529 = vpop.f32.mrb[0].mxu0
    %v1530 = vadd.f32 0.0, %v1529
    %v1531 = vpop.f32.mrb[0].mxu0
    %1532 = vmatprep.mubr.f32.mxu0 0.0
    %1533 = vmatmul.mubr.f32.gmra.mrb[0].mxu0 %v1414
    %v1534 = vpop.f32.mrb[0].mxu0
    %v1535 = vadd.f32 0.0, %v1534
    %v1536 = vpop.f32.mrb[0].mxu0
    %1537 = vmatprep.mubr.f32.mxu0 0.0
    %1538 = vmatmul.mubr.f32.gmra.mrb[0].mxu0 %v1416
    %v1539 = vpop.f32.mrb[0].mxu0
    %v1540 = vadd.f32 0.0, %v1539
    %v1541 = vpop.f32.mrb[0].mxu0
    %1542 = vmatprep.mubr.f32.mxu0 0.0
    %1543 = vmatmul.mubr.f32.gmra.mrb[0].mxu0 %v1418
    %v1544 = vpop.f32.mrb[0].mxu0
    %v1545 = vadd.f32 0.0, %v1544
    %v1546 = vpop.f32.mrb[0].mxu0
    %1547 = vdwg.mxu0
    %v1548 = vsel %vm596, %v1505, -inf
    %1549 = vmax.xlane.f32.xlu0 %v1548
    %v1550 = vpop.xlane.xlu0 %1549
    %v1551 = vsel %vm596, %v1510, -inf
    %1552 = vmax.xlane.f32.xlu0 %v1551
    %v1553 = vpop.xlane.xlu0 %1552
    %v1554 = vsel %vm596, %v1515, -inf
    %1555 = vmax.xlane.f32.xlu0 %v1554
    %v1556 = vpop.xlane.xlu0 %1555
    %v1557 = vsel %vm596, %v1520, -inf
    %1558 = vmax.xlane.f32.xlu0 %v1557
    %v1559 = vpop.xlane.xlu0 %1558
    %v1560 = vsel %vm596, %v1525, -inf
    %1561 = vmax.xlane.f32.xlu0 %v1560
    %v1562 = vpop.xlane.xlu0 %1561
    %v1563 = vsel %vm596, %v1530, -inf
    %1564 = vmax.xlane.f32.xlu0 %v1563
    %v1565 = vpop.xlane.xlu0 %1564
    %v1566 = vsel %vm596, %v1535, -inf
    %1567 = vmax.xlane.f32.xlu0 %v1566
    %v1568 = vpop.xlane.xlu0 %1567
    %v1569 = vsel %vm596, %v1540, -inf
    %1570 = vmax.xlane.f32.xlu0 %v1569
    %v1571 = vpop.xlane.xlu0 %1570
    %v1572 = vsel %vm621, %v1545, -inf
    %1573 = vmax.xlane.f32.xlu0 %v1572
    %v1574 = vpop.xlane.xlu0 %1573
    %v1575 = vsub.f32 %v1505, %v1550
    %v1576 = vsub.f32 %v1510, %v1553
    %v1577 = vsub.f32 %v1515, %v1556
    %v1578 = vsub.f32 %v1520, %v1559
    %v1579 = vsub.f32 %v1525, %v1562
    %v1580 = vsub.f32 %v1530, %v1565
    %v1581 = vsub.f32 %v1535, %v1568
    %v1582 = vsub.f32 %v1540, %v1571
    %v1583 = vsub.f32 %v1545, %v1574
    %v1584 = vmul.f32 %v1575, 1.442695
    %v1585 = vpow.pop %v1584
    %v1586 = vmul.f32 %v1576, 1.442695
    %v1587 = vpow.pop %v1586
    %v1588 = vmul.f32 %v1577, 1.442695
    %v1589 = vpow.pop %v1588
    %v1590 = vmul.f32 %v1578, 1.442695
    %v1591 = vpow.pop %v1590
    %v1592 = vmul.f32 %v1579, 1.442695
    %v1593 = vpow.pop %v1592
    %v1594 = vmul.f32 %v1580, 1.442695
    %v1595 = vpow.pop %v1594
    %v1596 = vmul.f32 %v1581, 1.442695
    %v1597 = vpow.pop %v1596
    %v1598 = vmul.f32 %v1582, 1.442695
    %v1599 = vpow.pop %v1598
    %v1600 = vmul.f32 %v1583, 1.442695
    %v1601 = vpow.pop %v1600
    %v1602 = vsel %vm596, %v1585, 0.0
    %1603 = vadd.xlane.f32.xlu0 %v1602
    %v1604 = vpop.xlane.xlu0 %1603
    %v1605 = vsel %vm596, %v1587, 0.0
    %1606 = vadd.xlane.f32.xlu0 %v1605
    %v1607 = vpop.xlane.xlu0 %1606
    %v1608 = vsel %vm596, %v1589, 0.0
    %1609 = vadd.xlane.f32.xlu0 %v1608
    %v1610 = vpop.xlane.xlu0 %1609
    %v1611 = vsel %vm596, %v1591, 0.0
    %1612 = vadd.xlane.f32.xlu0 %v1611
    %v1613 = vpop.xlane.xlu0 %1612
    %v1614 = vsel %vm596, %v1593, 0.0
    %1615 = vadd.xlane.f32.xlu0 %v1614
    %v1616 = vpop.xlane.xlu0 %1615
    %v1617 = vsel %vm596, %v1595, 0.0
    %1618 = vadd.xlane.f32.xlu0 %v1617
    %v1619 = vpop.xlane.xlu0 %1618
    %v1620 = vsel %vm596, %v1597, 0.0
    %1621 = vadd.xlane.f32.xlu0 %v1620
    %v1622 = vpop.xlane.xlu0 %1621
    %v1623 = vsel %vm596, %v1599, 0.0
    %1624 = vadd.xlane.f32.xlu0 %v1623
    %v1625 = vpop.xlane.xlu0 %1624
    %v1626 = vsel %vm621, %v1601, 0.0
    %1627 = vadd.xlane.f32.xlu0 %v1626
    %v1628 = vpop.xlane.xlu0 %1627
    %v1629 = vrcp.pop %v1604
    %v1630 = vmul.f32 %v1585, %v1629
    %v1631 = vrcp.pop %v1607
    %v1632 = vmul.f32 %v1587, %v1631
    %v1633 = vrcp.pop %v1610
    %v1634 = vmul.f32 %v1589, %v1633
    %v1635 = vrcp.pop %v1613
    %v1636 = vmul.f32 %v1591, %v1635
    %v1637 = vrcp.pop %v1616
    %v1638 = vmul.f32 %v1593, %v1637
    %v1639 = vrcp.pop %v1619
    %v1640 = vmul.f32 %v1595, %v1639
    %v1641 = vrcp.pop %v1622
    %v1642 = vmul.f32 %v1597, %v1641
    %v1643 = vrcp.pop %v1625
    %v1644 = vmul.f32 %v1599, %v1643
    %v1645 = vrcp.pop %v1628
    %v1646 = vmul.f32 %v1601, %v1645
    %1647 = vrot.lane.b32.xlu0 %v307, 48
    %v1648 = vpop.permute.xlu0 %1647
    %1649 = vrot.lane.b32.xlu0 %v312, 48
    %v1650 = vpop.permute.xlu0 %1649
    %1651 = vrot.lane.b32.xlu0 %v317, 48
    %v1652 = vpop.permute.xlu0 %1651
    %1653 = vrot.lane.b32.xlu0 %v322, 48
    %v1654 = vpop.permute.xlu0 %1653
    %1655 = vrot.lane.b32.xlu0 %v327, 48
    %v1656 = vpop.permute.xlu0 %1655
    %1657 = vrot.lane.b32.xlu0 %v332, 48
    %v1658 = vpop.permute.xlu0 %1657
    %1659 = vrot.lane.b32.xlu0 %v337, 48
    %v1660 = vpop.permute.xlu0 %1659
    %1661 = vrot.lane.b32.xlu0 %v342, 48
    %v1662 = vpop.permute.xlu0 %1661
    %1663 = vrot.lane.b32.xlu0 %v347, 48
    %v1664 = vpop.permute.xlu0 %1663
    %v1674 = vsel %vm596, %v1630, 0
    %v1677 = vsel %vm596, %v1632, 0
    %v1680 = vsel %vm596, %v1634, 0
    %v1683 = vsel %vm596, %v1636, 0
    %v1686 = vsel %vm596, %v1638, 0
    %v1689 = vsel %vm596, %v1640, 0
    %v1692 = vsel %vm596, %v1642, 0
    %v1695 = vsel %vm596, %v1644, 0
    %v1698 = vsel %vm596, %v1646, 0
    %v1700 = vsel %vm750, %v1664, 0
    %1702 = vmatprep.subr.mxu0 0.0
    %1703 = vmatpush1.msra.mxu0 %v1648
    %1704 = vmatprep.subr.mxu0 0.0
    %1705 = vmatpush1.msra.mxu0 %v1650
    %1706 = vmatprep.subr.mxu0 0.0
    %1707 = vmatpush1.msra.mxu0 %v1652
    %1708 = vmatprep.subr.mxu0 0.0
    %1709 = vmatpush1.msra.mxu0 %v1654
    %1710 = vmatprep.subr.mxu0 0.0
    %1711 = vmatpush1.msra.mxu0 %v1656
    %1712 = vmatprep.subr.mxu0 0.0
    %1713 = vmatpush1.msra.mxu0 %v1658
    %1714 = vmatprep.subr.mxu0 0.0
    %1715 = vmatpush1.msra.mxu0 %v1660
    %1716 = vmatprep.subr.mxu0 0.0
    %1717 = vmatpush1.msra.mxu0 %v1662
    %1718 = vmatprep.subr.mxu0 0.0
    %1719 = vmatpush1.msra.mxu0 %v1700
    %1720 = vmatprep.subr.mxu0 0.0
    %1721 = vmatpush1.msra.mxu0 0.0
    %1722 = vmatprep.subr.mxu0 0.0
    %1723 = vmatpush1.msra.mxu0 0.0
    %1724 = vmatprep.subr.mxu0 0.0
    %1725 = vmatpush1.msra.mxu0 0.0
    %1726 = vmatprep.subr.mxu0 0.0
    %1727 = vmatpush1.msra.mxu0 0.0
    %1728 = vmatprep.subr.mxu0 0.0
    %1729 = vmatpush1.msra.mxu0 0.0
    %1730 = vmatprep.subr.mxu0 0.0
    %1731 = vmatpush1.msra.mxu0 0.0
    %1732 = vmatprep.subr.mxu0 0.0
    %1733 = vmatpush1.msra.mxu0 0.0
    %1734 = vmatprep.subr.mxu0 0.0
    %1735 = vmatpush1.msra.mxu0 0.0
    %1736 = vmatprep.subr.mxu0 0.0
    %1737 = vmatpush1.msra.mxu0 0.0
    %1738 = vmatprep.subr.mxu0 0.0
    %1739 = vmatpush1.msra.mxu0 0.0
    %1740 = vmatprep.subr.mxu0 0.0
    %1741 = vmatpush1.msra.mxu0 0.0
    %1742 = vmatprep.subr.mxu0 0.0
    %1743 = vmatpush1.msra.mxu0 0.0
    %1744 = vmatprep.subr.mxu0 0.0
    %1745 = vmatpush1.msra.mxu0 0.0
    %1746 = vmatprep.subr.mxu0 0.0
    %1747 = vmatpush1.msra.mxu0 0.0
    %1748 = vmatprep.subr.mxu0 0.0
    %1749 = vmatpush1.msra.mxu0 0.0
    %1750 = vmatprep.subr.mxu0 0.0
    %1751 = vmatpush1.msra.mxu0 0.0
    %1752 = vmatprep.subr.mxu0 0.0
    %1753 = vmatpush1.msra.mxu0 0.0
    %1754 = vmatprep.subr.mxu0 0.0
    %1755 = vmatpush1.msra.mxu0 0.0
    %1756 = vmatprep.subr.mxu0 0.0
    %1757 = vmatpush1.msra.mxu0 0.0
    %1758 = vmatprep.subr.mxu0 0.0
    %1759 = vmatpush1.msra.mxu0 0.0
    %1760 = vmatprep.subr.mxu0 0.0
    %1761 = vmatpush1.msra.mxu0 0.0
    %1762 = vmatprep.subr.mxu0 0.0
    %1763 = vmatpush1.msra.mxu0 0.0
    %1764 = vmatprep.subr.mxu0 0.0
    %1765 = vmatpush1.msra.mxu0 0.0
    %1766 = vmatprep.mubr.f32.mxu0 0.0
    %1767 = vmatmul.mubr.f32.gmra.mrb[0].mxu0 %v1674
    %v1768 = vpop.f32.mrb[0].mxu0
    %v1769 = vadd.f32 0.0, %v1768
    %v1770 = vpop.f32.mrb[0].mxu0
    %1771 = vmatprep.mubr.f32.mxu0 0.0
    %1772 = vmatmul.mubr.f32.gmra.mrb[0].mxu0 %v1677
    %v1773 = vpop.f32.mrb[0].mxu0
    %v1774 = vadd.f32 0.0, %v1773
    %v1775 = vpop.f32.mrb[0].mxu0
    %1776 = vmatprep.mubr.f32.mxu0 0.0
    %1777 = vmatmul.mubr.f32.gmra.mrb[0].mxu0 %v1680
    %v1778 = vpop.f32.mrb[0].mxu0
    %v1779 = vadd.f32 0.0, %v1778
    %v1780 = vpop.f32.mrb[0].mxu0
    %1781 = vmatprep.mubr.f32.mxu0 0.0
    %1782 = vmatmul.mubr.f32.gmra.mrb[0].mxu0 %v1683
    %v1783 = vpop.f32.mrb[0].mxu0
    %v1784 = vadd.f32 0.0, %v1783
    %v1785 = vpop.f32.mrb[0].mxu0
    %1786 = vmatprep.mubr.f32.mxu0 0.0
    %1787 = vmatmul.mubr.f32.gmra.mrb[0].mxu0 %v1686
    %v1788 = vpop.f32.mrb[0].mxu0
    %v1789 = vadd.f32 0.0, %v1788
    %v1790 = vpop.f32.mrb[0].mxu0
    %1791 = vmatprep.mubr.f32.mxu0 0.0
    %1792 = vmatmul.mubr.f32.gmra.mrb[0].mxu0 %v1689
    %v1793 = vpop.f32.mrb[0].mxu0
    %v1794 = vadd.f32 0.0, %v1793
    %v1795 = vpop.f32.mrb[0].mxu0
    %1796 = vmatprep.mubr.f32.mxu0 0.0
    %1797 = vmatmul.mubr.f32.gmra.mrb[0].mxu0 %v1692
    %v1798 = vpop.f32.mrb[0].mxu0
    %v1799 = vadd.f32 0.0, %v1798
    %v1800 = vpop.f32.mrb[0].mxu0
    %1801 = vmatprep.mubr.f32.mxu0 0.0
    %1802 = vmatmul.mubr.f32.gmra.mrb[0].mxu0 %v1695
    %v1803 = vpop.f32.mrb[0].mxu0
    %v1804 = vadd.f32 0.0, %v1803
    %v1805 = vpop.f32.mrb[0].mxu0
    %1806 = vmatprep.mubr.f32.mxu0 0.0
    %1807 = vmatmul.mubr.f32.gmra.mrb[0].mxu0 %v1698
    %v1808 = vpop.f32.mrb[0].mxu0
    %v1809 = vadd.f32 0.0, %v1808
    %v1810 = vpop.f32.mrb[0].mxu0
    %1811 = vdwg.mxu0
    %1821 = vrot.lane.b32.xlu0 %v1769, 16
    %v1822 = vpop.permute.xlu0 %1821
    %1823 = vrot.lane.b32.xlu0 %v1774, 16
    %v1824 = vpop.permute.xlu0 %1823
    %1825 = vrot.lane.b32.xlu0 %v1779, 16
    %v1826 = vpop.permute.xlu0 %1825
    %1827 = vrot.lane.b32.xlu0 %v1784, 16
    %v1828 = vpop.permute.xlu0 %1827
    %1829 = vrot.lane.b32.xlu0 %v1789, 16
    %v1830 = vpop.permute.xlu0 %1829
    %1831 = vrot.lane.b32.xlu0 %v1794, 16
    %v1832 = vpop.permute.xlu0 %1831
    %1833 = vrot.lane.b32.xlu0 %v1799, 16
    %v1834 = vpop.permute.xlu0 %1833
    %1835 = vrot.lane.b32.xlu0 %v1804, 16
    %v1836 = vpop.permute.xlu0 %1835
    %1837 = vrot.lane.b32.xlu0 %v1809, 16
    %v1838 = vpop.permute.xlu0 %1837
    %vm1848 = vcmask 195712
    %1849 = vst.msk [vmem:[#allocation3] sm:$0xff] %vm1848, %v1822
    %1850 = vst.msk [vmem:[#allocation3 + $0x8] sm:$0xff] %vm1848, %v1824
    %1851 = vst.msk [vmem:[#allocation3 + $0x10] sm:$0xff] %vm1848, %v1826
    %1852 = vst.msk [vmem:[#allocation3 + $0x18] sm:$0xff] %vm1848, %v1828
    %1853 = vst.msk [vmem:[#allocation3 + $0x20] sm:$0xff] %vm1848, %v1830
    %1854 = vst.msk [vmem:[#allocation3 + $0x28] sm:$0xff] %vm1848, %v1832
    %1855 = vst.msk [vmem:[#allocation3 + $0x30] sm:$0xff] %vm1848, %v1834
    %1856 = vst.msk [vmem:[#allocation3 + $0x38] sm:$0xff] %vm1848, %v1836
    %vm1857 = vcmask 188544
    %1858 = vst.msk [vmem:[#allocation3 + $0x40] sm:$0x1] %vm1857, %v1838
    %1859 = vrot.lane.b32.xlu0 %v395, 104
    %v1860 = vpop.permute.xlu0 %1859
    %1861 = vrot.lane.b32.xlu0 %v396, 104
    %v1862 = vpop.permute.xlu0 %1861
    %1863 = vrot.lane.b32.xlu0 %v397, 104
    %v1864 = vpop.permute.xlu0 %1863
    %1865 = vrot.lane.b32.xlu0 %v398, 104
    %v1866 = vpop.permute.xlu0 %1865
    %1867 = vrot.lane.b32.xlu0 %v399, 104
    %v1868 = vpop.permute.xlu0 %1867
    %1869 = vrot.lane.b32.xlu0 %v400, 104
    %v1870 = vpop.permute.xlu0 %1869
    %1871 = vrot.lane.b32.xlu0 %v401, 104
    %v1872 = vpop.permute.xlu0 %1871
    %1873 = vrot.lane.b32.xlu0 %v402, 104
    %v1874 = vpop.permute.xlu0 %1873
    %1875 = vrot.lane.b32.xlu0 %v403, 104
    %v1876 = vpop.permute.xlu0 %1875
    %1877 = vrot.lane.b32.xlu0 %v307, 72
    %v1878 = vpop.permute.xlu0 %1877
    %1879 = vrot.lane.b32.xlu0 %v312, 72
    %v1880 = vpop.permute.xlu0 %1879
    %1881 = vrot.lane.b32.xlu0 %v317, 72
    %v1882 = vpop.permute.xlu0 %1881
    %1883 = vrot.lane.b32.xlu0 %v322, 72
    %v1884 = vpop.permute.xlu0 %1883
    %1885 = vrot.lane.b32.xlu0 %v327, 72
    %v1886 = vpop.permute.xlu0 %1885
    %1887 = vrot.lane.b32.xlu0 %v332, 72
    %v1888 = vpop.permute.xlu0 %1887
    %1889 = vrot.lane.b32.xlu0 %v337, 72
    %v1890 = vpop.permute.xlu0 %1889
    %1891 = vrot.lane.b32.xlu0 %v342, 72
    %v1892 = vpop.permute.xlu0 %1891
    %1893 = vrot.lane.b32.xlu0 %v347, 72
    %v1894 = vpop.permute.xlu0 %1893
    %v1895 = vsel %vm440, %v1860, 0
    %v1897 = vsel %vm440, %v1862, 0
    %v1899 = vsel %vm440, %v1864, 0
    %v1901 = vsel %vm440, %v1866, 0
    %v1903 = vsel %vm440, %v1868, 0
    %v1905 = vsel %vm440, %v1870, 0
    %v1907 = vsel %vm440, %v1872, 0
    %v1909 = vsel %vm440, %v1874, 0
    %v1911 = vsel %vm440, %v1876, 0
    %v1913 = vsel %vm440, %v1878, 0
    %v1915 = vsel %vm440, %v1880, 0
    %v1917 = vsel %vm440, %v1882, 0
    %v1919 = vsel %vm440, %v1884, 0
    %v1921 = vsel %vm440, %v1886, 0
    %v1923 = vsel %vm440, %v1888, 0
    %v1925 = vsel %vm440, %v1890, 0
    %v1927 = vsel %vm440, %v1892, 0
    %v1929 = vsel %vm440, %v1894, 0
    %1931 = vmatprep.subr.mxu0 0.0
    %1932 = vmatpush1.xpose.msra.mxu0 %v1913
    %1933 = vmatprep.subr.mxu0 0.0
    %1934 = vmatpush1.xpose.msra.mxu0 %v1915
    %1935 = vmatprep.subr.mxu0 0.0
    %1936 = vmatpush1.xpose.msra.mxu0 %v1917
    %1937 = vmatprep.subr.mxu0 0.0
    %1938 = vmatpush1.xpose.msra.mxu0 %v1919
    %1939 = vmatprep.subr.mxu0 0.0
    %1940 = vmatpush1.xpose.msra.mxu0 %v1921
    %1941 = vmatprep.subr.mxu0 0.0
    %1942 = vmatpush1.xpose.msra.mxu0 %v1923
    %1943 = vmatprep.subr.mxu0 0.0
    %1944 = vmatpush1.xpose.msra.mxu0 %v1925
    %1945 = vmatprep.subr.mxu0 0.0
    %1946 = vmatpush1.xpose.msra.mxu0 %v1927
    %1947 = vmatprep.subr.mxu0 0.0
    %1948 = vmatpush1.xpose.msra.mxu0 %v1929
    %1949 = vmatprep.subr.mxu0 0.0
    %1950 = vmatpush1.xpose.msra.mxu0 0.0
    %1951 = vmatprep.subr.mxu0 0.0
    %1952 = vmatpush1.xpose.msra.mxu0 0.0
    %1953 = vmatprep.subr.mxu0 0.0
    %1954 = vmatpush1.xpose.msra.mxu0 0.0
    %1955 = vmatprep.subr.mxu0 0.0
    %1956 = vmatpush1.xpose.msra.mxu0 0.0
    %1957 = vmatprep.subr.mxu0 0.0
    %1958 = vmatpush1.xpose.msra.mxu0 0.0
    %1959 = vmatprep.subr.mxu0 0.0
    %1960 = vmatpush1.xpose.msra.mxu0 0.0
    %1961 = vmatprep.subr.mxu0 0.0
    %1962 = vmatpush1.xpose.msra.mxu0 0.0
    %1963 = vmatprep.subr.mxu0 0.0
    %1964 = vmatpush1.xpose.msra.mxu0 0.0
    %1965 = vmatprep.subr.mxu0 0.0
    %1966 = vmatpush1.xpose.msra.mxu0 0.0
    %1967 = vmatprep.subr.mxu0 0.0
    %1968 = vmatpush1.xpose.msra.mxu0 0.0
    %1969 = vmatprep.subr.mxu0 0.0
    %1970 = vmatpush1.xpose.msra.mxu0 0.0
    %1971 = vmatprep.subr.mxu0 0.0
    %1972 = vmatpush1.xpose.msra.mxu0 0.0
    %1973 = vmatprep.subr.mxu0 0.0
    %1974 = vmatpush1.xpose.msra.mxu0 0.0
    %1975 = vmatprep.subr.mxu0 0.0
    %1976 = vmatpush1.xpose.msra.mxu0 0.0
    %1977 = vmatprep.subr.mxu0 0.0
    %1978 = vmatpush1.xpose.msra.mxu0 0.0
    %1979 = vmatprep.subr.mxu0 0.0
    %1980 = vmatpush1.xpose.msra.mxu0 0.0
    %1981 = vmatprep.subr.mxu0 0.0
    %1982 = vmatpush1.xpose.msra.mxu0 0.0
    %1983 = vmatprep.subr.mxu0 0.0
    %1984 = vmatpush1.xpose.msra.mxu0 0.0
    %1985 = vmatprep.subr.mxu0 0.0
    %1986 = vmatpush1.xpose.msra.mxu0 0.0
    %1987 = vmatprep.subr.mxu0 0.0
    %1988 = vmatpush1.xpose.msra.mxu0 0.0
    %1989 = vmatprep.subr.mxu0 0.0
    %1990 = vmatpush1.xpose.msra.mxu0 0.0
    %1991 = vmatprep.subr.mxu0 0.0
    %1992 = vmatpush1.xpose.msra.mxu0 0.0
    %1993 = vmatprep.subr.mxu0 0.0
    %1994 = vmatpush1.xpose.msra.mxu0 0.0
    %1995 = vmatprep.mubr.f32.mxu0 0.0
    %1996 = vmatmul.mubr.f32.gmra.mrb[0].mxu0 %v1895
    %v1997 = vpop.f32.mrb[0].mxu0
    %v1998 = vadd.f32 0.0, %v1997
    %v1999 = vpop.f32.mrb[0].mxu0
    %2000 = vmatprep.mubr.f32.mxu0 0.0
    %2001 = vmatmul.mubr.f32.gmra.mrb[0].mxu0 %v1897
    %v2002 = vpop.f32.mrb[0].mxu0
    %v2003 = vadd.f32 0.0, %v2002
    %v2004 = vpop.f32.mrb[0].mxu0
    %2005 = vmatprep.mubr.f32.mxu0 0.0
    %2006 = vmatmul.mubr.f32.gmra.mrb[0].mxu0 %v1899
    %v2007 = vpop.f32.mrb[0].mxu0
    %v2008 = vadd.f32 0.0, %v2007
    %v2009 = vpop.f32.mrb[0].mxu0
    %2010 = vmatprep.mubr.f32.mxu0 0.0
    %2011 = vmatmul.mubr.f32.gmra.mrb[0].mxu0 %v1901
    %v2012 = vpop.f32.mrb[0].mxu0
    %v2013 = vadd.f32 0.0, %v2012
    %v2014 = vpop.f32.mrb[0].mxu0
    %2015 = vmatprep.mubr.f32.mxu0 0.0
    %2016 = vmatmul.mubr.f32.gmra.mrb[0].mxu0 %v1903
    %v2017 = vpop.f32.mrb[0].mxu0
    %v2018 = vadd.f32 0.0, %v2017
    %v2019 = vpop.f32.mrb[0].mxu0
    %2020 = vmatprep.mubr.f32.mxu0 0.0
    %2021 = vmatmul.mubr.f32.gmra.mrb[0].mxu0 %v1905
    %v2022 = vpop.f32.mrb[0].mxu0
    %v2023 = vadd.f32 0.0, %v2022
    %v2024 = vpop.f32.mrb[0].mxu0
    %2025 = vmatprep.mubr.f32.mxu0 0.0
    %2026 = vmatmul.mubr.f32.gmra.mrb[0].mxu0 %v1907
    %v2027 = vpop.f32.mrb[0].mxu0
    %v2028 = vadd.f32 0.0, %v2027
    %v2029 = vpop.f32.mrb[0].mxu0
    %2030 = vmatprep.mubr.f32.mxu0 0.0
    %2031 = vmatmul.mubr.f32.gmra.mrb[0].mxu0 %v1909
    %v2032 = vpop.f32.mrb[0].mxu0
    %v2033 = vadd.f32 0.0, %v2032
    %v2034 = vpop.f32.mrb[0].mxu0
    %2035 = vmatprep.mubr.f32.mxu0 0.0
    %2036 = vmatmul.mubr.f32.gmra.mrb[0].mxu0 %v1911
    %v2037 = vpop.f32.mrb[0].mxu0
    %v2038 = vadd.f32 0.0, %v2037
    %v2039 = vpop.f32.mrb[0].mxu0
    %2040 = vdwg.mxu0
    %v2041 = vsel %vm596, %v1998, -inf
    %2042 = vmax.xlane.f32.xlu0 %v2041
    %v2043 = vpop.xlane.xlu0 %2042
    %v2044 = vsel %vm596, %v2003, -inf
    %2045 = vmax.xlane.f32.xlu0 %v2044
    %v2046 = vpop.xlane.xlu0 %2045
    %v2047 = vsel %vm596, %v2008, -inf
    %2048 = vmax.xlane.f32.xlu0 %v2047
    %v2049 = vpop.xlane.xlu0 %2048
    %v2050 = vsel %vm596, %v2013, -inf
    %2051 = vmax.xlane.f32.xlu0 %v2050
    %v2052 = vpop.xlane.xlu0 %2051
    %v2053 = vsel %vm596, %v2018, -inf
    %2054 = vmax.xlane.f32.xlu0 %v2053
    %v2055 = vpop.xlane.xlu0 %2054
    %v2056 = vsel %vm596, %v2023, -inf
    %2057 = vmax.xlane.f32.xlu0 %v2056
    %v2058 = vpop.xlane.xlu0 %2057
    %v2059 = vsel %vm596, %v2028, -inf
    %2060 = vmax.xlane.f32.xlu0 %v2059
    %v2061 = vpop.xlane.xlu0 %2060
    %v2062 = vsel %vm596, %v2033, -inf
    %2063 = vmax.xlane.f32.xlu0 %v2062
    %v2064 = vpop.xlane.xlu0 %2063
    %v2065 = vsel %vm621, %v2038, -inf
    %2066 = vmax.xlane.f32.xlu0 %v2065
    %v2067 = vpop.xlane.xlu0 %2066
    %v2068 = vsub.f32 %v1998, %v2043
    %v2069 = vsub.f32 %v2003, %v2046
    %v2070 = vsub.f32 %v2008, %v2049
    %v2071 = vsub.f32 %v2013, %v2052
    %v2072 = vsub.f32 %v2018, %v2055
    %v2073 = vsub.f32 %v2023, %v2058
    %v2074 = vsub.f32 %v2028, %v2061
    %v2075 = vsub.f32 %v2033, %v2064
    %v2076 = vsub.f32 %v2038, %v2067
    %v2077 = vmul.f32 %v2068, 1.442695
    %v2078 = vpow.pop %v2077
    %v2079 = vmul.f32 %v2069, 1.442695
    %v2080 = vpow.pop %v2079
    %v2081 = vmul.f32 %v2070, 1.442695
    %v2082 = vpow.pop %v2081
    %v2083 = vmul.f32 %v2071, 1.442695
    %v2084 = vpow.pop %v2083
    %v2085 = vmul.f32 %v2072, 1.442695
    %v2086 = vpow.pop %v2085
    %v2087 = vmul.f32 %v2073, 1.442695
    %v2088 = vpow.pop %v2087
    %v2089 = vmul.f32 %v2074, 1.442695
    %v2090 = vpow.pop %v2089
    %v2091 = vmul.f32 %v2075, 1.442695
    %v2092 = vpow.pop %v2091
    %v2093 = vmul.f32 %v2076, 1.442695
    %v2094 = vpow.pop %v2093
    %v2095 = vsel %vm596, %v2078, 0.0
    %2096 = vadd.xlane.f32.xlu0 %v2095
    %v2097 = vpop.xlane.xlu0 %2096
    %v2098 = vsel %vm596, %v2080, 0.0
    %2099 = vadd.xlane.f32.xlu0 %v2098
    %v2100 = vpop.xlane.xlu0 %2099
    %v2101 = vsel %vm596, %v2082, 0.0
    %2102 = vadd.xlane.f32.xlu0 %v2101
    %v2103 = vpop.xlane.xlu0 %2102
    %v2104 = vsel %vm596, %v2084, 0.0
    %2105 = vadd.xlane.f32.xlu0 %v2104
    %v2106 = vpop.xlane.xlu0 %2105
    %v2107 = vsel %vm596, %v2086, 0.0
    %2108 = vadd.xlane.f32.xlu0 %v2107
    %v2109 = vpop.xlane.xlu0 %2108
    %v2110 = vsel %vm596, %v2088, 0.0
    %2111 = vadd.xlane.f32.xlu0 %v2110
    %v2112 = vpop.xlane.xlu0 %2111
    %v2113 = vsel %vm596, %v2090, 0.0
    %2114 = vadd.xlane.f32.xlu0 %v2113
    %v2115 = vpop.xlane.xlu0 %2114
    %v2116 = vsel %vm596, %v2092, 0.0
    %2117 = vadd.xlane.f32.xlu0 %v2116
    %v2118 = vpop.xlane.xlu0 %2117
    %v2119 = vsel %vm621, %v2094, 0.0
    %2120 = vadd.xlane.f32.xlu0 %v2119
    %v2121 = vpop.xlane.xlu0 %2120
    %v2122 = vrcp.pop %v2097
    %v2123 = vmul.f32 %v2078, %v2122
    %v2124 = vrcp.pop %v2100
    %v2125 = vmul.f32 %v2080, %v2124
    %v2126 = vrcp.pop %v2103
    %v2127 = vmul.f32 %v2082, %v2126
    %v2128 = vrcp.pop %v2106
    %v2129 = vmul.f32 %v2084, %v2128
    %v2130 = vrcp.pop %v2109
    %v2131 = vmul.f32 %v2086, %v2130
    %v2132 = vrcp.pop %v2112
    %v2133 = vmul.f32 %v2088, %v2132
    %v2134 = vrcp.pop %v2115
    %v2135 = vmul.f32 %v2090, %v2134
    %v2136 = vrcp.pop %v2118
    %v2137 = vmul.f32 %v2092, %v2136
    %v2138 = vrcp.pop %v2121
    %v2139 = vmul.f32 %v2094, %v2138
    %2140 = vrot.lane.b32.xlu0 %v307, 40
    %v2141 = vpop.permute.xlu0 %2140
    %2142 = vrot.lane.b32.xlu0 %v312, 40
    %v2143 = vpop.permute.xlu0 %2142
    %2144 = vrot.lane.b32.xlu0 %v317, 40
    %v2145 = vpop.permute.xlu0 %2144
    %2146 = vrot.lane.b32.xlu0 %v322, 40
    %v2147 = vpop.permute.xlu0 %2146
    %2148 = vrot.lane.b32.xlu0 %v327, 40
    %v2149 = vpop.permute.xlu0 %2148
    %2150 = vrot.lane.b32.xlu0 %v332, 40
    %v2151 = vpop.permute.xlu0 %2150
    %2152 = vrot.lane.b32.xlu0 %v337, 40
    %v2153 = vpop.permute.xlu0 %2152
    %2154 = vrot.lane.b32.xlu0 %v342, 40
    %v2155 = vpop.permute.xlu0 %2154
    %2156 = vrot.lane.b32.xlu0 %v347, 40
    %v2157 = vpop.permute.xlu0 %2156
    %v2167 = vsel %vm596, %v2123, 0
    %v2170 = vsel %vm596, %v2125, 0
    %v2173 = vsel %vm596, %v2127, 0
    %v2176 = vsel %vm596, %v2129, 0
    %v2179 = vsel %vm596, %v2131, 0
    %v2182 = vsel %vm596, %v2133, 0
    %v2185 = vsel %vm596, %v2135, 0
    %v2188 = vsel %vm596, %v2137, 0
    %v2191 = vsel %vm596, %v2139, 0
    %v2193 = vsel %vm750, %v2157, 0
    %2195 = vmatprep.subr.mxu0 0.0
    %2196 = vmatpush1.msra.mxu0 %v2141
    %2197 = vmatprep.subr.mxu0 0.0
    %2198 = vmatpush1.msra.mxu0 %v2143
    %2199 = vmatprep.subr.mxu0 0.0
    %2200 = vmatpush1.msra.mxu0 %v2145
    %2201 = vmatprep.subr.mxu0 0.0
    %2202 = vmatpush1.msra.mxu0 %v2147
    %2203 = vmatprep.subr.mxu0 0.0
    %2204 = vmatpush1.msra.mxu0 %v2149
    %2205 = vmatprep.subr.mxu0 0.0
    %2206 = vmatpush1.msra.mxu0 %v2151
    %2207 = vmatprep.subr.mxu0 0.0
    %2208 = vmatpush1.msra.mxu0 %v2153
    %2209 = vmatprep.subr.mxu0 0.0
    %2210 = vmatpush1.msra.mxu0 %v2155
    %2211 = vmatprep.subr.mxu0 0.0
    %2212 = vmatpush1.msra.mxu0 %v2193
    %2213 = vmatprep.subr.mxu0 0.0
    %2214 = vmatpush1.msra.mxu0 0.0
    %2215 = vmatprep.subr.mxu0 0.0
    %2216 = vmatpush1.msra.mxu0 0.0
    %2217 = vmatprep.subr.mxu0 0.0
    %2218 = vmatpush1.msra.mxu0 0.0
    %2219 = vmatprep.subr.mxu0 0.0
    %2220 = vmatpush1.msra.mxu0 0.0
    %2221 = vmatprep.subr.mxu0 0.0
    %2222 = vmatpush1.msra.mxu0 0.0
    %2223 = vmatprep.subr.mxu0 0.0
    %2224 = vmatpush1.msra.mxu0 0.0
    %2225 = vmatprep.subr.mxu0 0.0
    %2226 = vmatpush1.msra.mxu0 0.0
    %2227 = vmatprep.subr.mxu0 0.0
    %2228 = vmatpush1.msra.mxu0 0.0
    %2229 = vmatprep.subr.mxu0 0.0
    %2230 = vmatpush1.msra.mxu0 0.0
    %2231 = vmatprep.subr.mxu0 0.0
    %2232 = vmatpush1.msra.mxu0 0.0
    %2233 = vmatprep.subr.mxu0 0.0
    %2234 = vmatpush1.msra.mxu0 0.0
    %2235 = vmatprep.subr.mxu0 0.0
    %2236 = vmatpush1.msra.mxu0 0.0
    %2237 = vmatprep.subr.mxu0 0.0
    %2238 = vmatpush1.msra.mxu0 0.0
    %2239 = vmatprep.subr.mxu0 0.0
    %2240 = vmatpush1.msra.mxu0 0.0
    %2241 = vmatprep.subr.mxu0 0.0
    %2242 = vmatpush1.msra.mxu0 0.0
    %2243 = vmatprep.subr.mxu0 0.0
    %2244 = vmatpush1.msra.mxu0 0.0
    %2245 = vmatprep.subr.mxu0 0.0
    %2246 = vmatpush1.msra.mxu0 0.0
    %2247 = vmatprep.subr.mxu0 0.0
    %2248 = vmatpush1.msra.mxu0 0.0
    %2249 = vmatprep.subr.mxu0 0.0
    %2250 = vmatpush1.msra.mxu0 0.0
    %2251 = vmatprep.subr.mxu0 0.0
    %2252 = vmatpush1.msra.mxu0 0.0
    %2253 = vmatprep.subr.mxu0 0.0
    %2254 = vmatpush1.msra.mxu0 0.0
    %2255 = vmatprep.subr.mxu0 0.0
    %2256 = vmatpush1.msra.mxu0 0.0
    %2257 = vmatprep.subr.mxu0 0.0
    %2258 = vmatpush1.msra.mxu0 0.0
    %2259 = vmatprep.mubr.f32.mxu0 0.0
    %2260 = vmatmul.mubr.f32.gmra.mrb[0].mxu0 %v2167
    %v2261 = vpop.f32.mrb[0].mxu0
    %v2262 = vadd.f32 0.0, %v2261
    %v2263 = vpop.f32.mrb[0].mxu0
    %2264 = vmatprep.mubr.f32.mxu0 0.0
    %2265 = vmatmul.mubr.f32.gmra.mrb[0].mxu0 %v2170
    %v2266 = vpop.f32.mrb[0].mxu0
    %v2267 = vadd.f32 0.0, %v2266
    %v2268 = vpop.f32.mrb[0].mxu0
    %2269 = vmatprep.mubr.f32.mxu0 0.0
    %2270 = vmatmul.mubr.f32.gmra.mrb[0].mxu0 %v2173
    %v2271 = vpop.f32.mrb[0].mxu0
    %v2272 = vadd.f32 0.0, %v2271
    %v2273 = vpop.f32.mrb[0].mxu0
    %2274 = vmatprep.mubr.f32.mxu0 0.0
    %2275 = vmatmul.mubr.f32.gmra.mrb[0].mxu0 %v2176
    %v2276 = vpop.f32.mrb[0].mxu0
    %v2277 = vadd.f32 0.0, %v2276
    %v2278 = vpop.f32.mrb[0].mxu0
    %2279 = vmatprep.mubr.f32.mxu0 0.0
    %2280 = vmatmul.mubr.f32.gmra.mrb[0].mxu0 %v2179
    %v2281 = vpop.f32.mrb[0].mxu0
    %v2282 = vadd.f32 0.0, %v2281
    %v2283 = vpop.f32.mrb[0].mxu0
    %2284 = vmatprep.mubr.f32.mxu0 0.0
    %2285 = vmatmul.mubr.f32.gmra.mrb[0].mxu0 %v2182
    %v2286 = vpop.f32.mrb[0].mxu0
    %v2287 = vadd.f32 0.0, %v2286
    %v2288 = vpop.f32.mrb[0].mxu0
    %2289 = vmatprep.mubr.f32.mxu0 0.0
    %2290 = vmatmul.mubr.f32.gmra.mrb[0].mxu0 %v2185
    %v2291 = vpop.f32.mrb[0].mxu0
    %v2292 = vadd.f32 0.0, %v2291
    %v2293 = vpop.f32.mrb[0].mxu0
    %2294 = vmatprep.mubr.f32.mxu0 0.0
    %2295 = vmatmul.mubr.f32.gmra.mrb[0].mxu0 %v2188
    %v2296 = vpop.f32.mrb[0].mxu0
    %v2297 = vadd.f32 0.0, %v2296
    %v2298 = vpop.f32.mrb[0].mxu0
    %2299 = vmatprep.mubr.f32.mxu0 0.0
    %2300 = vmatmul.mubr.f32.gmra.mrb[0].mxu0 %v2191
    %v2301 = vpop.f32.mrb[0].mxu0
    %v2302 = vadd.f32 0.0, %v2301
    %v2303 = vpop.f32.mrb[0].mxu0
    %2304 = vdwg.mxu0
    %2314 = vrot.lane.b32.xlu0 %v2262, 24
    %v2315 = vpop.permute.xlu0 %2314
    %2316 = vrot.lane.b32.xlu0 %v2267, 24
    %v2317 = vpop.permute.xlu0 %2316
    %2318 = vrot.lane.b32.xlu0 %v2272, 24
    %v2319 = vpop.permute.xlu0 %2318
    %2320 = vrot.lane.b32.xlu0 %v2277, 24
    %v2321 = vpop.permute.xlu0 %2320
    %2322 = vrot.lane.b32.xlu0 %v2282, 24
    %v2323 = vpop.permute.xlu0 %2322
    %2324 = vrot.lane.b32.xlu0 %v2287, 24
    %v2325 = vpop.permute.xlu0 %2324
    %2326 = vrot.lane.b32.xlu0 %v2292, 24
    %v2327 = vpop.permute.xlu0 %2326
    %2328 = vrot.lane.b32.xlu0 %v2297, 24
    %v2329 = vpop.permute.xlu0 %2328
    %2330 = vrot.lane.b32.xlu0 %v2302, 24
    %v2331 = vpop.permute.xlu0 %2330
    %vm2341 = vcmask 261312
    %2342 = vst.msk [vmem:[#allocation3] sm:$0xff] %vm2341, %v2315
    %2343 = vst.msk [vmem:[#allocation3 + $0x8] sm:$0xff] %vm2341, %v2317
    %2344 = vst.msk [vmem:[#allocation3 + $0x10] sm:$0xff] %vm2341, %v2319
    %2345 = vst.msk [vmem:[#allocation3 + $0x18] sm:$0xff] %vm2341, %v2321
    %2346 = vst.msk [vmem:[#allocation3 + $0x20] sm:$0xff] %vm2341, %v2323
    %2347 = vst.msk [vmem:[#allocation3 + $0x28] sm:$0xff] %vm2341, %v2325
    %2348 = vst.msk [vmem:[#allocation3 + $0x30] sm:$0xff] %vm2341, %v2327
    %2349 = vst.msk [vmem:[#allocation3 + $0x38] sm:$0xff] %vm2341, %v2329
    %vm2350 = vcmask 254144
    %2351 = vst.msk [vmem:[#allocation3 + $0x40] sm:$0x1] %vm2350, %v2331
    %2361 = vrot.lane.b32.xlu0 %v352, 96
    %v2362 = vpop.permute.xlu0 %2361
    %2363 = vrot.lane.b32.xlu0 %v357, 96
    %v2364 = vpop.permute.xlu0 %2363
    %2365 = vrot.lane.b32.xlu0 %v362, 96
    %v2366 = vpop.permute.xlu0 %2365
    %2367 = vrot.lane.b32.xlu0 %v367, 96
    %v2368 = vpop.permute.xlu0 %2367
    %2369 = vrot.lane.b32.xlu0 %v372, 96
    %v2370 = vpop.permute.xlu0 %2369
    %2371 = vrot.lane.b32.xlu0 %v377, 96
    %v2372 = vpop.permute.xlu0 %2371
    %2373 = vrot.lane.b32.xlu0 %v382, 96
    %v2374 = vpop.permute.xlu0 %2373
    %2375 = vrot.lane.b32.xlu0 %v387, 96
    %v2376 = vpop.permute.xlu0 %2375
    %2377 = vrot.lane.b32.xlu0 %v392, 96
    %v2378 = vpop.permute.xlu0 %2377
    %v2380 = vsel %vm440, %v404, 0
    %v2383 = vsel %vm440, %v405, 0
    %v2386 = vsel %vm440, %v406, 0
    %v2389 = vsel %vm440, %v407, 0
    %v2392 = vsel %vm440, %v408, 0
    %v2395 = vsel %vm440, %v409, 0
    %v2398 = vsel %vm440, %v410, 0
    %v2401 = vsel %vm440, %v411, 0
    %v2404 = vsel %vm440, %v412, 0
    %v2406 = vsel %vm440, %v2362, 0
    %v2408 = vsel %vm440, %v2364, 0
    %v2410 = vsel %vm440, %v2366, 0
    %v2412 = vsel %vm440, %v2368, 0
    %v2414 = vsel %vm440, %v2370, 0
    %v2416 = vsel %vm440, %v2372, 0
    %v2418 = vsel %vm440, %v2374, 0
    %v2420 = vsel %vm440, %v2376, 0
    %v2422 = vsel %vm440, %v2378, 0
    %2424 = vmatprep.subr.mxu0 0.0
    %2425 = vmatpush1.xpose.msra.mxu0 %v2406
    %2426 = vmatprep.subr.mxu0 0.0
    %2427 = vmatpush1.xpose.msra.mxu0 %v2408
    %2428 = vmatprep.subr.mxu0 0.0
    %2429 = vmatpush1.xpose.msra.mxu0 %v2410
    %2430 = vmatprep.subr.mxu0 0.0
    %2431 = vmatpush1.xpose.msra.mxu0 %v2412
    %2432 = vmatprep.subr.mxu0 0.0
    %2433 = vmatpush1.xpose.msra.mxu0 %v2414
    %2434 = vmatprep.subr.mxu0 0.0
    %2435 = vmatpush1.xpose.msra.mxu0 %v2416
    %2436 = vmatprep.subr.mxu0 0.0
    %2437 = vmatpush1.xpose.msra.mxu0 %v2418
    %2438 = vmatprep.subr.mxu0 0.0
    %2439 = vmatpush1.xpose.msra.mxu0 %v2420
    %2440 = vmatprep.subr.mxu0 0.0
    %2441 = vmatpush1.xpose.msra.mxu0 %v2422
    %2442 = vmatprep.subr.mxu0 0.0
    %2443 = vmatpush1.xpose.msra.mxu0 0.0
    %2444 = vmatprep.subr.mxu0 0.0
    %2445 = vmatpush1.xpose.msra.mxu0 0.0
    %2446 = vmatprep.subr.mxu0 0.0
    %2447 = vmatpush1.xpose.msra.mxu0 0.0
    %2448 = vmatprep.subr.mxu0 0.0
    %2449 = vmatpush1.xpose.msra.mxu0 0.0
    %2450 = vmatprep.subr.mxu0 0.0
    %2451 = vmatpush1.xpose.msra.mxu0 0.0
    %2452 = vmatprep.subr.mxu0 0.0
    %2453 = vmatpush1.xpose.msra.mxu0 0.0
    %2454 = vmatprep.subr.mxu0 0.0
    %2455 = vmatpush1.xpose.msra.mxu0 0.0
    %2456 = vmatprep.subr.mxu0 0.0
    %2457 = vmatpush1.xpose.msra.mxu0 0.0
    %2458 = vmatprep.subr.mxu0 0.0
    %2459 = vmatpush1.xpose.msra.mxu0 0.0
    %2460 = vmatprep.subr.mxu0 0.0
    %2461 = vmatpush1.xpose.msra.mxu0 0.0
    %2462 = vmatprep.subr.mxu0 0.0
    %2463 = vmatpush1.xpose.msra.mxu0 0.0
    %2464 = vmatprep.subr.mxu0 0.0
    %2465 = vmatpush1.xpose.msra.mxu0 0.0
    %2466 = vmatprep.subr.mxu0 0.0
    %2467 = vmatpush1.xpose.msra.mxu0 0.0
    %2468 = vmatprep.subr.mxu0 0.0
    %2469 = vmatpush1.xpose.msra.mxu0 0.0
    %2470 = vmatprep.subr.mxu0 0.0
    %2471 = vmatpush1.xpose.msra.mxu0 0.0
    %2472 = vmatprep.subr.mxu0 0.0
    %2473 = vmatpush1.xpose.msra.mxu0 0.0
    %2474 = vmatprep.subr.mxu0 0.0
    %2475 = vmatpush1.xpose.msra.mxu0 0.0
    %2476 = vmatprep.subr.mxu0 0.0
    %2477 = vmatpush1.xpose.msra.mxu0 0.0
    %2478 = vmatprep.subr.mxu0 0.0
    %2479 = vmatpush1.xpose.msra.mxu0 0.0
    %2480 = vmatprep.subr.mxu0 0.0
    %2481 = vmatpush1.xpose.msra.mxu0 0.0
    %2482 = vmatprep.subr.mxu0 0.0
    %2483 = vmatpush1.xpose.msra.mxu0 0.0
    %2484 = vmatprep.subr.mxu0 0.0
    %2485 = vmatpush1.xpose.msra.mxu0 0.0
    %2486 = vmatprep.subr.mxu0 0.0
    %2487 = vmatpush1.xpose.msra.mxu0 0.0
    %2488 = vmatprep.mubr.f32.mxu0 0.0
    %2489 = vmatmul.mubr.f32.gmra.mrb[0].mxu0 %v2380
    %v2490 = vpop.f32.mrb[0].mxu0
    %v2491 = vadd.f32 0.0, %v2490
    %v2492 = vpop.f32.mrb[0].mxu0
    %2493 = vmatprep.mubr.f32.mxu0 0.0
    %2494 = vmatmul.mubr.f32.gmra.mrb[0].mxu0 %v2383
    %v2495 = vpop.f32.mrb[0].mxu0
    %v2496 = vadd.f32 0.0, %v2495
    %v2497 = vpop.f32.mrb[0].mxu0
    %2498 = vmatprep.mubr.f32.mxu0 0.0
    %2499 = vmatmul.mubr.f32.gmra.mrb[0].mxu0 %v2386
    %v2500 = vpop.f32.mrb[0].mxu0
    %v2501 = vadd.f32 0.0, %v2500
    %v2502 = vpop.f32.mrb[0].mxu0
    %2503 = vmatprep.mubr.f32.mxu0 0.0
    %2504 = vmatmul.mubr.f32.gmra.mrb[0].mxu0 %v2389
    %v2505 = vpop.f32.mrb[0].mxu0
    %v2506 = vadd.f32 0.0, %v2505
    %v2507 = vpop.f32.mrb[0].mxu0
    %2508 = vmatprep.mubr.f32.mxu0 0.0
    %2509 = vmatmul.mubr.f32.gmra.mrb[0].mxu0 %v2392
    %v2510 = vpop.f32.mrb[0].mxu0
    %v2511 = vadd.f32 0.0, %v2510
    %v2512 = vpop.f32.mrb[0].mxu0
    %2513 = vmatprep.mubr.f32.mxu0 0.0
    %2514 = vmatmul.mubr.f32.gmra.mrb[0].mxu0 %v2395
    %v2515 = vpop.f32.mrb[0].mxu0
    %v2516 = vadd.f32 0.0, %v2515
    %v2517 = vpop.f32.mrb[0].mxu0
    %2518 = vmatprep.mubr.f32.mxu0 0.0
    %2519 = vmatmul.mubr.f32.gmra.mrb[0].mxu0 %v2398
    %v2520 = vpop.f32.mrb[0].mxu0
    %v2521 = vadd.f32 0.0, %v2520
    %v2522 = vpop.f32.mrb[0].mxu0
    %2523 = vmatprep.mubr.f32.mxu0 0.0
    %2524 = vmatmul.mubr.f32.gmra.mrb[0].mxu0 %v2401
    %v2525 = vpop.f32.mrb[0].mxu0
    %v2526 = vadd.f32 0.0, %v2525
    %v2527 = vpop.f32.mrb[0].mxu0
    %2528 = vmatprep.mubr.f32.mxu0 0.0
    %2529 = vmatmul.mubr.f32.gmra.mrb[0].mxu0 %v2404
    %v2530 = vpop.f32.mrb[0].mxu0
    %v2531 = vadd.f32 0.0, %v2530
    %v2532 = vpop.f32.mrb[0].mxu0
    %2533 = vdwg.mxu0
    %v2534 = vsel %vm596, %v2491, -inf
    %2535 = vmax.xlane.f32.xlu0 %v2534
    %v2536 = vpop.xlane.xlu0 %2535
    %v2537 = vsel %vm596, %v2496, -inf
    %2538 = vmax.xlane.f32.xlu0 %v2537
    %v2539 = vpop.xlane.xlu0 %2538
    %v2540 = vsel %vm596, %v2501, -inf
    %2541 = vmax.xlane.f32.xlu0 %v2540
    %v2542 = vpop.xlane.xlu0 %2541
    %v2543 = vsel %vm596, %v2506, -inf
    %2544 = vmax.xlane.f32.xlu0 %v2543
    %v2545 = vpop.xlane.xlu0 %2544
    %v2546 = vsel %vm596, %v2511, -inf
    %2547 = vmax.xlane.f32.xlu0 %v2546
    %v2548 = vpop.xlane.xlu0 %2547
    %v2549 = vsel %vm596, %v2516, -inf
    %2550 = vmax.xlane.f32.xlu0 %v2549
    %v2551 = vpop.xlane.xlu0 %2550
    %v2552 = vsel %vm596, %v2521, -inf
    %2553 = vmax.xlane.f32.xlu0 %v2552
    %v2554 = vpop.xlane.xlu0 %2553
    %v2555 = vsel %vm596, %v2526, -inf
    %2556 = vmax.xlane.f32.xlu0 %v2555
    %v2557 = vpop.xlane.xlu0 %2556
    %v2558 = vsel %vm621, %v2531, -inf
    %2559 = vmax.xlane.f32.xlu0 %v2558
    %v2560 = vpop.xlane.xlu0 %2559
    %v2561 = vsub.f32 %v2491, %v2536
    %v2562 = vsub.f32 %v2496, %v2539
    %v2563 = vsub.f32 %v2501, %v2542
    %v2564 = vsub.f32 %v2506, %v2545
    %v2565 = vsub.f32 %v2511, %v2548
    %v2566 = vsub.f32 %v2516, %v2551
    %v2567 = vsub.f32 %v2521, %v2554
    %v2568 = vsub.f32 %v2526, %v2557
    %v2569 = vsub.f32 %v2531, %v2560
    %v2570 = vmul.f32 %v2561, 1.442695
    %v2571 = vpow.pop %v2570
    %v2572 = vmul.f32 %v2562, 1.442695
    %v2573 = vpow.pop %v2572
    %v2574 = vmul.f32 %v2563, 1.442695
    %v2575 = vpow.pop %v2574
    %v2576 = vmul.f32 %v2564, 1.442695
    %v2577 = vpow.pop %v2576
    %v2578 = vmul.f32 %v2565, 1.442695
    %v2579 = vpow.pop %v2578
    %v2580 = vmul.f32 %v2566, 1.442695
    %v2581 = vpow.pop %v2580
    %v2582 = vmul.f32 %v2567, 1.442695
    %v2583 = vpow.pop %v2582
    %v2584 = vmul.f32 %v2568, 1.442695
    %v2585 = vpow.pop %v2584
    %v2586 = vmul.f32 %v2569, 1.442695
    %v2587 = vpow.pop %v2586
    %v2588 = vsel %vm596, %v2571, 0.0
    %2589 = vadd.xlane.f32.xlu0 %v2588
    %v2590 = vpop.xlane.xlu0 %2589
    %v2591 = vsel %vm596, %v2573, 0.0
    %2592 = vadd.xlane.f32.xlu0 %v2591
    %v2593 = vpop.xlane.xlu0 %2592
    %v2594 = vsel %vm596, %v2575, 0.0
    %2595 = vadd.xlane.f32.xlu0 %v2594
    %v2596 = vpop.xlane.xlu0 %2595
    %v2597 = vsel %vm596, %v2577, 0.0
    %2598 = vadd.xlane.f32.xlu0 %v2597
    %v2599 = vpop.xlane.xlu0 %2598
    %v2600 = vsel %vm596, %v2579, 0.0
    %2601 = vadd.xlane.f32.xlu0 %v2600
    %v2602 = vpop.xlane.xlu0 %2601
    %v2603 = vsel %vm596, %v2581, 0.0
    %2604 = vadd.xlane.f32.xlu0 %v2603
    %v2605 = vpop.xlane.xlu0 %2604
    %v2606 = vsel %vm596, %v2583, 0.0
    %2607 = vadd.xlane.f32.xlu0 %v2606
    %v2608 = vpop.xlane.xlu0 %2607
    %v2609 = vsel %vm596, %v2585, 0.0
    %2610 = vadd.xlane.f32.xlu0 %v2609
    %v2611 = vpop.xlane.xlu0 %2610
    %v2612 = vsel %vm621, %v2587, 0.0
    %2613 = vadd.xlane.f32.xlu0 %v2612
    %v2614 = vpop.xlane.xlu0 %2613
    %v2615 = vrcp.pop %v2590
    %v2616 = vmul.f32 %v2571, %v2615
    %v2617 = vrcp.pop %v2593
    %v2618 = vmul.f32 %v2573, %v2617
    %v2619 = vrcp.pop %v2596
    %v2620 = vmul.f32 %v2575, %v2619
    %v2621 = vrcp.pop %v2599
    %v2622 = vmul.f32 %v2577, %v2621
    %v2623 = vrcp.pop %v2602
    %v2624 = vmul.f32 %v2579, %v2623
    %v2625 = vrcp.pop %v2605
    %v2626 = vmul.f32 %v2581, %v2625
    %v2627 = vrcp.pop %v2608
    %v2628 = vmul.f32 %v2583, %v2627
    %v2629 = vrcp.pop %v2611
    %v2630 = vmul.f32 %v2585, %v2629
    %v2631 = vrcp.pop %v2614
    %v2632 = vmul.f32 %v2587, %v2631
    %2633 = vrot.lane.b32.xlu0 %v352, 64
    %v2634 = vpop.permute.xlu0 %2633
    %2635 = vrot.lane.b32.xlu0 %v357, 64
    %v2636 = vpop.permute.xlu0 %2635
    %2637 = vrot.lane.b32.xlu0 %v362, 64
    %v2638 = vpop.permute.xlu0 %2637
    %2639 = vrot.lane.b32.xlu0 %v367, 64
    %v2640 = vpop.permute.xlu0 %2639
    %2641 = vrot.lane.b32.xlu0 %v372, 64
    %v2642 = vpop.permute.xlu0 %2641
    %2643 = vrot.lane.b32.xlu0 %v377, 64
    %v2644 = vpop.permute.xlu0 %2643
    %2645 = vrot.lane.b32.xlu0 %v382, 64
    %v2646 = vpop.permute.xlu0 %2645
    %2647 = vrot.lane.b32.xlu0 %v387, 64
    %v2648 = vpop.permute.xlu0 %2647
    %2649 = vrot.lane.b32.xlu0 %v392, 64
    %v2650 = vpop.permute.xlu0 %2649
    %v2660 = vsel %vm596, %v2616, 0
    %v2663 = vsel %vm596, %v2618, 0
    %v2666 = vsel %vm596, %v2620, 0
    %v2669 = vsel %vm596, %v2622, 0
    %v2672 = vsel %vm596, %v2624, 0
    %v2675 = vsel %vm596, %v2626, 0
    %v2678 = vsel %vm596, %v2628, 0
    %v2681 = vsel %vm596, %v2630, 0
    %v2684 = vsel %vm596, %v2632, 0
    %v2686 = vsel %vm750, %v2650, 0
    %2688 = vmatprep.subr.mxu0 0.0
    %2689 = vmatpush1.msra.mxu0 %v2634
    %2690 = vmatprep.subr.mxu0 0.0
    %2691 = vmatpush1.msra.mxu0 %v2636
    %2692 = vmatprep.subr.mxu0 0.0
    %2693 = vmatpush1.msra.mxu0 %v2638
    %2694 = vmatprep.subr.mxu0 0.0
    %2695 = vmatpush1.msra.mxu0 %v2640
    %2696 = vmatprep.subr.mxu0 0.0
    %2697 = vmatpush1.msra.mxu0 %v2642
    %2698 = vmatprep.subr.mxu0 0.0
    %2699 = vmatpush1.msra.mxu0 %v2644
    %2700 = vmatprep.subr.mxu0 0.0
    %2701 = vmatpush1.msra.mxu0 %v2646
    %2702 = vmatprep.subr.mxu0 0.0
    %2703 = vmatpush1.msra.mxu0 %v2648
    %2704 = vmatprep.subr.mxu0 0.0
    %2705 = vmatpush1.msra.mxu0 %v2686
    %2706 = vmatprep.subr.mxu0 0.0
    %2707 = vmatpush1.msra.mxu0 0.0
    %2708 = vmatprep.subr.mxu0 0.0
    %2709 = vmatpush1.msra.mxu0 0.0
    %2710 = vmatprep.subr.mxu0 0.0
    %2711 = vmatpush1.msra.mxu0 0.0
    %2712 = vmatprep.subr.mxu0 0.0
    %2713 = vmatpush1.msra.mxu0 0.0
    %2714 = vmatprep.subr.mxu0 0.0
    %2715 = vmatpush1.msra.mxu0 0.0
    %2716 = vmatprep.subr.mxu0 0.0
    %2717 = vmatpush1.msra.mxu0 0.0
    %2718 = vmatprep.subr.mxu0 0.0
    %2719 = vmatpush1.msra.mxu0 0.0
    %2720 = vmatprep.subr.mxu0 0.0
    %2721 = vmatpush1.msra.mxu0 0.0
    %2722 = vmatprep.subr.mxu0 0.0
    %2723 = vmatpush1.msra.mxu0 0.0
    %2724 = vmatprep.subr.mxu0 0.0
    %2725 = vmatpush1.msra.mxu0 0.0
    %2726 = vmatprep.subr.mxu0 0.0
    %2727 = vmatpush1.msra.mxu0 0.0
    %2728 = vmatprep.subr.mxu0 0.0
    %2729 = vmatpush1.msra.mxu0 0.0
    %2730 = vmatprep.subr.mxu0 0.0
    %2731 = vmatpush1.msra.mxu0 0.0
    %2732 = vmatprep.subr.mxu0 0.0
    %2733 = vmatpush1.msra.mxu0 0.0
    %2734 = vmatprep.subr.mxu0 0.0
    %2735 = vmatpush1.msra.mxu0 0.0
    %2736 = vmatprep.subr.mxu0 0.0
    %2737 = vmatpush1.msra.mxu0 0.0
    %2738 = vmatprep.subr.mxu0 0.0
    %2739 = vmatpush1.msra.mxu0 0.0
    %2740 = vmatprep.subr.mxu0 0.0
    %2741 = vmatpush1.msra.mxu0 0.0
    %2742 = vmatprep.subr.mxu0 0.0
    %2743 = vmatpush1.msra.mxu0 0.0
    %2744 = vmatprep.subr.mxu0 0.0
    %2745 = vmatpush1.msra.mxu0 0.0
    %2746 = vmatprep.subr.mxu0 0.0
    %2747 = vmatpush1.msra.mxu0 0.0
    %2748 = vmatprep.subr.mxu0 0.0
    %2749 = vmatpush1.msra.mxu0 0.0
    %2750 = vmatprep.subr.mxu0 0.0
    %2751 = vmatpush1.msra.mxu0 0.0
    %2752 = vmatprep.mubr.f32.mxu0 0.0
    %2753 = vmatmul.mubr.f32.gmra.mrb[0].mxu0 %v2660
    %v2754 = vpop.f32.mrb[0].mxu0
    %v2755 = vadd.f32 0.0, %v2754
    %v2756 = vpop.f32.mrb[0].mxu0
    %2757 = vmatprep.mubr.f32.mxu0 0.0
    %2758 = vmatmul.mubr.f32.gmra.mrb[0].mxu0 %v2663
    %v2759 = vpop.f32.mrb[0].mxu0
    %v2760 = vadd.f32 0.0, %v2759
    %v2761 = vpop.f32.mrb[0].mxu0
    %2762 = vmatprep.mubr.f32.mxu0 0.0
    %2763 = vmatmul.mubr.f32.gmra.mrb[0].mxu0 %v2666
    %v2764 = vpop.f32.mrb[0].mxu0
    %v2765 = vadd.f32 0.0, %v2764
    %v2766 = vpop.f32.mrb[0].mxu0
    %2767 = vmatprep.mubr.f32.mxu0 0.0
    %2768 = vmatmul.mubr.f32.gmra.mrb[0].mxu0 %v2669
    %v2769 = vpop.f32.mrb[0].mxu0
    %v2770 = vadd.f32 0.0, %v2769
    %v2771 = vpop.f32.mrb[0].mxu0
    %2772 = vmatprep.mubr.f32.mxu0 0.0
    %2773 = vmatmul.mubr.f32.gmra.mrb[0].mxu0 %v2672
    %v2774 = vpop.f32.mrb[0].mxu0
    %v2775 = vadd.f32 0.0, %v2774
    %v2776 = vpop.f32.mrb[0].mxu0
    %2777 = vmatprep.mubr.f32.mxu0 0.0
    %2778 = vmatmul.mubr.f32.gmra.mrb[0].mxu0 %v2675
    %v2779 = vpop.f32.mrb[0].mxu0
    %v2780 = vadd.f32 0.0, %v2779
    %v2781 = vpop.f32.mrb[0].mxu0
    %2782 = vmatprep.mubr.f32.mxu0 0.0
    %2783 = vmatmul.mubr.f32.gmra.mrb[0].mxu0 %v2678
    %v2784 = vpop.f32.mrb[0].mxu0
    %v2785 = vadd.f32 0.0, %v2784
    %v2786 = vpop.f32.mrb[0].mxu0
    %2787 = vmatprep.mubr.f32.mxu0 0.0
    %2788 = vmatmul.mubr.f32.gmra.mrb[0].mxu0 %v2681
    %v2789 = vpop.f32.mrb[0].mxu0
    %v2790 = vadd.f32 0.0, %v2789
    %v2791 = vpop.f32.mrb[0].mxu0
    %2792 = vmatprep.mubr.f32.mxu0 0.0
    %2793 = vmatmul.mubr.f32.gmra.mrb[0].mxu0 %v2684
    %v2794 = vpop.f32.mrb[0].mxu0
    %v2795 = vadd.f32 0.0, %v2794
    %v2796 = vpop.f32.mrb[0].mxu0
    %2797 = vdwg.mxu0
    %2798 = vst.msk [vmem:[#allocation3 + $0x48] sm:$0xff] %vm440, %v2755
    %2799 = vst.msk [vmem:[#allocation3 + $0x50] sm:$0xff] %vm440, %v2760
    %2800 = vst.msk [vmem:[#allocation3 + $0x58] sm:$0xff] %vm440, %v2765
    %2801 = vst.msk [vmem:[#allocation3 + $0x60] sm:$0xff] %vm440, %v2770
    %2802 = vst.msk [vmem:[#allocation3 + $0x68] sm:$0xff] %vm440, %v2775
    %2803 = vst.msk [vmem:[#allocation3 + $0x70] sm:$0xff] %vm440, %v2780
    %2804 = vst.msk [vmem:[#allocation3 + $0x78] sm:$0xff] %vm440, %v2785
    %2805 = vst.msk [vmem:[#allocation3 + $0x80] sm:$0xff] %vm440, %v2790
    %2806 = vst.msk [vmem:[#allocation3 + $0x88] sm:$0x1] %vm871, %v2795
    %2807 = vrot.lane.b32.xlu0 %v404, 120
    %v2808 = vpop.permute.xlu0 %2807
    %2809 = vrot.lane.b32.xlu0 %v405, 120
    %v2810 = vpop.permute.xlu0 %2809
    %2811 = vrot.lane.b32.xlu0 %v406, 120
    %v2812 = vpop.permute.xlu0 %2811
    %2813 = vrot.lane.b32.xlu0 %v407, 120
    %v2814 = vpop.permute.xlu0 %2813
    %2815 = vrot.lane.b32.xlu0 %v408, 120
    %v2816 = vpop.permute.xlu0 %2815
    %2817 = vrot.lane.b32.xlu0 %v409, 120
    %v2818 = vpop.permute.xlu0 %2817
    %2819 = vrot.lane.b32.xlu0 %v410, 120
    %v2820 = vpop.permute.xlu0 %2819
    %2821 = vrot.lane.b32.xlu0 %v411, 120
    %v2822 = vpop.permute.xlu0 %2821
    %2823 = vrot.lane.b32.xlu0 %v412, 120
    %v2824 = vpop.permute.xlu0 %2823
    %2825 = vrot.lane.b32.xlu0 %v352, 88
    %v2826 = vpop.permute.xlu0 %2825
    %2827 = vrot.lane.b32.xlu0 %v357, 88
    %v2828 = vpop.permute.xlu0 %2827
    %2829 = vrot.lane.b32.xlu0 %v362, 88
    %v2830 = vpop.permute.xlu0 %2829
    %2831 = vrot.lane.b32.xlu0 %v367, 88
    %v2832 = vpop.permute.xlu0 %2831
    %2833 = vrot.lane.b32.xlu0 %v372, 88
    %v2834 = vpop.permute.xlu0 %2833
    %2835 = vrot.lane.b32.xlu0 %v377, 88
    %v2836 = vpop.permute.xlu0 %2835
    %2837 = vrot.lane.b32.xlu0 %v382, 88
    %v2838 = vpop.permute.xlu0 %2837
    %2839 = vrot.lane.b32.xlu0 %v387, 88
    %v2840 = vpop.permute.xlu0 %2839
    %2841 = vrot.lane.b32.xlu0 %v392, 88
    %v2842 = vpop.permute.xlu0 %2841
    %v2843 = vsel %vm440, %v2808, 0
    %v2845 = vsel %vm440, %v2810, 0
    %v2847 = vsel %vm440, %v2812, 0
    %v2849 = vsel %vm440, %v2814, 0
    %v2851 = vsel %vm440, %v2816, 0
    %v2853 = vsel %vm440, %v2818, 0
    %v2855 = vsel %vm440, %v2820, 0
    %v2857 = vsel %vm440, %v2822, 0
    %v2859 = vsel %vm440, %v2824, 0
    %v2861 = vsel %vm440, %v2826, 0
    %v2863 = vsel %vm440, %v2828, 0
    %v2865 = vsel %vm440, %v2830, 0
    %v2867 = vsel %vm440, %v2832, 0
    %v2869 = vsel %vm440, %v2834, 0
    %v2871 = vsel %vm440, %v2836, 0
    %v2873 = vsel %vm440, %v2838, 0
    %v2875 = vsel %vm440, %v2840, 0
    %v2877 = vsel %vm440, %v2842, 0
    %2879 = vmatprep.subr.mxu0 0.0
    %2880 = vmatpush1.xpose.msra.mxu0 %v2861
    %2881 = vmatprep.subr.mxu0 0.0
    %2882 = vmatpush1.xpose.msra.mxu0 %v2863
    %2883 = vmatprep.subr.mxu0 0.0
    %2884 = vmatpush1.xpose.msra.mxu0 %v2865
    %2885 = vmatprep.subr.mxu0 0.0
    %2886 = vmatpush1.xpose.msra.mxu0 %v2867
    %2887 = vmatprep.subr.mxu0 0.0
    %2888 = vmatpush1.xpose.msra.mxu0 %v2869
    %2889 = vmatprep.subr.mxu0 0.0
    %2890 = vmatpush1.xpose.msra.mxu0 %v2871
    %2891 = vmatprep.subr.mxu0 0.0
    %2892 = vmatpush1.xpose.msra.mxu0 %v2873
    %2893 = vmatprep.subr.mxu0 0.0
    %2894 = vmatpush1.xpose.msra.mxu0 %v2875
    %2895 = vmatprep.subr.mxu0 0.0
    %2896 = vmatpush1.xpose.msra.mxu0 %v2877
    %2897 = vmatprep.subr.mxu0 0.0
    %2898 = vmatpush1.xpose.msra.mxu0 0.0
    %2899 = vmatprep.subr.mxu0 0.0
    %2900 = vmatpush1.xpose.msra.mxu0 0.0
    %2901 = vmatprep.subr.mxu0 0.0
    %2902 = vmatpush1.xpose.msra.mxu0 0.0
    %2903 = vmatprep.subr.mxu0 0.0
    %2904 = vmatpush1.xpose.msra.mxu0 0.0
    %2905 = vmatprep.subr.mxu0 0.0
    %2906 = vmatpush1.xpose.msra.mxu0 0.0
    %2907 = vmatprep.subr.mxu0 0.0
    %2908 = vmatpush1.xpose.msra.mxu0 0.0
    %2909 = vmatprep.subr.mxu0 0.0
    %2910 = vmatpush1.xpose.msra.mxu0 0.0
    %2911 = vmatprep.subr.mxu0 0.0
    %2912 = vmatpush1.xpose.msra.mxu0 0.0
    %2913 = vmatprep.subr.mxu0 0.0
    %2914 = vmatpush1.xpose.msra.mxu0 0.0
    %2915 = vmatprep.subr.mxu0 0.0
    %2916 = vmatpush1.xpose.msra.mxu0 0.0
    %2917 = vmatprep.subr.mxu0 0.0
    %2918 = vmatpush1.xpose.msra.mxu0 0.0
    %2919 = vmatprep.subr.mxu0 0.0
    %2920 = vmatpush1.xpose.msra.mxu0 0.0
    %2921 = vmatprep.subr.mxu0 0.0
    %2922 = vmatpush1.xpose.msra.mxu0 0.0
    %2923 = vmatprep.subr.mxu0 0.0
    %2924 = vmatpush1.xpose.msra.mxu0 0.0
    %2925 = vmatprep.subr.mxu0 0.0
    %2926 = vmatpush1.xpose.msra.mxu0 0.0
    %2927 = vmatprep.subr.mxu0 0.0
    %2928 = vmatpush1.xpose.msra.mxu0 0.0
    %2929 = vmatprep.subr.mxu0 0.0
    %2930 = vmatpush1.xpose.msra.mxu0 0.0
    %2931 = vmatprep.subr.mxu0 0.0
    %2932 = vmatpush1.xpose.msra.mxu0 0.0
    %2933 = vmatprep.subr.mxu0 0.0
    %2934 = vmatpush1.xpose.msra.mxu0 0.0
    %2935 = vmatprep.subr.mxu0 0.0
    %2936 = vmatpush1.xpose.msra.mxu0 0.0
    %2937 = vmatprep.subr.mxu0 0.0
    %2938 = vmatpush1.xpose.msra.mxu0 0.0
    %2939 = vmatprep.subr.mxu0 0.0
    %2940 = vmatpush1.xpose.msra.mxu0 0.0
    %2941 = vmatprep.subr.mxu0 0.0
    %2942 = vmatpush1.xpose.msra.mxu0 0.0
    %2943 = vmatprep.mubr.f32.mxu0 0.0
    %2944 = vmatmul.mubr.f32.gmra.mrb[0].mxu0 %v2843
    %v2945 = vpop.f32.mrb[0].mxu0
    %v2946 = vadd.f32 0.0, %v2945
    %v2947 = vpop.f32.mrb[0].mxu0
    %2948 = vmatprep.mubr.f32.mxu0 0.0
    %2949 = vmatmul.mubr.f32.gmra.mrb[0].mxu0 %v2845
    %v2950 = vpop.f32.mrb[0].mxu0
    %v2951 = vadd.f32 0.0, %v2950
    %v2952 = vpop.f32.mrb[0].mxu0
    %2953 = vmatprep.mubr.f32.mxu0 0.0
    %2954 = vmatmul.mubr.f32.gmra.mrb[0].mxu0 %v2847
    %v2955 = vpop.f32.mrb[0].mxu0
    %v2956 = vadd.f32 0.0, %v2955
    %v2957 = vpop.f32.mrb[0].mxu0
    %2958 = vmatprep.mubr.f32.mxu0 0.0
    %2959 = vmatmul.mubr.f32.gmra.mrb[0].mxu0 %v2849
    %v2960 = vpop.f32.mrb[0].mxu0
    %v2961 = vadd.f32 0.0, %v2960
    %v2962 = vpop.f32.mrb[0].mxu0
    %2963 = vmatprep.mubr.f32.mxu0 0.0
    %2964 = vmatmul.mubr.f32.gmra.mrb[0].mxu0 %v2851
    %v2965 = vpop.f32.mrb[0].mxu0
    %v2966 = vadd.f32 0.0, %v2965
    %v2967 = vpop.f32.mrb[0].mxu0
    %2968 = vmatprep.mubr.f32.mxu0 0.0
    %2969 = vmatmul.mubr.f32.gmra.mrb[0].mxu0 %v2853
    %v2970 = vpop.f32.mrb[0].mxu0
    %v2971 = vadd.f32 0.0, %v2970
    %v2972 = vpop.f32.mrb[0].mxu0
    %2973 = vmatprep.mubr.f32.mxu0 0.0
    %2974 = vmatmul.mubr.f32.gmra.mrb[0].mxu0 %v2855
    %v2975 = vpop.f32.mrb[0].mxu0
    %v2976 = vadd.f32 0.0, %v2975
    %v2977 = vpop.f32.mrb[0].mxu0
    %2978 = vmatprep.mubr.f32.mxu0 0.0
    %2979 = vmatmul.mubr.f32.gmra.mrb[0].mxu0 %v2857
    %v2980 = vpop.f32.mrb[0].mxu0
    %v2981 = vadd.f32 0.0, %v2980
    %v2982 = vpop.f32.mrb[0].mxu0
    %2983 = vmatprep.mubr.f32.mxu0 0.0
    %2984 = vmatmul.mubr.f32.gmra.mrb[0].mxu0 %v2859
    %v2985 = vpop.f32.mrb[0].mxu0
    %v2986 = vadd.f32 0.0, %v2985
    %v2987 = vpop.f32.mrb[0].mxu0
    %2988 = vdwg.mxu0
    %v2989 = vsel %vm596, %v2946, -inf
    %2990 = vmax.xlane.f32.xlu0 %v2989
    %v2991 = vpop.xlane.xlu0 %2990
    %v2992 = vsel %vm596, %v2951, -inf
    %2993 = vmax.xlane.f32.xlu0 %v2992
    %v2994 = vpop.xlane.xlu0 %2993
    %v2995 = vsel %vm596, %v2956, -inf
    %2996 = vmax.xlane.f32.xlu0 %v2995
    %v2997 = vpop.xlane.xlu0 %2996
    %v2998 = vsel %vm596, %v2961, -inf
    %2999 = vmax.xlane.f32.xlu0 %v2998
    %v3000 = vpop.xlane.xlu0 %2999
    %v3001 = vsel %vm596, %v2966, -inf
    %3002 = vmax.xlane.f32.xlu0 %v3001
    %v3003 = vpop.xlane.xlu0 %3002
    %v3004 = vsel %vm596, %v2971, -inf
    %3005 = vmax.xlane.f32.xlu0 %v3004
    %v3006 = vpop.xlane.xlu0 %3005
    %v3007 = vsel %vm596, %v2976, -inf
    %3008 = vmax.xlane.f32.xlu0 %v3007
    %v3009 = vpop.xlane.xlu0 %3008
    %v3010 = vsel %vm596, %v2981, -inf
    %3011 = vmax.xlane.f32.xlu0 %v3010
    %v3012 = vpop.xlane.xlu0 %3011
    %v3013 = vsel %vm621, %v2986, -inf
    %3014 = vmax.xlane.f32.xlu0 %v3013
    %v3015 = vpop.xlane.xlu0 %3014
    %v3016 = vsub.f32 %v2946, %v2991
    %v3017 = vsub.f32 %v2951, %v2994
    %v3018 = vsub.f32 %v2956, %v2997
    %v3019 = vsub.f32 %v2961, %v3000
    %v3020 = vsub.f32 %v2966, %v3003
    %v3021 = vsub.f32 %v2971, %v3006
    %v3022 = vsub.f32 %v2976, %v3009
    %v3023 = vsub.f32 %v2981, %v3012
    %v3024 = vsub.f32 %v2986, %v3015
    %v3025 = vmul.f32 %v3016, 1.442695
    %v3026 = vpow.pop %v3025
    %v3027 = vmul.f32 %v3017, 1.442695
    %v3028 = vpow.pop %v3027
    %v3029 = vmul.f32 %v3018, 1.442695
    %v3030 = vpow.pop %v3029
    %v3031 = vmul.f32 %v3019, 1.442695
    %v3032 = vpow.pop %v3031
    %v3033 = vmul.f32 %v3020, 1.442695
    %v3034 = vpow.pop %v3033
    %v3035 = vmul.f32 %v3021, 1.442695
    %v3036 = vpow.pop %v3035
    %v3037 = vmul.f32 %v3022, 1.442695
    %v3038 = vpow.pop %v3037
    %v3039 = vmul.f32 %v3023, 1.442695
    %v3040 = vpow.pop %v3039
    %v3041 = vmul.f32 %v3024, 1.442695
    %v3042 = vpow.pop %v3041
    %v3043 = vsel %vm596, %v3026, 0.0
    %3044 = vadd.xlane.f32.xlu0 %v3043
    %v3045 = vpop.xlane.xlu0 %3044
    %v3046 = vsel %vm596, %v3028, 0.0
    %3047 = vadd.xlane.f32.xlu0 %v3046
    %v3048 = vpop.xlane.xlu0 %3047
    %v3049 = vsel %vm596, %v3030, 0.0
    %3050 = vadd.xlane.f32.xlu0 %v3049
    %v3051 = vpop.xlane.xlu0 %3050
    %v3052 = vsel %vm596, %v3032, 0.0
    %3053 = vadd.xlane.f32.xlu0 %v3052
    %v3054 = vpop.xlane.xlu0 %3053
    %v3055 = vsel %vm596, %v3034, 0.0
    %3056 = vadd.xlane.f32.xlu0 %v3055
    %v3057 = vpop.xlane.xlu0 %3056
    %v3058 = vsel %vm596, %v3036, 0.0
    %3059 = vadd.xlane.f32.xlu0 %v3058
    %v3060 = vpop.xlane.xlu0 %3059
    %v3061 = vsel %vm596, %v3038, 0.0
    %3062 = vadd.xlane.f32.xlu0 %v3061
    %v3063 = vpop.xlane.xlu0 %3062
    %v3064 = vsel %vm596, %v3040, 0.0
    %3065 = vadd.xlane.f32.xlu0 %v3064
    %v3066 = vpop.xlane.xlu0 %3065
    %v3067 = vsel %vm621, %v3042, 0.0
    %3068 = vadd.xlane.f32.xlu0 %v3067
    %v3069 = vpop.xlane.xlu0 %3068
    %v3070 = vrcp.pop %v3045
    %v3071 = vmul.f32 %v3026, %v3070
    %v3072 = vrcp.pop %v3048
    %v3073 = vmul.f32 %v3028, %v3072
    %v3074 = vrcp.pop %v3051
    %v3075 = vmul.f32 %v3030, %v3074
    %v3076 = vrcp.pop %v3054
    %v3077 = vmul.f32 %v3032, %v3076
    %v3078 = vrcp.pop %v3057
    %v3079 = vmul.f32 %v3034, %v3078
    %v3080 = vrcp.pop %v3060
    %v3081 = vmul.f32 %v3036, %v3080
    %v3082 = vrcp.pop %v3063
    %v3083 = vmul.f32 %v3038, %v3082
    %v3084 = vrcp.pop %v3066
    %v3085 = vmul.f32 %v3040, %v3084
    %v3086 = vrcp.pop %v3069
    %v3087 = vmul.f32 %v3042, %v3086
    %3088 = vrot.lane.b32.xlu0 %v352, 56
    %v3089 = vpop.permute.xlu0 %3088
    %3090 = vrot.lane.b32.xlu0 %v357, 56
    %v3091 = vpop.permute.xlu0 %3090
    %3092 = vrot.lane.b32.xlu0 %v362, 56
    %v3093 = vpop.permute.xlu0 %3092
    %3094 = vrot.lane.b32.xlu0 %v367, 56
    %v3095 = vpop.permute.xlu0 %3094
    %3096 = vrot.lane.b32.xlu0 %v372, 56
    %v3097 = vpop.permute.xlu0 %3096
    %3098 = vrot.lane.b32.xlu0 %v377, 56
    %v3099 = vpop.permute.xlu0 %3098
    %3100 = vrot.lane.b32.xlu0 %v382, 56
    %v3101 = vpop.permute.xlu0 %3100
    %3102 = vrot.lane.b32.xlu0 %v387, 56
    %v3103 = vpop.permute.xlu0 %3102
    %3104 = vrot.lane.b32.xlu0 %v392, 56
    %v3105 = vpop.permute.xlu0 %3104
    %v3115 = vsel %vm596, %v3071, 0
    %v3118 = vsel %vm596, %v3073, 0
    %v3121 = vsel %vm596, %v3075, 0
    %v3124 = vsel %vm596, %v3077, 0
    %v3127 = vsel %vm596, %v3079, 0
    %v3130 = vsel %vm596, %v3081, 0
    %v3133 = vsel %vm596, %v3083, 0
    %v3136 = vsel %vm596, %v3085, 0
    %v3139 = vsel %vm596, %v3087, 0
    %v3141 = vsel %vm750, %v3105, 0
    %3143 = vmatprep.subr.mxu0 0.0
    %3144 = vmatpush1.msra.mxu0 %v3089
    %3145 = vmatprep.subr.mxu0 0.0
    %3146 = vmatpush1.msra.mxu0 %v3091
    %3147 = vmatprep.subr.mxu0 0.0
    %3148 = vmatpush1.msra.mxu0 %v3093
    %3149 = vmatprep.subr.mxu0 0.0
    %3150 = vmatpush1.msra.mxu0 %v3095
    %3151 = vmatprep.subr.mxu0 0.0
    %3152 = vmatpush1.msra.mxu0 %v3097
    %3153 = vmatprep.subr.mxu0 0.0
    %3154 = vmatpush1.msra.mxu0 %v3099
    %3155 = vmatprep.subr.mxu0 0.0
    %3156 = vmatpush1.msra.mxu0 %v3101
    %3157 = vmatprep.subr.mxu0 0.0
    %3158 = vmatpush1.msra.mxu0 %v3103
    %3159 = vmatprep.subr.mxu0 0.0
    %3160 = vmatpush1.msra.mxu0 %v3141
    %3161 = vmatprep.subr.mxu0 0.0
    %3162 = vmatpush1.msra.mxu0 0.0
    %3163 = vmatprep.subr.mxu0 0.0
    %3164 = vmatpush1.msra.mxu0 0.0
    %3165 = vmatprep.subr.mxu0 0.0
    %3166 = vmatpush1.msra.mxu0 0.0
    %3167 = vmatprep.subr.mxu0 0.0
    %3168 = vmatpush1.msra.mxu0 0.0
    %3169 = vmatprep.subr.mxu0 0.0
    %3170 = vmatpush1.msra.mxu0 0.0
    %3171 = vmatprep.subr.mxu0 0.0
    %3172 = vmatpush1.msra.mxu0 0.0
    %3173 = vmatprep.subr.mxu0 0.0
    %3174 = vmatpush1.msra.mxu0 0.0
    %3175 = vmatprep.subr.mxu0 0.0
    %3176 = vmatpush1.msra.mxu0 0.0
    %3177 = vmatprep.subr.mxu0 0.0
    %3178 = vmatpush1.msra.mxu0 0.0
    %3179 = vmatprep.subr.mxu0 0.0
    %3180 = vmatpush1.msra.mxu0 0.0
    %3181 = vmatprep.subr.mxu0 0.0
    %3182 = vmatpush1.msra.mxu0 0.0
    %3183 = vmatprep.subr.mxu0 0.0
    %3184 = vmatpush1.msra.mxu0 0.0
    %3185 = vmatprep.subr.mxu0 0.0
    %3186 = vmatpush1.msra.mxu0 0.0
    %3187 = vmatprep.subr.mxu0 0.0
    %3188 = vmatpush1.msra.mxu0 0.0
    %3189 = vmatprep.subr.mxu0 0.0
    %3190 = vmatpush1.msra.mxu0 0.0
    %3191 = vmatprep.subr.mxu0 0.0
    %3192 = vmatpush1.msra.mxu0 0.0
    %3193 = vmatprep.subr.mxu0 0.0
    %3194 = vmatpush1.msra.mxu0 0.0
    %3195 = vmatprep.subr.mxu0 0.0
    %3196 = vmatpush1.msra.mxu0 0.0
    %3197 = vmatprep.subr.mxu0 0.0
    %3198 = vmatpush1.msra.mxu0 0.0
    %3199 = vmatprep.subr.mxu0 0.0
    %3200 = vmatpush1.msra.mxu0 0.0
    %3201 = vmatprep.subr.mxu0 0.0
    %3202 = vmatpush1.msra.mxu0 0.0
    %3203 = vmatprep.subr.mxu0 0.0
    %3204 = vmatpush1.msra.mxu0 0.0
    %3205 = vmatprep.subr.mxu0 0.0
    %3206 = vmatpush1.msra.mxu0 0.0
    %3207 = vmatprep.mubr.f32.mxu0 0.0
    %3208 = vmatmul.mubr.f32.gmra.mrb[0].mxu0 %v3115
    %v3209 = vpop.f32.mrb[0].mxu0
    %v3210 = vadd.f32 0.0, %v3209
    %v3211 = vpop.f32.mrb[0].mxu0
    %3212 = vmatprep.mubr.f32.mxu0 0.0
    %3213 = vmatmul.mubr.f32.gmra.mrb[0].mxu0 %v3118
    %v3214 = vpop.f32.mrb[0].mxu0
    %v3215 = vadd.f32 0.0, %v3214
    %v3216 = vpop.f32.mrb[0].mxu0
    %3217 = vmatprep.mubr.f32.mxu0 0.0
    %3218 = vmatmul.mubr.f32.gmra.mrb[0].mxu0 %v3121
    %v3219 = vpop.f32.mrb[0].mxu0
    %v3220 = vadd.f32 0.0, %v3219
    %v3221 = vpop.f32.mrb[0].mxu0
    %3222 = vmatprep.mubr.f32.mxu0 0.0
    %3223 = vmatmul.mubr.f32.gmra.mrb[0].mxu0 %v3124
    %v3224 = vpop.f32.mrb[0].mxu0
    %v3225 = vadd.f32 0.0, %v3224
    %v3226 = vpop.f32.mrb[0].mxu0
    %3227 = vmatprep.mubr.f32.mxu0 0.0
    %3228 = vmatmul.mubr.f32.gmra.mrb[0].mxu0 %v3127
    %v3229 = vpop.f32.mrb[0].mxu0
    %v3230 = vadd.f32 0.0, %v3229
    %v3231 = vpop.f32.mrb[0].mxu0
    %3232 = vmatprep.mubr.f32.mxu0 0.0
    %3233 = vmatmul.mubr.f32.gmra.mrb[0].mxu0 %v3130
    %v3234 = vpop.f32.mrb[0].mxu0
    %v3235 = vadd.f32 0.0, %v3234
    %v3236 = vpop.f32.mrb[0].mxu0
    %3237 = vmatprep.mubr.f32.mxu0 0.0
    %3238 = vmatmul.mubr.f32.gmra.mrb[0].mxu0 %v3133
    %v3239 = vpop.f32.mrb[0].mxu0
    %v3240 = vadd.f32 0.0, %v3239
    %v3241 = vpop.f32.mrb[0].mxu0
    %3242 = vmatprep.mubr.f32.mxu0 0.0
    %3243 = vmatmul.mubr.f32.gmra.mrb[0].mxu0 %v3136
    %v3244 = vpop.f32.mrb[0].mxu0
    %v3245 = vadd.f32 0.0, %v3244
    %v3246 = vpop.f32.mrb[0].mxu0
    %3247 = vmatprep.mubr.f32.mxu0 0.0
    %3248 = vmatmul.mubr.f32.gmra.mrb[0].mxu0 %v3139
    %v3249 = vpop.f32.mrb[0].mxu0
    %v3250 = vadd.f32 0.0, %v3249
    %v3251 = vpop.f32.mrb[0].mxu0
    %3252 = vdwg.mxu0
    %3262 = vrot.lane.b32.xlu0 %v3210, 8
    %v3263 = vpop.permute.xlu0 %3262
    %3264 = vrot.lane.b32.xlu0 %v3215, 8
    %v3265 = vpop.permute.xlu0 %3264
    %3266 = vrot.lane.b32.xlu0 %v3220, 8
    %v3267 = vpop.permute.xlu0 %3266
    %3268 = vrot.lane.b32.xlu0 %v3225, 8
    %v3269 = vpop.permute.xlu0 %3268
    %3270 = vrot.lane.b32.xlu0 %v3230, 8
    %v3271 = vpop.permute.xlu0 %3270
    %3272 = vrot.lane.b32.xlu0 %v3235, 8
    %v3273 = vpop.permute.xlu0 %3272
    %3274 = vrot.lane.b32.xlu0 %v3240, 8
    %v3275 = vpop.permute.xlu0 %3274
    %3276 = vrot.lane.b32.xlu0 %v3245, 8
    %v3277 = vpop.permute.xlu0 %3276
    %3278 = vrot.lane.b32.xlu0 %v3250, 8
    %v3279 = vpop.permute.xlu0 %3278
    %3289 = vst.msk [vmem:[#allocation3 + $0x48] sm:$0xff] %vm1355, %v3263
    %3290 = vst.msk [vmem:[#allocation3 + $0x50] sm:$0xff] %vm1355, %v3265
    %3291 = vst.msk [vmem:[#allocation3 + $0x58] sm:$0xff] %vm1355, %v3267
    %3292 = vst.msk [vmem:[#allocation3 + $0x60] sm:$0xff] %vm1355, %v3269
    %3293 = vst.msk [vmem:[#allocation3 + $0x68] sm:$0xff] %vm1355, %v3271
    %3294 = vst.msk [vmem:[#allocation3 + $0x70] sm:$0xff] %vm1355, %v3273
    %3295 = vst.msk [vmem:[#allocation3 + $0x78] sm:$0xff] %vm1355, %v3275
    %3296 = vst.msk [vmem:[#allocation3 + $0x80] sm:$0xff] %vm1355, %v3277
    %3297 = vst.msk [vmem:[#allocation3 + $0x88] sm:$0x1] %vm1364, %v3279
    %3298 = vrot.lane.b32.xlu0 %v404, 112
    %v3299 = vpop.permute.xlu0 %3298
    %3300 = vrot.lane.b32.xlu0 %v405, 112
    %v3301 = vpop.permute.xlu0 %3300
    %3302 = vrot.lane.b32.xlu0 %v406, 112
    %v3303 = vpop.permute.xlu0 %3302
    %3304 = vrot.lane.b32.xlu0 %v407, 112
    %v3305 = vpop.permute.xlu0 %3304
    %3306 = vrot.lane.b32.xlu0 %v408, 112
    %v3307 = vpop.permute.xlu0 %3306
    %3308 = vrot.lane.b32.xlu0 %v409, 112
    %v3309 = vpop.permute.xlu0 %3308
    %3310 = vrot.lane.b32.xlu0 %v410, 112
    %v3311 = vpop.permute.xlu0 %3310
    %3312 = vrot.lane.b32.xlu0 %v411, 112
    %v3313 = vpop.permute.xlu0 %3312
    %3314 = vrot.lane.b32.xlu0 %v412, 112
    %v3315 = vpop.permute.xlu0 %3314
    %3316 = vrot.lane.b32.xlu0 %v352, 80
    %v3317 = vpop.permute.xlu0 %3316
    %3318 = vrot.lane.b32.xlu0 %v357, 80
    %v3319 = vpop.permute.xlu0 %3318
    %3320 = vrot.lane.b32.xlu0 %v362, 80
    %v3321 = vpop.permute.xlu0 %3320
    %3322 = vrot.lane.b32.xlu0 %v367, 80
    %v3323 = vpop.permute.xlu0 %3322
    %3324 = vrot.lane.b32.xlu0 %v372, 80
    %v3325 = vpop.permute.xlu0 %3324
    %3326 = vrot.lane.b32.xlu0 %v377, 80
    %v3327 = vpop.permute.xlu0 %3326
    %3328 = vrot.lane.b32.xlu0 %v382, 80
    %v3329 = vpop.permute.xlu0 %3328
    %3330 = vrot.lane.b32.xlu0 %v387, 80
    %v3331 = vpop.permute.xlu0 %3330
    %3332 = vrot.lane.b32.xlu0 %v392, 80
    %v3333 = vpop.permute.xlu0 %3332
    %v3334 = vsel %vm440, %v3299, 0
    %v3336 = vsel %vm440, %v3301, 0
    %v3338 = vsel %vm440, %v3303, 0
    %v3340 = vsel %vm440, %v3305, 0
    %v3342 = vsel %vm440, %v3307, 0
    %v3344 = vsel %vm440, %v3309, 0
    %v3346 = vsel %vm440, %v3311, 0
    %v3348 = vsel %vm440, %v3313, 0
    %v3350 = vsel %vm440, %v3315, 0
    %v3352 = vsel %vm440, %v3317, 0
    %v3354 = vsel %vm440, %v3319, 0
    %v3356 = vsel %vm440, %v3321, 0
    %v3358 = vsel %vm440, %v3323, 0
    %v3360 = vsel %vm440, %v3325, 0
    %v3362 = vsel %vm440, %v3327, 0
    %v3364 = vsel %vm440, %v3329, 0
    %v3366 = vsel %vm440, %v3331, 0
    %v3368 = vsel %vm440, %v3333, 0
    %3370 = vmatprep.subr.mxu0 0.0
    %3371 = vmatpush1.xpose.msra.mxu0 %v3352
    %3372 = vmatprep.subr.mxu0 0.0
    %3373 = vmatpush1.xpose.msra.mxu0 %v3354
    %3374 = vmatprep.subr.mxu0 0.0
    %3375 = vmatpush1.xpose.msra.mxu0 %v3356
    %3376 = vmatprep.subr.mxu0 0.0
    %3377 = vmatpush1.xpose.msra.mxu0 %v3358
    %3378 = vmatprep.subr.mxu0 0.0
    %3379 = vmatpush1.xpose.msra.mxu0 %v3360
    %3380 = vmatprep.subr.mxu0 0.0
    %3381 = vmatpush1.xpose.msra.mxu0 %v3362
    %3382 = vmatprep.subr.mxu0 0.0
    %3383 = vmatpush1.xpose.msra.mxu0 %v3364
    %3384 = vmatprep.subr.mxu0 0.0
    %3385 = vmatpush1.xpose.msra.mxu0 %v3366
    %3386 = vmatprep.subr.mxu0 0.0
    %3387 = vmatpush1.xpose.msra.mxu0 %v3368
    %3388 = vmatprep.subr.mxu0 0.0
    %3389 = vmatpush1.xpose.msra.mxu0 0.0
    %3390 = vmatprep.subr.mxu0 0.0
    %3391 = vmatpush1.xpose.msra.mxu0 0.0
    %3392 = vmatprep.subr.mxu0 0.0
    %3393 = vmatpush1.xpose.msra.mxu0 0.0
    %3394 = vmatprep.subr.mxu0 0.0
    %3395 = vmatpush1.xpose.msra.mxu0 0.0
    %3396 = vmatprep.subr.mxu0 0.0
    %3397 = vmatpush1.xpose.msra.mxu0 0.0
    %3398 = vmatprep.subr.mxu0 0.0
    %3399 = vmatpush1.xpose.msra.mxu0 0.0
    %3400 = vmatprep.subr.mxu0 0.0
    %3401 = vmatpush1.xpose.msra.mxu0 0.0
    %3402 = vmatprep.subr.mxu0 0.0
    %3403 = vmatpush1.xpose.msra.mxu0 0.0
    %3404 = vmatprep.subr.mxu0 0.0
    %3405 = vmatpush1.xpose.msra.mxu0 0.0
    %3406 = vmatprep.subr.mxu0 0.0
    %3407 = vmatpush1.xpose.msra.mxu0 0.0
    %3408 = vmatprep.subr.mxu0 0.0
    %3409 = vmatpush1.xpose.msra.mxu0 0.0
    %3410 = vmatprep.subr.mxu0 0.0
    %3411 = vmatpush1.xpose.msra.mxu0 0.0
    %3412 = vmatprep.subr.mxu0 0.0
    %3413 = vmatpush1.xpose.msra.mxu0 0.0
    %3414 = vmatprep.subr.mxu0 0.0
    %3415 = vmatpush1.xpose.msra.mxu0 0.0
    %3416 = vmatprep.subr.mxu0 0.0
    %3417 = vmatpush1.xpose.msra.mxu0 0.0
    %3418 = vmatprep.subr.mxu0 0.0
    %3419 = vmatpush1.xpose.msra.mxu0 0.0
    %3420 = vmatprep.subr.mxu0 0.0
    %3421 = vmatpush1.xpose.msra.mxu0 0.0
    %3422 = vmatprep.subr.mxu0 0.0
    %3423 = vmatpush1.xpose.msra.mxu0 0.0
    %3424 = vmatprep.subr.mxu0 0.0
    %3425 = vmatpush1.xpose.msra.mxu0 0.0
    %3426 = vmatprep.subr.mxu0 0.0
    %3427 = vmatpush1.xpose.msra.mxu0 0.0
    %3428 = vmatprep.subr.mxu0 0.0
    %3429 = vmatpush1.xpose.msra.mxu0 0.0
    %3430 = vmatprep.subr.mxu0 0.0
    %3431 = vmatpush1.xpose.msra.mxu0 0.0
    %3432 = vmatprep.subr.mxu0 0.0
    %3433 = vmatpush1.xpose.msra.mxu0 0.0
    %3434 = vmatprep.mubr.f32.mxu0 0.0
    %3435 = vmatmul.mubr.f32.gmra.mrb[0].mxu0 %v3334
    %v3436 = vpop.f32.mrb[0].mxu0
    %v3437 = vadd.f32 0.0, %v3436
    %v3438 = vpop.f32.mrb[0].mxu0
    %3439 = vmatprep.mubr.f32.mxu0 0.0
    %3440 = vmatmul.mubr.f32.gmra.mrb[0].mxu0 %v3336
    %v3441 = vpop.f32.mrb[0].mxu0
    %v3442 = vadd.f32 0.0, %v3441
    %v3443 = vpop.f32.mrb[0].mxu0
    %3444 = vmatprep.mubr.f32.mxu0 0.0
    %3445 = vmatmul.mubr.f32.gmra.mrb[0].mxu0 %v3338
    %v3446 = vpop.f32.mrb[0].mxu0
    %v3447 = vadd.f32 0.0, %v3446
    %v3448 = vpop.f32.mrb[0].mxu0
    %3449 = vmatprep.mubr.f32.mxu0 0.0
    %3450 = vmatmul.mubr.f32.gmra.mrb[0].mxu0 %v3340
    %v3451 = vpop.f32.mrb[0].mxu0
    %v3452 = vadd.f32 0.0, %v3451
    %v3453 = vpop.f32.mrb[0].mxu0
    %3454 = vmatprep.mubr.f32.mxu0 0.0
    %3455 = vmatmul.mubr.f32.gmra.mrb[0].mxu0 %v3342
    %v3456 = vpop.f32.mrb[0].mxu0
    %v3457 = vadd.f32 0.0, %v3456
    %v3458 = vpop.f32.mrb[0].mxu0
    %3459 = vmatprep.mubr.f32.mxu0 0.0
    %3460 = vmatmul.mubr.f32.gmra.mrb[0].mxu0 %v3344
    %v3461 = vpop.f32.mrb[0].mxu0
    %v3462 = vadd.f32 0.0, %v3461
    %v3463 = vpop.f32.mrb[0].mxu0
    %3464 = vmatprep.mubr.f32.mxu0 0.0
    %3465 = vmatmul.mubr.f32.gmra.mrb[0].mxu0 %v3346
    %v3466 = vpop.f32.mrb[0].mxu0
    %v3467 = vadd.f32 0.0, %v3466
    %v3468 = vpop.f32.mrb[0].mxu0
    %3469 = vmatprep.mubr.f32.mxu0 0.0
    %3470 = vmatmul.mubr.f32.gmra.mrb[0].mxu0 %v3348
    %v3471 = vpop.f32.mrb[0].mxu0
    %v3472 = vadd.f32 0.0, %v3471
    %v3473 = vpop.f32.mrb[0].mxu0
    %3474 = vmatprep.mubr.f32.mxu0 0.0
    %3475 = vmatmul.mubr.f32.gmra.mrb[0].mxu0 %v3350
    %v3476 = vpop.f32.mrb[0].mxu0
    %v3477 = vadd.f32 0.0, %v3476
    %v3478 = vpop.f32.mrb[0].mxu0
    %3479 = vdwg.mxu0
    %v3480 = vsel %vm596, %v3437, -inf
    %3481 = vmax.xlane.f32.xlu0 %v3480
    %v3482 = vpop.xlane.xlu0 %3481
    %v3483 = vsel %vm596, %v3442, -inf
    %3484 = vmax.xlane.f32.xlu0 %v3483
    %v3485 = vpop.xlane.xlu0 %3484
    %v3486 = vsel %vm596, %v3447, -inf
    %3487 = vmax.xlane.f32.xlu0 %v3486
    %v3488 = vpop.xlane.xlu0 %3487
    %v3489 = vsel %vm596, %v3452, -inf
    %3490 = vmax.xlane.f32.xlu0 %v3489
    %v3491 = vpop.xlane.xlu0 %3490
    %v3492 = vsel %vm596, %v3457, -inf
    %3493 = vmax.xlane.f32.xlu0 %v3492
    %v3494 = vpop.xlane.xlu0 %3493
    %v3495 = vsel %vm596, %v3462, -inf
    %3496 = vmax.xlane.f32.xlu0 %v3495
    %v3497 = vpop.xlane.xlu0 %3496
    %v3498 = vsel %vm596, %v3467, -inf
    %3499 = vmax.xlane.f32.xlu0 %v3498
    %v3500 = vpop.xlane.xlu0 %3499
    %v3501 = vsel %vm596, %v3472, -inf
    %3502 = vmax.xlane.f32.xlu0 %v3501
    %v3503 = vpop.xlane.xlu0 %3502
    %v3504 = vsel %vm621, %v3477, -inf
    %3505 = vmax.xlane.f32.xlu0 %v3504
    %v3506 = vpop.xlane.xlu0 %3505
    %v3507 = vsub.f32 %v3437, %v3482
    %v3508 = vsub.f32 %v3442, %v3485
    %v3509 = vsub.f32 %v3447, %v3488
    %v3510 = vsub.f32 %v3452, %v3491
    %v3511 = vsub.f32 %v3457, %v3494
    %v3512 = vsub.f32 %v3462, %v3497
    %v3513 = vsub.f32 %v3467, %v3500
    %v3514 = vsub.f32 %v3472, %v3503
    %v3515 = vsub.f32 %v3477, %v3506
    %v3516 = vmul.f32 %v3507, 1.442695
    %v3517 = vpow.pop %v3516
    %v3518 = vmul.f32 %v3508, 1.442695
    %v3519 = vpow.pop %v3518
    %v3520 = vmul.f32 %v3509, 1.442695
    %v3521 = vpow.pop %v3520
    %v3522 = vmul.f32 %v3510, 1.442695
    %v3523 = vpow.pop %v3522
    %v3524 = vmul.f32 %v3511, 1.442695
    %v3525 = vpow.pop %v3524
    %v3526 = vmul.f32 %v3512, 1.442695
    %v3527 = vpow.pop %v3526
    %v3528 = vmul.f32 %v3513, 1.442695
    %v3529 = vpow.pop %v3528
    %v3530 = vmul.f32 %v3514, 1.442695
    %v3531 = vpow.pop %v3530
    %v3532 = vmul.f32 %v3515, 1.442695
    %v3533 = vpow.pop %v3532
    %v3534 = vsel %vm596, %v3517, 0.0
    %3535 = vadd.xlane.f32.xlu0 %v3534
    %v3536 = vpop.xlane.xlu0 %3535
    %v3537 = vsel %vm596, %v3519, 0.0
    %3538 = vadd.xlane.f32.xlu0 %v3537
    %v3539 = vpop.xlane.xlu0 %3538
    %v3540 = vsel %vm596, %v3521, 0.0
    %3541 = vadd.xlane.f32.xlu0 %v3540
    %v3542 = vpop.xlane.xlu0 %3541
    %v3543 = vsel %vm596, %v3523, 0.0
    %3544 = vadd.xlane.f32.xlu0 %v3543
    %v3545 = vpop.xlane.xlu0 %3544
    %v3546 = vsel %vm596, %v3525, 0.0
    %3547 = vadd.xlane.f32.xlu0 %v3546
    %v3548 = vpop.xlane.xlu0 %3547
    %v3549 = vsel %vm596, %v3527, 0.0
    %3550 = vadd.xlane.f32.xlu0 %v3549
    %v3551 = vpop.xlane.xlu0 %3550
    %v3552 = vsel %vm596, %v3529, 0.0
    %3553 = vadd.xlane.f32.xlu0 %v3552
    %v3554 = vpop.xlane.xlu0 %3553
    %v3555 = vsel %vm596, %v3531, 0.0
    %3556 = vadd.xlane.f32.xlu0 %v3555
    %v3557 = vpop.xlane.xlu0 %3556
    %v3558 = vsel %vm621, %v3533, 0.0
    %3559 = vadd.xlane.f32.xlu0 %v3558
    %v3560 = vpop.xlane.xlu0 %3559
    %v3561 = vrcp.pop %v3536
    %v3562 = vmul.f32 %v3517, %v3561
    %v3563 = vrcp.pop %v3539
    %v3564 = vmul.f32 %v3519, %v3563
    %v3565 = vrcp.pop %v3542
    %v3566 = vmul.f32 %v3521, %v3565
    %v3567 = vrcp.pop %v3545
    %v3568 = vmul.f32 %v3523, %v3567
    %v3569 = vrcp.pop %v3548
    %v3570 = vmul.f32 %v3525, %v3569
    %v3571 = vrcp.pop %v3551
    %v3572 = vmul.f32 %v3527, %v3571
    %v3573 = vrcp.pop %v3554
    %v3574 = vmul.f32 %v3529, %v3573
    %v3575 = vrcp.pop %v3557
    %v3576 = vmul.f32 %v3531, %v3575
    %v3577 = vrcp.pop %v3560
    %v3578 = vmul.f32 %v3533, %v3577
    %3579 = vrot.lane.b32.xlu0 %v352, 48
    %v3580 = vpop.permute.xlu0 %3579
    %3581 = vrot.lane.b32.xlu0 %v357, 48
    %v3582 = vpop.permute.xlu0 %3581
    %3583 = vrot.lane.b32.xlu0 %v362, 48
    %v3584 = vpop.permute.xlu0 %3583
    %3585 = vrot.lane.b32.xlu0 %v367, 48
    %v3586 = vpop.permute.xlu0 %3585
    %3587 = vrot.lane.b32.xlu0 %v372, 48
    %v3588 = vpop.permute.xlu0 %3587
    %3589 = vrot.lane.b32.xlu0 %v377, 48
    %v3590 = vpop.permute.xlu0 %3589
    %3591 = vrot.lane.b32.xlu0 %v382, 48
    %v3592 = vpop.permute.xlu0 %3591
    %3593 = vrot.lane.b32.xlu0 %v387, 48
    %v3594 = vpop.permute.xlu0 %3593
    %3595 = vrot.lane.b32.xlu0 %v392, 48
    %v3596 = vpop.permute.xlu0 %3595
    %v3606 = vsel %vm596, %v3562, 0
    %v3609 = vsel %vm596, %v3564, 0
    %v3612 = vsel %vm596, %v3566, 0
    %v3615 = vsel %vm596, %v3568, 0
    %v3618 = vsel %vm596, %v3570, 0
    %v3621 = vsel %vm596, %v3572, 0
    %v3624 = vsel %vm596, %v3574, 0
    %v3627 = vsel %vm596, %v3576, 0
    %v3630 = vsel %vm596, %v3578, 0
    %v3632 = vsel %vm750, %v3596, 0
    %3634 = vmatprep.subr.mxu0 0.0
    %3635 = vmatpush1.msra.mxu0 %v3580
    %3636 = vmatprep.subr.mxu0 0.0
    %3637 = vmatpush1.msra.mxu0 %v3582
    %3638 = vmatprep.subr.mxu0 0.0
    %3639 = vmatpush1.msra.mxu0 %v3584
    %3640 = vmatprep.subr.mxu0 0.0
    %3641 = vmatpush1.msra.mxu0 %v3586
    %3642 = vmatprep.subr.mxu0 0.0
    %3643 = vmatpush1.msra.mxu0 %v3588
    %3644 = vmatprep.subr.mxu0 0.0
    %3645 = vmatpush1.msra.mxu0 %v3590
    %3646 = vmatprep.subr.mxu0 0.0
    %3647 = vmatpush1.msra.mxu0 %v3592
    %3648 = vmatprep.subr.mxu0 0.0
    %3649 = vmatpush1.msra.mxu0 %v3594
    %3650 = vmatprep.subr.mxu0 0.0
    %3651 = vmatpush1.msra.mxu0 %v3632
    %3652 = vmatprep.subr.mxu0 0.0
    %3653 = vmatpush1.msra.mxu0 0.0
    %3654 = vmatprep.subr.mxu0 0.0
    %3655 = vmatpush1.msra.mxu0 0.0
    %3656 = vmatprep.subr.mxu0 0.0
    %3657 = vmatpush1.msra.mxu0 0.0
    %3658 = vmatprep.subr.mxu0 0.0
    %3659 = vmatpush1.msra.mxu0 0.0
    %3660 = vmatprep.subr.mxu0 0.0
    %3661 = vmatpush1.msra.mxu0 0.0
    %3662 = vmatprep.subr.mxu0 0.0
    %3663 = vmatpush1.msra.mxu0 0.0
    %3664 = vmatprep.subr.mxu0 0.0
    %3665 = vmatpush1.msra.mxu0 0.0
    %3666 = vmatprep.subr.mxu0 0.0
    %3667 = vmatpush1.msra.mxu0 0.0
    %3668 = vmatprep.subr.mxu0 0.0
    %3669 = vmatpush1.msra.mxu0 0.0
    %3670 = vmatprep.subr.mxu0 0.0
    %3671 = vmatpush1.msra.mxu0 0.0
    %3672 = vmatprep.subr.mxu0 0.0
    %3673 = vmatpush1.msra.mxu0 0.0
    %3674 = vmatprep.subr.mxu0 0.0
    %3675 = vmatpush1.msra.mxu0 0.0
    %3676 = vmatprep.subr.mxu0 0.0
    %3677 = vmatpush1.msra.mxu0 0.0
    %3678 = vmatprep.subr.mxu0 0.0
    %3679 = vmatpush1.msra.mxu0 0.0
    %3680 = vmatprep.subr.mxu0 0.0
    %3681 = vmatpush1.msra.mxu0 0.0
    %3682 = vmatprep.subr.mxu0 0.0
    %3683 = vmatpush1.msra.mxu0 0.0
    %3684 = vmatprep.subr.mxu0 0.0
    %3685 = vmatpush1.msra.mxu0 0.0
    %3686 = vmatprep.subr.mxu0 0.0
    %3687 = vmatpush1.msra.mxu0 0.0
    %3688 = vmatprep.subr.mxu0 0.0
    %3689 = vmatpush1.msra.mxu0 0.0
    %3690 = vmatprep.subr.mxu0 0.0
    %3691 = vmatpush1.msra.mxu0 0.0
    %3692 = vmatprep.subr.mxu0 0.0
    %3693 = vmatpush1.msra.mxu0 0.0
    %3694 = vmatprep.subr.mxu0 0.0
    %3695 = vmatpush1.msra.mxu0 0.0
    %3696 = vmatprep.subr.mxu0 0.0
    %3697 = vmatpush1.msra.mxu0 0.0
    %3698 = vmatprep.mubr.f32.mxu0 0.0
    %3699 = vmatmul.mubr.f32.gmra.mrb[0].mxu0 %v3606
    %v3700 = vpop.f32.mrb[0].mxu0
    %v3701 = vadd.f32 0.0, %v3700
    %v3702 = vpop.f32.mrb[0].mxu0
    %3703 = vmatprep.mubr.f32.mxu0 0.0
    %3704 = vmatmul.mubr.f32.gmra.mrb[0].mxu0 %v3609
    %v3705 = vpop.f32.mrb[0].mxu0
    %v3706 = vadd.f32 0.0, %v3705
    %v3707 = vpop.f32.mrb[0].mxu0
    %3708 = vmatprep.mubr.f32.mxu0 0.0
    %3709 = vmatmul.mubr.f32.gmra.mrb[0].mxu0 %v3612
    %v3710 = vpop.f32.mrb[0].mxu0
    %v3711 = vadd.f32 0.0, %v3710
    %v3712 = vpop.f32.mrb[0].mxu0
    %3713 = vmatprep.mubr.f32.mxu0 0.0
    %3714 = vmatmul.mubr.f32.gmra.mrb[0].mxu0 %v3615
    %v3715 = vpop.f32.mrb[0].mxu0
    %v3716 = vadd.f32 0.0, %v3715
    %v3717 = vpop.f32.mrb[0].mxu0
    %3718 = vmatprep.mubr.f32.mxu0 0.0
    %3719 = vmatmul.mubr.f32.gmra.mrb[0].mxu0 %v3618
    %v3720 = vpop.f32.mrb[0].mxu0
    %v3721 = vadd.f32 0.0, %v3720
    %v3722 = vpop.f32.mrb[0].mxu0
    %3723 = vmatprep.mubr.f32.mxu0 0.0
    %3724 = vmatmul.mubr.f32.gmra.mrb[0].mxu0 %v3621
    %v3725 = vpop.f32.mrb[0].mxu0
    %v3726 = vadd.f32 0.0, %v3725
    %v3727 = vpop.f32.mrb[0].mxu0
    %3728 = vmatprep.mubr.f32.mxu0 0.0
    %3729 = vmatmul.mubr.f32.gmra.mrb[0].mxu0 %v3624
    %v3730 = vpop.f32.mrb[0].mxu0
    %v3731 = vadd.f32 0.0, %v3730
    %v3732 = vpop.f32.mrb[0].mxu0
    %3733 = vmatprep.mubr.f32.mxu0 0.0
    %3734 = vmatmul.mubr.f32.gmra.mrb[0].mxu0 %v3627
    %v3735 = vpop.f32.mrb[0].mxu0
    %v3736 = vadd.f32 0.0, %v3735
    %v3737 = vpop.f32.mrb[0].mxu0
    %3738 = vmatprep.mubr.f32.mxu0 0.0
    %3739 = vmatmul.mubr.f32.gmra.mrb[0].mxu0 %v3630
    %v3740 = vpop.f32.mrb[0].mxu0
    %v3741 = vadd.f32 0.0, %v3740
    %v3742 = vpop.f32.mrb[0].mxu0
    %3743 = vdwg.mxu0
    %3753 = vrot.lane.b32.xlu0 %v3701, 16
    %v3754 = vpop.permute.xlu0 %3753
    %3755 = vrot.lane.b32.xlu0 %v3706, 16
    %v3756 = vpop.permute.xlu0 %3755
    %3757 = vrot.lane.b32.xlu0 %v3711, 16
    %v3758 = vpop.permute.xlu0 %3757
    %3759 = vrot.lane.b32.xlu0 %v3716, 16
    %v3760 = vpop.permute.xlu0 %3759
    %3761 = vrot.lane.b32.xlu0 %v3721, 16
    %v3762 = vpop.permute.xlu0 %3761
    %3763 = vrot.lane.b32.xlu0 %v3726, 16
    %v3764 = vpop.permute.xlu0 %3763
    %3765 = vrot.lane.b32.xlu0 %v3731, 16
    %v3766 = vpop.permute.xlu0 %3765
    %3767 = vrot.lane.b32.xlu0 %v3736, 16
    %v3768 = vpop.permute.xlu0 %3767
    %3769 = vrot.lane.b32.xlu0 %v3741, 16
    %v3770 = vpop.permute.xlu0 %3769
    %3780 = vst.msk [vmem:[#allocation3 + $0x48] sm:$0xff] %vm1848, %v3754
    %3781 = vst.msk [vmem:[#allocation3 + $0x50] sm:$0xff] %vm1848, %v3756
    %3782 = vst.msk [vmem:[#allocation3 + $0x58] sm:$0xff] %vm1848, %v3758
    %3783 = vst.msk [vmem:[#allocation3 + $0x60] sm:$0xff] %vm1848, %v3760
    %3784 = vst.msk [vmem:[#allocation3 + $0x68] sm:$0xff] %vm1848, %v3762
    %3785 = vst.msk [vmem:[#allocation3 + $0x70] sm:$0xff] %vm1848, %v3764
    %3786 = vst.msk [vmem:[#allocation3 + $0x78] sm:$0xff] %vm1848, %v3766
    %3787 = vst.msk [vmem:[#allocation3 + $0x80] sm:$0xff] %vm1848, %v3768
    %3788 = vst.msk [vmem:[#allocation3 + $0x88] sm:$0x1] %vm1857, %v3770
    %3789 = vrot.lane.b32.xlu0 %v404, 104
    %v3790 = vpop.permute.xlu0 %3789
    %3791 = vrot.lane.b32.xlu0 %v405, 104
    %v3792 = vpop.permute.xlu0 %3791
    %3793 = vrot.lane.b32.xlu0 %v406, 104
    %v3794 = vpop.permute.xlu0 %3793
    %3795 = vrot.lane.b32.xlu0 %v407, 104
    %v3796 = vpop.permute.xlu0 %3795
    %3797 = vrot.lane.b32.xlu0 %v408, 104
    %v3798 = vpop.permute.xlu0 %3797
    %3799 = vrot.lane.b32.xlu0 %v409, 104
    %v3800 = vpop.permute.xlu0 %3799
    %3801 = vrot.lane.b32.xlu0 %v410, 104
    %v3802 = vpop.permute.xlu0 %3801
    %3803 = vrot.lane.b32.xlu0 %v411, 104
    %v3804 = vpop.permute.xlu0 %3803
    %3805 = vrot.lane.b32.xlu0 %v412, 104
    %v3806 = vpop.permute.xlu0 %3805
    %3807 = vrot.lane.b32.xlu0 %v352, 72
    %v3808 = vpop.permute.xlu0 %3807
    %3809 = vrot.lane.b32.xlu0 %v357, 72
    %v3810 = vpop.permute.xlu0 %3809
    %3811 = vrot.lane.b32.xlu0 %v362, 72
    %v3812 = vpop.permute.xlu0 %3811
    %3813 = vrot.lane.b32.xlu0 %v367, 72
    %v3814 = vpop.permute.xlu0 %3813
    %3815 = vrot.lane.b32.xlu0 %v372, 72
    %v3816 = vpop.permute.xlu0 %3815
    %3817 = vrot.lane.b32.xlu0 %v377, 72
    %v3818 = vpop.permute.xlu0 %3817
    %3819 = vrot.lane.b32.xlu0 %v382, 72
    %v3820 = vpop.permute.xlu0 %3819
    %3821 = vrot.lane.b32.xlu0 %v387, 72
    %v3822 = vpop.permute.xlu0 %3821
    %3823 = vrot.lane.b32.xlu0 %v392, 72
    %v3824 = vpop.permute.xlu0 %3823
    %v3825 = vsel %vm440, %v3790, 0
    %v3827 = vsel %vm440, %v3792, 0
    %v3829 = vsel %vm440, %v3794, 0
    %v3831 = vsel %vm440, %v3796, 0
    %v3833 = vsel %vm440, %v3798, 0
    %v3835 = vsel %vm440, %v3800, 0
    %v3837 = vsel %vm440, %v3802, 0
    %v3839 = vsel %vm440, %v3804, 0
    %v3841 = vsel %vm440, %v3806, 0
    %v3843 = vsel %vm440, %v3808, 0
    %v3845 = vsel %vm440, %v3810, 0
    %v3847 = vsel %vm440, %v3812, 0
    %v3849 = vsel %vm440, %v3814, 0
    %v3851 = vsel %vm440, %v3816, 0
    %v3853 = vsel %vm440, %v3818, 0
    %v3855 = vsel %vm440, %v3820, 0
    %v3857 = vsel %vm440, %v3822, 0
    %v3859 = vsel %vm440, %v3824, 0
    %3861 = vmatprep.subr.mxu0 0.0
    %3862 = vmatpush1.xpose.msra.mxu0 %v3843
    %3863 = vmatprep.subr.mxu0 0.0
    %3864 = vmatpush1.xpose.msra.mxu0 %v3845
    %3865 = vmatprep.subr.mxu0 0.0
    %3866 = vmatpush1.xpose.msra.mxu0 %v3847
    %3867 = vmatprep.subr.mxu0 0.0
    %3868 = vmatpush1.xpose.msra.mxu0 %v3849
    %3869 = vmatprep.subr.mxu0 0.0
    %3870 = vmatpush1.xpose.msra.mxu0 %v3851
    %3871 = vmatprep.subr.mxu0 0.0
    %3872 = vmatpush1.xpose.msra.mxu0 %v3853
    %3873 = vmatprep.subr.mxu0 0.0
    %3874 = vmatpush1.xpose.msra.mxu0 %v3855
    %3875 = vmatprep.subr.mxu0 0.0
    %3876 = vmatpush1.xpose.msra.mxu0 %v3857
    %3877 = vmatprep.subr.mxu0 0.0
    %3878 = vmatpush1.xpose.msra.mxu0 %v3859
    %3879 = vmatprep.subr.mxu0 0.0
    %3880 = vmatpush1.xpose.msra.mxu0 0.0
    %3881 = vmatprep.subr.mxu0 0.0
    %3882 = vmatpush1.xpose.msra.mxu0 0.0
    %3883 = vmatprep.subr.mxu0 0.0
    %3884 = vmatpush1.xpose.msra.mxu0 0.0
    %3885 = vmatprep.subr.mxu0 0.0
    %3886 = vmatpush1.xpose.msra.mxu0 0.0
    %3887 = vmatprep.subr.mxu0 0.0
    %3888 = vmatpush1.xpose.msra.mxu0 0.0
    %3889 = vmatprep.subr.mxu0 0.0
    %3890 = vmatpush1.xpose.msra.mxu0 0.0
    %3891 = vmatprep.subr.mxu0 0.0
    %3892 = vmatpush1.xpose.msra.mxu0 0.0
    %3893 = vmatprep.subr.mxu0 0.0
    %3894 = vmatpush1.xpose.msra.mxu0 0.0
    %3895 = vmatprep.subr.mxu0 0.0
    %3896 = vmatpush1.xpose.msra.mxu0 0.0
    %3897 = vmatprep.subr.mxu0 0.0
    %3898 = vmatpush1.xpose.msra.mxu0 0.0
    %3899 = vmatprep.subr.mxu0 0.0
    %3900 = vmatpush1.xpose.msra.mxu0 0.0
    %3901 = vmatprep.subr.mxu0 0.0
    %3902 = vmatpush1.xpose.msra.mxu0 0.0
    %3903 = vmatprep.subr.mxu0 0.0
    %3904 = vmatpush1.xpose.msra.mxu0 0.0
    %3905 = vmatprep.subr.mxu0 0.0
    %3906 = vmatpush1.xpose.msra.mxu0 0.0
    %3907 = vmatprep.subr.mxu0 0.0
    %3908 = vmatpush1.xpose.msra.mxu0 0.0
    %3909 = vmatprep.subr.mxu0 0.0
    %3910 = vmatpush1.xpose.msra.mxu0 0.0
    %3911 = vmatprep.subr.mxu0 0.0
    %3912 = vmatpush1.xpose.msra.mxu0 0.0
    %3913 = vmatprep.subr.mxu0 0.0
    %3914 = vmatpush1.xpose.msra.mxu0 0.0
    %3915 = vmatprep.subr.mxu0 0.0
    %3916 = vmatpush1.xpose.msra.mxu0 0.0
    %3917 = vmatprep.subr.mxu0 0.0
    %3918 = vmatpush1.xpose.msra.mxu0 0.0
    %3919 = vmatprep.subr.mxu0 0.0
    %3920 = vmatpush1.xpose.msra.mxu0 0.0
    %3921 = vmatprep.subr.mxu0 0.0
    %3922 = vmatpush1.xpose.msra.mxu0 0.0
    %3923 = vmatprep.subr.mxu0 0.0
    %3924 = vmatpush1.xpose.msra.mxu0 0.0
    %3925 = vmatprep.mubr.f32.mxu0 0.0
    %3926 = vmatmul.mubr.f32.gmra.mrb[0].mxu0 %v3825
    %v3927 = vpop.f32.mrb[0].mxu0
    %v3928 = vadd.f32 0.0, %v3927
    %v3929 = vpop.f32.mrb[0].mxu0
    %3930 = vmatprep.mubr.f32.mxu0 0.0
    %3931 = vmatmul.mubr.f32.gmra.mrb[0].mxu0 %v3827
    %v3932 = vpop.f32.mrb[0].mxu0
    %v3933 = vadd.f32 0.0, %v3932
    %v3934 = vpop.f32.mrb[0].mxu0
    %3935 = vmatprep.mubr.f32.mxu0 0.0
    %3936 = vmatmul.mubr.f32.gmra.mrb[0].mxu0 %v3829
    %v3937 = vpop.f32.mrb[0].mxu0
    %v3938 = vadd.f32 0.0, %v3937
    %v3939 = vpop.f32.mrb[0].mxu0
    %3940 = vmatprep.mubr.f32.mxu0 0.0
    %3941 = vmatmul.mubr.f32.gmra.mrb[0].mxu0 %v3831
    %v3942 = vpop.f32.mrb[0].mxu0
    %v3943 = vadd.f32 0.0, %v3942
    %v3944 = vpop.f32.mrb[0].mxu0
    %3945 = vmatprep.mubr.f32.mxu0 0.0
    %3946 = vmatmul.mubr.f32.gmra.mrb[0].mxu0 %v3833
    %v3947 = vpop.f32.mrb[0].mxu0
    %v3948 = vadd.f32 0.0, %v3947
    %v3949 = vpop.f32.mrb[0].mxu0
    %3950 = vmatprep.mubr.f32.mxu0 0.0
    %3951 = vmatmul.mubr.f32.gmra.mrb[0].mxu0 %v3835
    %v3952 = vpop.f32.mrb[0].mxu0
    %v3953 = vadd.f32 0.0, %v3952
    %v3954 = vpop.f32.mrb[0].mxu0
    %3955 = vmatprep.mubr.f32.mxu0 0.0
    %3956 = vmatmul.mubr.f32.gmra.mrb[0].mxu0 %v3837
    %v3957 = vpop.f32.mrb[0].mxu0
    %v3958 = vadd.f32 0.0, %v3957
    %v3959 = vpop.f32.mrb[0].mxu0
    %3960 = vmatprep.mubr.f32.mxu0 0.0
    %3961 = vmatmul.mubr.f32.gmra.mrb[0].mxu0 %v3839
    %v3962 = vpop.f32.mrb[0].mxu0
    %v3963 = vadd.f32 0.0, %v3962
    %v3964 = vpop.f32.mrb[0].mxu0
    %3965 = vmatprep.mubr.f32.mxu0 0.0
    %3966 = vmatmul.mubr.f32.gmra.mrb[0].mxu0 %v3841
    %v3967 = vpop.f32.mrb[0].mxu0
    %v3968 = vadd.f32 0.0, %v3967
    %v3969 = vpop.f32.mrb[0].mxu0
    %3970 = vdwg.mxu0
    %v3971 = vsel %vm596, %v3928, -inf
    %3972 = vmax.xlane.f32.xlu0 %v3971
    %v3973 = vpop.xlane.xlu0 %3972
    %v3974 = vsel %vm596, %v3933, -inf
    %3975 = vmax.xlane.f32.xlu0 %v3974
    %v3976 = vpop.xlane.xlu0 %3975
    %v3977 = vsel %vm596, %v3938, -inf
    %3978 = vmax.xlane.f32.xlu0 %v3977
    %v3979 = vpop.xlane.xlu0 %3978
    %v3980 = vsel %vm596, %v3943, -inf
    %3981 = vmax.xlane.f32.xlu0 %v3980
    %v3982 = vpop.xlane.xlu0 %3981
    %v3983 = vsel %vm596, %v3948, -inf
    %3984 = vmax.xlane.f32.xlu0 %v3983
    %v3985 = vpop.xlane.xlu0 %3984
    %v3986 = vsel %vm596, %v3953, -inf
    %3987 = vmax.xlane.f32.xlu0 %v3986
    %v3988 = vpop.xlane.xlu0 %3987
    %v3989 = vsel %vm596, %v3958, -inf
    %3990 = vmax.xlane.f32.xlu0 %v3989
    %v3991 = vpop.xlane.xlu0 %3990
    %v3992 = vsel %vm596, %v3963, -inf
    %3993 = vmax.xlane.f32.xlu0 %v3992
    %v3994 = vpop.xlane.xlu0 %3993
    %v3995 = vsel %vm621, %v3968, -inf
    %3996 = vmax.xlane.f32.xlu0 %v3995
    %v3997 = vpop.xlane.xlu0 %3996
    %v3998 = vsub.f32 %v3928, %v3973
    %v3999 = vsub.f32 %v3933, %v3976
    %v4000 = vsub.f32 %v3938, %v3979
    %v4001 = vsub.f32 %v3943, %v3982
    %v4002 = vsub.f32 %v3948, %v3985
    %v4003 = vsub.f32 %v3953, %v3988
    %v4004 = vsub.f32 %v3958, %v3991
    %v4005 = vsub.f32 %v3963, %v3994
    %v4006 = vsub.f32 %v3968, %v3997
    %v4007 = vmul.f32 %v3998, 1.442695
    %v4008 = vpow.pop %v4007
    %v4009 = vmul.f32 %v3999, 1.442695
    %v4010 = vpow.pop %v4009
    %v4011 = vmul.f32 %v4000, 1.442695
    %v4012 = vpow.pop %v4011
    %v4013 = vmul.f32 %v4001, 1.442695
    %v4014 = vpow.pop %v4013
    %v4015 = vmul.f32 %v4002, 1.442695
    %v4016 = vpow.pop %v4015
    %v4017 = vmul.f32 %v4003, 1.442695
    %v4018 = vpow.pop %v4017
    %v4019 = vmul.f32 %v4004, 1.442695
    %v4020 = vpow.pop %v4019
    %v4021 = vmul.f32 %v4005, 1.442695
    %v4022 = vpow.pop %v4021
    %v4023 = vmul.f32 %v4006, 1.442695
    %v4024 = vpow.pop %v4023
    %v4025 = vsel %vm596, %v4008, 0.0
    %4026 = vadd.xlane.f32.xlu0 %v4025
    %v4027 = vpop.xlane.xlu0 %4026
    %v4028 = vsel %vm596, %v4010, 0.0
    %4029 = vadd.xlane.f32.xlu0 %v4028
    %v4030 = vpop.xlane.xlu0 %4029
    %v4031 = vsel %vm596, %v4012, 0.0
    %4032 = vadd.xlane.f32.xlu0 %v4031
    %v4033 = vpop.xlane.xlu0 %4032
    %v4034 = vsel %vm596, %v4014, 0.0
    %4035 = vadd.xlane.f32.xlu0 %v4034
    %v4036 = vpop.xlane.xlu0 %4035
    %v4037 = vsel %vm596, %v4016, 0.0
    %4038 = vadd.xlane.f32.xlu0 %v4037
    %v4039 = vpop.xlane.xlu0 %4038
    %v4040 = vsel %vm596, %v4018, 0.0
    %4041 = vadd.xlane.f32.xlu0 %v4040
    %v4042 = vpop.xlane.xlu0 %4041
    %v4043 = vsel %vm596, %v4020, 0.0
    %4044 = vadd.xlane.f32.xlu0 %v4043
    %v4045 = vpop.xlane.xlu0 %4044
    %v4046 = vsel %vm596, %v4022, 0.0
    %4047 = vadd.xlane.f32.xlu0 %v4046
    %v4048 = vpop.xlane.xlu0 %4047
    %v4049 = vsel %vm621, %v4024, 0.0
    %4050 = vadd.xlane.f32.xlu0 %v4049
    %v4051 = vpop.xlane.xlu0 %4050
    %v4052 = vrcp.pop %v4027
    %v4053 = vmul.f32 %v4008, %v4052
    %v4054 = vrcp.pop %v4030
    %v4055 = vmul.f32 %v4010, %v4054
    %v4056 = vrcp.pop %v4033
    %v4057 = vmul.f32 %v4012, %v4056
    %v4058 = vrcp.pop %v4036
    %v4059 = vmul.f32 %v4014, %v4058
    %v4060 = vrcp.pop %v4039
    %v4061 = vmul.f32 %v4016, %v4060
    %v4062 = vrcp.pop %v4042
    %v4063 = vmul.f32 %v4018, %v4062
    %v4064 = vrcp.pop %v4045
    %v4065 = vmul.f32 %v4020, %v4064
    %v4066 = vrcp.pop %v4048
    %v4067 = vmul.f32 %v4022, %v4066
    %v4068 = vrcp.pop %v4051
    %v4069 = vmul.f32 %v4024, %v4068
    %4070 = vrot.lane.b32.xlu0 %v352, 40
    %v4071 = vpop.permute.xlu0 %4070
    %4072 = vrot.lane.b32.xlu0 %v357, 40
    %v4073 = vpop.permute.xlu0 %4072
    %4074 = vrot.lane.b32.xlu0 %v362, 40
    %v4075 = vpop.permute.xlu0 %4074
    %4076 = vrot.lane.b32.xlu0 %v367, 40
    %v4077 = vpop.permute.xlu0 %4076
    %4078 = vrot.lane.b32.xlu0 %v372, 40
    %v4079 = vpop.permute.xlu0 %4078
    %4080 = vrot.lane.b32.xlu0 %v377, 40
    %v4081 = vpop.permute.xlu0 %4080
    %4082 = vrot.lane.b32.xlu0 %v382, 40
    %v4083 = vpop.permute.xlu0 %4082
    %4084 = vrot.lane.b32.xlu0 %v387, 40
    %v4085 = vpop.permute.xlu0 %4084
    %4086 = vrot.lane.b32.xlu0 %v392, 40
    %v4087 = vpop.permute.xlu0 %4086
    %v4097 = vsel %vm596, %v4053, 0
    %v4100 = vsel %vm596, %v4055, 0
    %v4103 = vsel %vm596, %v4057, 0
    %v4106 = vsel %vm596, %v4059, 0
    %v4109 = vsel %vm596, %v4061, 0
    %v4112 = vsel %vm596, %v4063, 0
    %v4115 = vsel %vm596, %v4065, 0
    %v4118 = vsel %vm596, %v4067, 0
    %v4121 = vsel %vm596, %v4069, 0
    %v4123 = vsel %vm750, %v4087, 0
    %4125 = vmatprep.subr.mxu0 0.0
    %4126 = vmatpush1.msra.mxu0 %v4071
    %4127 = vmatprep.subr.mxu0 0.0
    %4128 = vmatpush1.msra.mxu0 %v4073
    %4129 = vmatprep.subr.mxu0 0.0
    %4130 = vmatpush1.msra.mxu0 %v4075
    %4131 = vmatprep.subr.mxu0 0.0
    %4132 = vmatpush1.msra.mxu0 %v4077
    %4133 = vmatprep.subr.mxu0 0.0
    %4134 = vmatpush1.msra.mxu0 %v4079
    %4135 = vmatprep.subr.mxu0 0.0
    %4136 = vmatpush1.msra.mxu0 %v4081
    %4137 = vmatprep.subr.mxu0 0.0
    %4138 = vmatpush1.msra.mxu0 %v4083
    %4139 = vmatprep.subr.mxu0 0.0
    %4140 = vmatpush1.msra.mxu0 %v4085
    %4141 = vmatprep.subr.mxu0 0.0
    %4142 = vmatpush1.msra.mxu0 %v4123
    %4143 = vmatprep.subr.mxu0 0.0
    %4144 = vmatpush1.msra.mxu0 0.0
    %4145 = vmatprep.subr.mxu0 0.0
    %4146 = vmatpush1.msra.mxu0 0.0
    %4147 = vmatprep.subr.mxu0 0.0
    %4148 = vmatpush1.msra.mxu0 0.0
    %4149 = vmatprep.subr.mxu0 0.0
    %4150 = vmatpush1.msra.mxu0 0.0
    %4151 = vmatprep.subr.mxu0 0.0
    %4152 = vmatpush1.msra.mxu0 0.0
    %4153 = vmatprep.subr.mxu0 0.0
    %4154 = vmatpush1.msra.mxu0 0.0
    %4155 = vmatprep.subr.mxu0 0.0
    %4156 = vmatpush1.msra.mxu0 0.0
    %4157 = vmatprep.subr.mxu0 0.0
    %4158 = vmatpush1.msra.mxu0 0.0
    %4159 = vmatprep.subr.mxu0 0.0
    %4160 = vmatpush1.msra.mxu0 0.0
    %4161 = vmatprep.subr.mxu0 0.0
    %4162 = vmatpush1.msra.mxu0 0.0
    %4163 = vmatprep.subr.mxu0 0.0
    %4164 = vmatpush1.msra.mxu0 0.0
    %4165 = vmatprep.subr.mxu0 0.0
    %4166 = vmatpush1.msra.mxu0 0.0
    %4167 = vmatprep.subr.mxu0 0.0
    %4168 = vmatpush1.msra.mxu0 0.0
    %4169 = vmatprep.subr.mxu0 0.0
    %4170 = vmatpush1.msra.mxu0 0.0
    %4171 = vmatprep.subr.mxu0 0.0
    %4172 = vmatpush1.msra.mxu0 0.0
    %4173 = vmatprep.subr.mxu0 0.0
    %4174 = vmatpush1.msra.mxu0 0.0
    %4175 = vmatprep.subr.mxu0 0.0
    %4176 = vmatpush1.msra.mxu0 0.0
    %4177 = vmatprep.subr.mxu0 0.0
    %4178 = vmatpush1.msra.mxu0 0.0
    %4179 = vmatprep.subr.mxu0 0.0
    %4180 = vmatpush1.msra.mxu0 0.0
    %4181 = vmatprep.subr.mxu0 0.0
    %4182 = vmatpush1.msra.mxu0 0.0
    %4183 = vmatprep.subr.mxu0 0.0
    %4184 = vmatpush1.msra.mxu0 0.0
    %4185 = vmatprep.subr.mxu0 0.0
    %4186 = vmatpush1.msra.mxu0 0.0
    %4187 = vmatprep.subr.mxu0 0.0
    %4188 = vmatpush1.msra.mxu0 0.0
    %4189 = vmatprep.mubr.f32.mxu0 0.0
    %4190 = vmatmul.mubr.f32.gmra.mrb[0].mxu0 %v4097
    %v4191 = vpop.f32.mrb[0].mxu0
    %v4192 = vadd.f32 0.0, %v4191
    %v4193 = vpop.f32.mrb[0].mxu0
    %4194 = vmatprep.mubr.f32.mxu0 0.0
    %4195 = vmatmul.mubr.f32.gmra.mrb[0].mxu0 %v4100
    %v4196 = vpop.f32.mrb[0].mxu0
    %v4197 = vadd.f32 0.0, %v4196
    %v4198 = vpop.f32.mrb[0].mxu0
    %4199 = vmatprep.mubr.f32.mxu0 0.0
    %4200 = vmatmul.mubr.f32.gmra.mrb[0].mxu0 %v4103
    %v4201 = vpop.f32.mrb[0].mxu0
    %v4202 = vadd.f32 0.0, %v4201
    %v4203 = vpop.f32.mrb[0].mxu0
    %4204 = vmatprep.mubr.f32.mxu0 0.0
    %4205 = vmatmul.mubr.f32.gmra.mrb[0].mxu0 %v4106
    %v4206 = vpop.f32.mrb[0].mxu0
    %v4207 = vadd.f32 0.0, %v4206
    %v4208 = vpop.f32.mrb[0].mxu0
    %4209 = vmatprep.mubr.f32.mxu0 0.0
    %4210 = vmatmul.mubr.f32.gmra.mrb[0].mxu0 %v4109
    %v4211 = vpop.f32.mrb[0].mxu0
    %v4212 = vadd.f32 0.0, %v4211
    %v4213 = vpop.f32.mrb[0].mxu0
    %4214 = vmatprep.mubr.f32.mxu0 0.0
    %4215 = vmatmul.mubr.f32.gmra.mrb[0].mxu0 %v4112
    %v4216 = vpop.f32.mrb[0].mxu0
    %v4217 = vadd.f32 0.0, %v4216
    %v4218 = vpop.f32.mrb[0].mxu0
    %4219 = vmatprep.mubr.f32.mxu0 0.0
    %4220 = vmatmul.mubr.f32.gmra.mrb[0].mxu0 %v4115
    %v4221 = vpop.f32.mrb[0].mxu0
    %v4222 = vadd.f32 0.0, %v4221
    %v4223 = vpop.f32.mrb[0].mxu0
    %4224 = vmatprep.mubr.f32.mxu0 0.0
    %4225 = vmatmul.mubr.f32.gmra.mrb[0].mxu0 %v4118
    %v4226 = vpop.f32.mrb[0].mxu0
    %v4227 = vadd.f32 0.0, %v4226
    %v4228 = vpop.f32.mrb[0].mxu0
    %4229 = vmatprep.mubr.f32.mxu0 0.0
    %4230 = vmatmul.mubr.f32.gmra.mrb[0].mxu0 %v4121
    %v4231 = vpop.f32.mrb[0].mxu0
    %v4232 = vadd.f32 0.0, %v4231
    %v4233 = vpop.f32.mrb[0].mxu0
    %4234 = vdwg.mxu0
    %4244 = vrot.lane.b32.xlu0 %v4192, 24
    %v4245 = vpop.permute.xlu0 %4244
    %4246 = vrot.lane.b32.xlu0 %v4197, 24
    %v4247 = vpop.permute.xlu0 %4246
    %4248 = vrot.lane.b32.xlu0 %v4202, 24
    %v4249 = vpop.permute.xlu0 %4248
    %4250 = vrot.lane.b32.xlu0 %v4207, 24
    %v4251 = vpop.permute.xlu0 %4250
    %4252 = vrot.lane.b32.xlu0 %v4212, 24
    %v4253 = vpop.permute.xlu0 %4252
    %4254 = vrot.lane.b32.xlu0 %v4217, 24
    %v4255 = vpop.permute.xlu0 %4254
    %4256 = vrot.lane.b32.xlu0 %v4222, 24
    %v4257 = vpop.permute.xlu0 %4256
    %4258 = vrot.lane.b32.xlu0 %v4227, 24
    %v4259 = vpop.permute.xlu0 %4258
    %4260 = vrot.lane.b32.xlu0 %v4232, 24
    %v4261 = vpop.permute.xlu0 %4260
    %4271 = vst.msk [vmem:[#allocation3 + $0x48] sm:$0xff] %vm2341, %v4245
    %4272 = vst.msk [vmem:[#allocation3 + $0x50] sm:$0xff] %vm2341, %v4247
    %4273 = vst.msk [vmem:[#allocation3 + $0x58] sm:$0xff] %vm2341, %v4249
    %4274 = vst.msk [vmem:[#allocation3 + $0x60] sm:$0xff] %vm2341, %v4251
    %4275 = vst.msk [vmem:[#allocation3 + $0x68] sm:$0xff] %vm2341, %v4253
    %4276 = vst.msk [vmem:[#allocation3 + $0x70] sm:$0xff] %vm2341, %v4255
    %4277 = vst.msk [vmem:[#allocation3 + $0x78] sm:$0xff] %vm2341, %v4257
    %4278 = vst.msk [vmem:[#allocation3 + $0x80] sm:$0xff] %vm2341, %v4259
    %4279 = vst.msk [vmem:[#allocation3 + $0x88] sm:$0x1] %vm2350, %v4261
    %v4280 = vld [vmem:[%s7] sm:$0x3f]
    %v4281 = vld [vmem:[#allocation3] sm:$0xff]
    %v4282 = vld [vmem:[#allocation3 + $0x8] sm:$0xff]
    %v4283 = vld [vmem:[#allocation3 + $0x10] sm:$0xff]
    %v4284 = vld [vmem:[#allocation3 + $0x18] sm:$0xff]
    %v4285 = vld [vmem:[#allocation3 + $0x20] sm:$0xff]
    %v4286 = vld [vmem:[#allocation3 + $0x28] sm:$0xff]
    %v4287 = vld [vmem:[#allocation3 + $0x30] sm:$0xff]
    %v4288 = vld [vmem:[#allocation3 + $0x38] sm:$0xff]
    %v4289 = vld [vmem:[#allocation3 + $0x40] sm:$0xff]
    %v4290 = vld [vmem:[#allocation3 + $0x48] sm:$0xff]
    %v4291 = vld [vmem:[#allocation3 + $0x50] sm:$0xff]
    %v4292 = vld [vmem:[#allocation3 + $0x58] sm:$0xff]
    %v4293 = vld [vmem:[#allocation3 + $0x60] sm:$0xff]
    %v4294 = vld [vmem:[#allocation3 + $0x68] sm:$0xff]
    %v4295 = vld [vmem:[#allocation3 + $0x70] sm:$0xff]
    %v4296 = vld [vmem:[#allocation3 + $0x78] sm:$0xff]
    %v4297 = vld [vmem:[#allocation3 + $0x80] sm:$0xff]
    %v4298 = vld [vmem:[#allocation3 + $0x88] sm:$0xff]
    %v4299 = vld [vmem:[%s3] sm:$0xff]
    %v4300 = vld [vmem:[%s3 + $0x8] sm:$0xff]
    %v4301 = vld [vmem:[%s3 + $0x10] sm:$0xff]
    %v4302 = vld [vmem:[%s3 + $0x18] sm:$0xff]
    %v4303 = vlaneseq
    %v4304 = vshrl.u32 %v4303, 7
    %v4305 = vsub.s32 0, %v4304
    %v4306 = vrot.slane %v4280, %v4305
    %v4308 = vsel %vm32, %v4281, 0
    %v4311 = vsel %vm32, %v4282, 0
    %v4314 = vsel %vm32, %v4283, 0
    %v4317 = vsel %vm32, %v4284, 0
    %v4320 = vsel %vm32, %v4285, 0
    %v4323 = vsel %vm32, %v4286, 0
    %v4326 = vsel %vm32, %v4287, 0
    %v4329 = vsel %vm32, %v4288, 0
    %v4332 = vsel %vm32, %v4289, 0
    %v4335 = vsel %vm32, %v4290, 0
    %v4338 = vsel %vm32, %v4291, 0
    %v4341 = vsel %vm32, %v4292, 0
    %v4344 = vsel %vm32, %v4293, 0
    %v4347 = vsel %vm32, %v4294, 0
    %v4350 = vsel %vm32, %v4295, 0
    %v4353 = vsel %vm32, %v4296, 0
    %v4356 = vsel %vm32, %v4297, 0
    %v4359 = vsel %vm32, %v4298, 0
    %4361 = vmatprep.subr.mxu0 0.0
    %4362 = vmatpush1.msra.mxu0 %v4299
    %4363 = vmatprep.subr.mxu0 0.0
    %4364 = vmatpush1.msra.mxu0 %v4300
    %4365 = vmatprep.subr.mxu0 0.0
    %4366 = vmatpush1.msra.mxu0 %v4301
    %4367 = vmatprep.subr.mxu0 0.0
    %4368 = vmatpush1.msra.mxu0 %v4302
    %4369 = vmatprep.subr.mxu0 0.0
    %4370 = vmatpush1.msra.mxu0 0.0
    %4371 = vmatprep.subr.mxu0 0.0
    %4372 = vmatpush1.msra.mxu0 0.0
    %4373 = vmatprep.subr.mxu0 0.0
    %4374 = vmatpush1.msra.mxu0 0.0
    %4375 = vmatprep.subr.mxu0 0.0
    %4376 = vmatpush1.msra.mxu0 0.0
    %4377 = vmatprep.subr.mxu0 0.0
    %4378 = vmatpush1.msra.mxu0 0.0
    %4379 = vmatprep.subr.mxu0 0.0
    %4380 = vmatpush1.msra.mxu0 0.0
    %4381 = vmatprep.subr.mxu0 0.0
    %4382 = vmatpush1.msra.mxu0 0.0
    %4383 = vmatprep.subr.mxu0 0.0
    %4384 = vmatpush1.msra.mxu0 0.0
    %4385 = vmatprep.subr.mxu0 0.0
    %4386 = vmatpush1.msra.mxu0 0.0
    %4387 = vmatprep.subr.mxu0 0.0
    %4388 = vmatpush1.msra.mxu0 0.0
    %4389 = vmatprep.subr.mxu0 0.0
    %4390 = vmatpush1.msra.mxu0 0.0
    %4391 = vmatprep.subr.mxu0 0.0
    %4392 = vmatpush1.msra.mxu0 0.0
    %4393 = vmatprep.subr.mxu0 0.0
    %4394 = vmatpush1.msra.mxu0 0.0
    %4395 = vmatprep.subr.mxu0 0.0
    %4396 = vmatpush1.msra.mxu0 0.0
    %4397 = vmatprep.subr.mxu0 0.0
    %4398 = vmatpush1.msra.mxu0 0.0
    %4399 = vmatprep.subr.mxu0 0.0
    %4400 = vmatpush1.msra.mxu0 0.0
    %4401 = vmatprep.subr.mxu0 0.0
    %4402 = vmatpush1.msra.mxu0 0.0
    %4403 = vmatprep.subr.mxu0 0.0
    %4404 = vmatpush1.msra.mxu0 0.0
    %4405 = vmatprep.subr.mxu0 0.0
    %4406 = vmatpush1.msra.mxu0 0.0
    %4407 = vmatprep.subr.mxu0 0.0
    %4408 = vmatpush1.msra.mxu0 0.0
    %4409 = vmatprep.subr.mxu0 0.0
    %4410 = vmatpush1.msra.mxu0 0.0
    %4411 = vmatprep.subr.mxu0 0.0
    %4412 = vmatpush1.msra.mxu0 0.0
    %4413 = vmatprep.subr.mxu0 0.0
    %4414 = vmatpush1.msra.mxu0 0.0
    %4415 = vmatprep.subr.mxu0 0.0
    %4416 = vmatpush1.msra.mxu0 0.0
    %4417 = vmatprep.subr.mxu0 0.0
    %4418 = vmatpush1.msra.mxu0 0.0
    %4419 = vmatprep.subr.mxu0 0.0
    %4420 = vmatpush1.msra.mxu0 0.0
    %4421 = vmatprep.subr.mxu0 0.0
    %4422 = vmatpush1.msra.mxu0 0.0
    %4423 = vmatprep.subr.mxu0 0.0
    %4424 = vmatpush1.msra.mxu0 0.0
    %4425 = vmatprep.mubr.f32.mxu0 0.0
    %4426 = vmatmul.mubr.f32.gmra.mrb[0].mxu0 %v4308
    %v4427 = vpop.f32.mrb[0].mxu0
    %v4428 = vadd.f32 %v4306, %v4427
    %v4429 = vpop.f32.mrb[0].mxu0
    %4430 = vmatprep.mubr.f32.mxu0 0.0
    %4431 = vmatmul.mubr.f32.gmra.mrb[0].mxu0 %v4311
    %v4432 = vpop.f32.mrb[0].mxu0
    %v4433 = vadd.f32 %v4306, %v4432
    %v4434 = vpop.f32.mrb[0].mxu0
    %4435 = vmatprep.mubr.f32.mxu0 0.0
    %4436 = vmatmul.mubr.f32.gmra.mrb[0].mxu0 %v4314
    %v4437 = vpop.f32.mrb[0].mxu0
    %v4438 = vadd.f32 %v4306, %v4437
    %v4439 = vpop.f32.mrb[0].mxu0
    %4440 = vmatprep.mubr.f32.mxu0 0.0
    %4441 = vmatmul.mubr.f32.gmra.mrb[0].mxu0 %v4317
    %v4442 = vpop.f32.mrb[0].mxu0
    %v4443 = vadd.f32 %v4306, %v4442
    %v4444 = vpop.f32.mrb[0].mxu0
    %4445 = vmatprep.mubr.f32.mxu0 0.0
    %4446 = vmatmul.mubr.f32.gmra.mrb[0].mxu0 %v4320
    %v4447 = vpop.f32.mrb[0].mxu0
    %v4448 = vadd.f32 %v4306, %v4447
    %v4449 = vpop.f32.mrb[0].mxu0
    %4450 = vmatprep.mubr.f32.mxu0 0.0
    %4451 = vmatmul.mubr.f32.gmra.mrb[0].mxu0 %v4323
    %v4452 = vpop.f32.mrb[0].mxu0
    %v4453 = vadd.f32 %v4306, %v4452
    %v4454 = vpop.f32.mrb[0].mxu0
    %4455 = vmatprep.mubr.f32.mxu0 0.0
    %4456 = vmatmul.mubr.f32.gmra.mrb[0].mxu0 %v4326
    %v4457 = vpop.f32.mrb[0].mxu0
    %v4458 = vadd.f32 %v4306, %v4457
    %v4459 = vpop.f32.mrb[0].mxu0
    %4460 = vmatprep.mubr.f32.mxu0 0.0
    %4461 = vmatmul.mubr.f32.gmra.mrb[0].mxu0 %v4329
    %v4462 = vpop.f32.mrb[0].mxu0
    %v4463 = vadd.f32 %v4306, %v4462
    %v4464 = vpop.f32.mrb[0].mxu0
    %4465 = vmatprep.mubr.f32.mxu0 0.0
    %4466 = vmatmul.mubr.f32.gmra.mrb[0].mxu0 %v4332
    %v4467 = vpop.f32.mrb[0].mxu0
    %v4468 = vadd.f32 %v4306, %v4467
    %v4469 = vpop.f32.mrb[0].mxu0
    %4470 = vmatprep.mubr.f32.mxu0 0.0
    %4471 = vmatmul.mubr.f32.gmra.mrb[0].mxu0 %v4335
    %v4472 = vpop.f32.mrb[0].mxu0
    %v4473 = vadd.f32 %v4306, %v4472
    %v4474 = vpop.f32.mrb[0].mxu0
    %4475 = vmatprep.mubr.f32.mxu0 0.0
    %4476 = vmatmul.mubr.f32.gmra.mrb[0].mxu0 %v4338
    %v4477 = vpop.f32.mrb[0].mxu0
    %v4478 = vadd.f32 %v4306, %v4477
    %v4479 = vpop.f32.mrb[0].mxu0
    %4480 = vmatprep.mubr.f32.mxu0 0.0
    %4481 = vmatmul.mubr.f32.gmra.mrb[0].mxu0 %v4341
    %v4482 = vpop.f32.mrb[0].mxu0
    %v4483 = vadd.f32 %v4306, %v4482
    %v4484 = vpop.f32.mrb[0].mxu0
    %4485 = vmatprep.mubr.f32.mxu0 0.0
    %4486 = vmatmul.mubr.f32.gmra.mrb[0].mxu0 %v4344
    %v4487 = vpop.f32.mrb[0].mxu0
    %v4488 = vadd.f32 %v4306, %v4487
    %v4489 = vpop.f32.mrb[0].mxu0
    %4490 = vmatprep.mubr.f32.mxu0 0.0
    %4491 = vmatmul.mubr.f32.gmra.mrb[0].mxu0 %v4347
    %v4492 = vpop.f32.mrb[0].mxu0
    %v4493 = vadd.f32 %v4306, %v4492
    %v4494 = vpop.f32.mrb[0].mxu0
    %4495 = vmatprep.mubr.f32.mxu0 0.0
    %4496 = vmatmul.mubr.f32.gmra.mrb[0].mxu0 %v4350
    %v4497 = vpop.f32.mrb[0].mxu0
    %v4498 = vadd.f32 %v4306, %v4497
    %v4499 = vpop.f32.mrb[0].mxu0
    %4500 = vmatprep.mubr.f32.mxu0 0.0
    %4501 = vmatmul.mubr.f32.gmra.mrb[0].mxu0 %v4353
    %v4502 = vpop.f32.mrb[0].mxu0
    %v4503 = vadd.f32 %v4306, %v4502
    %v4504 = vpop.f32.mrb[0].mxu0
    %4505 = vmatprep.mubr.f32.mxu0 0.0
    %4506 = vmatmul.mubr.f32.gmra.mrb[0].mxu0 %v4356
    %v4507 = vpop.f32.mrb[0].mxu0
    %v4508 = vadd.f32 %v4306, %v4507
    %v4509 = vpop.f32.mrb[0].mxu0
    %4510 = vmatprep.mubr.f32.mxu0 0.0
    %4511 = vmatmul.mubr.f32.gmra.mrb[0].mxu0 %v4359
    %v4512 = vpop.f32.mrb[0].mxu0
    %v4513 = vadd.f32 %v4306, %v4512
    %v4514 = vpop.f32.mrb[0].mxu0
    %4515 = vdwg.mxu0
    %v4516 = vlaneseq
    %v4517 = vshrl.u32 %v4516, 7
    %v4518 = vadd.s32 %v4517, 8
    %v4519 = vadd.s32 %v4517, 16
    %v4520 = vadd.s32 %v4517, 24
    %v4521 = vadd.s32 %v4517, 32
    %v4522 = vadd.s32 %v4517, 40
    %v4523 = vadd.s32 %v4517, 48
    %v4524 = vadd.s32 %v4517, 56
    %v4525 = vadd.s32 %v4517, 64
    %v4526 = vadd.s32 %v4517, 72
    %v4527 = vadd.s32 %v4517, 80
    %v4528 = vadd.s32 %v4517, 88
    %v4529 = vadd.s32 %v4517, 96
    %v4530 = vadd.s32 %v4517, 104
    %v4531 = vadd.s32 %v4517, 112
    %v4532 = vadd.s32 %v4517, 120
    %v4533 = vadd.s32 %v4517, 128
    %v4534 = vadd.s32 %v4517, 136
    %vm4535 = vcmp.ge.s32.totalorder %v4517, 0
    %vm4536 = vcmp.ge.s32.totalorder %v4518, 0
    %vm4537 = vcmp.ge.s32.totalorder %v4519, 0
    %vm4538 = vcmp.ge.s32.totalorder %v4520, 0
    %vm4539 = vcmp.ge.s32.totalorder %v4521, 0
    %vm4540 = vcmp.ge.s32.totalorder %v4522, 0
    %vm4541 = vcmp.ge.s32.totalorder %v4523, 0
    %vm4542 = vcmp.ge.s32.totalorder %v4524, 0
    %vm4543 = vcmp.ge.s32.totalorder %v4525, 0
    %vm4544 = vcmp.ge.s32.totalorder %v4526, 0
    %vm4545 = vcmp.ge.s32.totalorder %v4527, 0
    %vm4546 = vcmp.ge.s32.totalorder %v4528, 0
    %vm4547 = vcmp.ge.s32.totalorder %v4529, 0
    %vm4548 = vcmp.ge.s32.totalorder %v4530, 0
    %vm4549 = vcmp.ge.s32.totalorder %v4531, 0
    %vm4550 = vcmp.ge.s32.totalorder %v4532, 0
    %vm4551 = vcmp.ge.s32.totalorder %v4533, 0
    %vm4552 = vcmp.ge.s32.totalorder %v4534, 0
    %vm4553 = vcmp.lt.s32.totalorder %v4517, 65
    %vm4554 = vcmp.lt.s32.totalorder %v4518, 65
    %vm4555 = vcmp.lt.s32.totalorder %v4519, 65
    %vm4556 = vcmp.lt.s32.totalorder %v4520, 65
    %vm4557 = vcmp.lt.s32.totalorder %v4521, 65
    %vm4558 = vcmp.lt.s32.totalorder %v4522, 65
    %vm4559 = vcmp.lt.s32.totalorder %v4523, 65
    %vm4560 = vcmp.lt.s32.totalorder %v4524, 65
    %vm4561 = vcmp.lt.s32.totalorder %v4525, 65
    %vm4562 = vcmp.lt.s32.totalorder %v4526, 65
    %vm4563 = vcmp.lt.s32.totalorder %v4527, 65
    %vm4564 = vcmp.lt.s32.totalorder %v4528, 65
    %vm4565 = vcmp.lt.s32.totalorder %v4529, 65
    %vm4566 = vcmp.lt.s32.totalorder %v4530, 65
    %vm4567 = vcmp.lt.s32.totalorder %v4531, 65
    %vm4568 = vcmp.lt.s32.totalorder %v4532, 65
    %vm4569 = vcmp.lt.s32.totalorder %v4533, 65
    %vm4570 = vcmp.lt.s32.totalorder %v4534, 65
    %vm4571 = vmand %vm4535, %vm4553
    %vm4572 = vmand %vm4536, %vm4554
    %vm4573 = vmand %vm4537, %vm4555
    %vm4574 = vmand %vm4538, %vm4556
    %vm4575 = vmand %vm4539, %vm4557
    %vm4576 = vmand %vm4540, %vm4558
    %vm4577 = vmand %vm4541, %vm4559
    %vm4578 = vmand %vm4542, %vm4560
    %vm4579 = vmand %vm4543, %vm4561
    %vm4580 = vmand %vm4544, %vm4562
    %vm4581 = vmand %vm4545, %vm4563
    %vm4582 = vmand %vm4546, %vm4564
    %vm4583 = vmand %vm4547, %vm4565
    %vm4584 = vmand %vm4548, %vm4566
    %vm4585 = vmand %vm4549, %vm4567
    %vm4586 = vmand %vm4550, %vm4568
    %vm4587 = vmand %vm4551, %vm4569
    %vm4588 = vmand %vm4552, %vm4570
    %v4589 = vsel %vm4571, 1, 0
    %v4590 = vsel %vm4572, 1, 0
    %v4591 = vsel %vm4573, 1, 0
    %v4592 = vsel %vm4574, 1, 0
    %v4593 = vsel %vm4575, 1, 0
    %v4594 = vsel %vm4576, 1, 0
    %v4595 = vsel %vm4577, 1, 0
    %v4596 = vsel %vm4578, 1, 0
    %v4597 = vsel %vm4579, 1, 0
    %v4598 = vsel %vm4580, 1, 0
    %v4599 = vsel %vm4581, 1, 0
    %v4600 = vsel %vm4582, 1, 0
    %v4601 = vsel %vm4583, 1, 0
    %v4602 = vsel %vm4584, 1, 0
    %v4603 = vsel %vm4585, 1, 0
    %v4604 = vsel %vm4586, 1, 0
    %v4605 = vsel %vm4587, 1, 0
    %v4606 = vsel %vm4588, 1, 0
    %v4607 = vcvt.s32.f32 %v4589
    %v4608 = vcvt.s32.f32 %v4590
    %v4609 = vcvt.s32.f32 %v4591
    %v4610 = vcvt.s32.f32 %v4592
    %v4611 = vcvt.s32.f32 %v4593
    %v4612 = vcvt.s32.f32 %v4594
    %v4613 = vcvt.s32.f32 %v4595
    %v4614 = vcvt.s32.f32 %v4596
    %v4615 = vcvt.s32.f32 %v4597
    %v4616 = vcvt.s32.f32 %v4598
    %v4617 = vcvt.s32.f32 %v4599
    %v4618 = vcvt.s32.f32 %v4600
    %v4619 = vcvt.s32.f32 %v4601
    %v4620 = vcvt.s32.f32 %v4602
    %v4621 = vcvt.s32.f32 %v4603
    %v4622 = vcvt.s32.f32 %v4604
    %v4623 = vcvt.s32.f32 %v4605
    %v4624 = vcvt.s32.f32 %v4606
    %v4625 = vadd.f32 %v4607, 0.0
    %v4626 = vadd.f32 %v4608, 0.0
    %v4627 = vadd.f32 %v4609, 0.0
    %v4628 = vadd.f32 %v4610, 0.0
    %v4629 = vadd.f32 %v4611, 0.0
    %v4630 = vadd.f32 %v4612, 0.0
    %v4631 = vadd.f32 %v4613, 0.0
    %v4632 = vadd.f32 %v4614, 0.0
    %v4633 = vadd.f32 %v4615, 0.0
    %v4634 = vadd.f32 %v4616, 0.0
    %v4635 = vadd.f32 %v4617, 0.0
    %v4636 = vadd.f32 %v4618, 0.0
    %v4637 = vadd.f32 %v4619, 0.0
    %v4638 = vadd.f32 %v4620, 0.0
    %v4639 = vadd.f32 %v4621, 0.0
    %v4640 = vadd.f32 %v4622, 0.0
    %v4641 = vadd.f32 %v4623, 0.0
    %v4642 = vadd.f32 %v4624, 0.0
    %vm4643 = vcmp.ge.s32.totalorder %v4517, 72
    %vm4644 = vcmp.ge.s32.totalorder %v4518, 72
    %vm4645 = vcmp.ge.s32.totalorder %v4519, 72
    %vm4646 = vcmp.ge.s32.totalorder %v4520, 72
    %vm4647 = vcmp.ge.s32.totalorder %v4521, 72
    %vm4648 = vcmp.ge.s32.totalorder %v4522, 72
    %vm4649 = vcmp.ge.s32.totalorder %v4523, 72
    %vm4650 = vcmp.ge.s32.totalorder %v4524, 72
    %vm4651 = vcmp.ge.s32.totalorder %v4525, 72
    %vm4652 = vcmp.ge.s32.totalorder %v4526, 72
    %vm4653 = vcmp.ge.s32.totalorder %v4527, 72
    %vm4654 = vcmp.ge.s32.totalorder %v4528, 72
    %vm4655 = vcmp.ge.s32.totalorder %v4529, 72
    %vm4656 = vcmp.ge.s32.totalorder %v4530, 72
    %vm4657 = vcmp.ge.s32.totalorder %v4531, 72
    %vm4658 = vcmp.ge.s32.totalorder %v4532, 72
    %vm4659 = vcmp.ge.s32.totalorder %v4533, 72
    %vm4660 = vcmp.ge.s32.totalorder %v4534, 72
    %vm4661 = vcmp.lt.s32.totalorder %v4517, 137
    %vm4662 = vcmp.lt.s32.totalorder %v4518, 137
    %vm4663 = vcmp.lt.s32.totalorder %v4519, 137
    %vm4664 = vcmp.lt.s32.totalorder %v4520, 137
    %vm4665 = vcmp.lt.s32.totalorder %v4521, 137
    %vm4666 = vcmp.lt.s32.totalorder %v4522, 137
    %vm4667 = vcmp.lt.s32.totalorder %v4523, 137
    %vm4668 = vcmp.lt.s32.totalorder %v4524, 137
    %vm4669 = vcmp.lt.s32.totalorder %v4525, 137
    %vm4670 = vcmp.lt.s32.totalorder %v4526, 137
    %vm4671 = vcmp.lt.s32.totalorder %v4527, 137
    %vm4672 = vcmp.lt.s32.totalorder %v4528, 137
    %vm4673 = vcmp.lt.s32.totalorder %v4529, 137
    %vm4674 = vcmp.lt.s32.totalorder %v4530, 137
    %vm4675 = vcmp.lt.s32.totalorder %v4531, 137
    %vm4676 = vcmp.lt.s32.totalorder %v4532, 137
    %vm4677 = vcmp.lt.s32.totalorder %v4533, 137
    %vm4678 = vcmp.lt.s32.totalorder %v4534, 137
    %vm4679 = vmand %vm4643, %vm4661
    %vm4680 = vmand %vm4644, %vm4662
    %vm4681 = vmand %vm4645, %vm4663
    %vm4682 = vmand %vm4646, %vm4664
    %vm4683 = vmand %vm4647, %vm4665
    %vm4684 = vmand %vm4648, %vm4666
    %vm4685 = vmand %vm4649, %vm4667
    %vm4686 = vmand %vm4650, %vm4668
    %vm4687 = vmand %vm4651, %vm4669
    %vm4688 = vmand %vm4652, %vm4670
    %vm4689 = vmand %vm4653, %vm4671
    %vm4690 = vmand %vm4654, %vm4672
    %vm4691 = vmand %vm4655, %vm4673
    %vm4692 = vmand %vm4656, %vm4674
    %vm4693 = vmand %vm4657, %vm4675
    %vm4694 = vmand %vm4658, %vm4676
    %vm4695 = vmand %vm4659, %vm4677
    %vm4696 = vmand %vm4660, %vm4678
    %v4697 = vsel %vm4679, 1, 0
    %v4698 = vsel %vm4680, 1, 0
    %v4699 = vsel %vm4681, 1, 0
    %v4700 = vsel %vm4682, 1, 0
    %v4701 = vsel %vm4683, 1, 0
    %v4702 = vsel %vm4684, 1, 0
    %v4703 = vsel %vm4685, 1, 0
    %v4704 = vsel %vm4686, 1, 0
    %v4705 = vsel %vm4687, 1, 0
    %v4706 = vsel %vm4688, 1, 0
    %v4707 = vsel %vm4689, 1, 0
    %v4708 = vsel %vm4690, 1, 0
    %v4709 = vsel %vm4691, 1, 0
    %v4710 = vsel %vm4692, 1, 0
    %v4711 = vsel %vm4693, 1, 0
    %v4712 = vsel %vm4694, 1, 0
    %v4713 = vsel %vm4695, 1, 0
    %v4714 = vsel %vm4696, 1, 0
    %v4715 = vcvt.s32.f32 %v4697
    %v4716 = vcvt.s32.f32 %v4698
    %v4717 = vcvt.s32.f32 %v4699
    %v4718 = vcvt.s32.f32 %v4700
    %v4719 = vcvt.s32.f32 %v4701
    %v4720 = vcvt.s32.f32 %v4702
    %v4721 = vcvt.s32.f32 %v4703
    %v4722 = vcvt.s32.f32 %v4704
    %v4723 = vcvt.s32.f32 %v4705
    %v4724 = vcvt.s32.f32 %v4706
    %v4725 = vcvt.s32.f32 %v4707
    %v4726 = vcvt.s32.f32 %v4708
    %v4727 = vcvt.s32.f32 %v4709
    %v4728 = vcvt.s32.f32 %v4710
    %v4729 = vcvt.s32.f32 %v4711
    %v4730 = vcvt.s32.f32 %v4712
    %v4731 = vcvt.s32.f32 %v4713
    %v4732 = vcvt.s32.f32 %v4714
    %v4733 = vadd.f32 %v4625, %v4715
    %v4734 = vadd.f32 %v4626, %v4716
    %v4735 = vadd.f32 %v4627, %v4717
    %v4736 = vadd.f32 %v4628, %v4718
    %v4737 = vadd.f32 %v4629, %v4719
    %v4738 = vadd.f32 %v4630, %v4720
    %v4739 = vadd.f32 %v4631, %v4721
    %v4740 = vadd.f32 %v4632, %v4722
    %v4741 = vadd.f32 %v4633, %v4723
    %v4742 = vadd.f32 %v4634, %v4724
    %v4743 = vadd.f32 %v4635, %v4725
    %v4744 = vadd.f32 %v4636, %v4726
    %v4745 = vadd.f32 %v4637, %v4727
    %v4746 = vadd.f32 %v4638, %v4728
    %v4747 = vadd.f32 %v4639, %v4729
    %v4748 = vadd.f32 %v4640, %v4730
    %v4749 = vadd.f32 %v4641, %v4731
    %v4750 = vadd.f32 %v4642, %v4732
    %v4751 = vmul.f32 %v4428, %v4733
    %v4752 = vmul.f32 %v4433, %v4734
    %v4753 = vmul.f32 %v4438, %v4735
    %v4754 = vmul.f32 %v4443, %v4736
    %v4755 = vmul.f32 %v4448, %v4737
    %v4756 = vmul.f32 %v4453, %v4738
    %v4757 = vmul.f32 %v4458, %v4739
    %v4758 = vmul.f32 %v4463, %v4740
    %v4759 = vmul.f32 %v4468, %v4741
    %v4760 = vmul.f32 %v4473, %v4742
    %v4761 = vmul.f32 %v4478, %v4743
    %v4762 = vmul.f32 %v4483, %v4744
    %v4763 = vmul.f32 %v4488, %v4745
    %v4764 = vmul.f32 %v4493, %v4746
    %v4765 = vmul.f32 %v4498, %v4747
    %v4766 = vmul.f32 %v4503, %v4748
    %v4767 = vmul.f32 %v4508, %v4749
    %v4768 = vmul.f32 %v4513, %v4750
    %v4769 = vsel %vm32, %v4751, 0.0
    %v4770 = vsel %vm32, %v4752, 0.0
    %v4771 = vadd.f32 %v4769, %v4770
    %v4772 = vsel %vm32, %v4753, 0.0
    %v4773 = vadd.f32 %v4771, %v4772
    %v4774 = vsel %vm32, %v4754, 0.0
    %v4775 = vadd.f32 %v4773, %v4774
    %v4776 = vsel %vm32, %v4755, 0.0
    %v4777 = vadd.f32 %v4775, %v4776
    %v4778 = vsel %vm32, %v4756, 0.0
    %v4779 = vadd.f32 %v4777, %v4778
    %v4780 = vsel %vm32, %v4757, 0.0
    %v4781 = vadd.f32 %v4779, %v4780
    %v4782 = vsel %vm32, %v4758, 0.0
    %v4783 = vadd.f32 %v4781, %v4782
    %v4784 = vsel %vm32, %v4759, 0.0
    %v4785 = vadd.f32 %v4783, %v4784
    %v4786 = vsel %vm32, %v4760, 0.0
    %v4787 = vadd.f32 %v4785, %v4786
    %v4788 = vsel %vm32, %v4761, 0.0
    %v4789 = vadd.f32 %v4787, %v4788
    %v4790 = vsel %vm32, %v4762, 0.0
    %v4791 = vadd.f32 %v4789, %v4790
    %v4792 = vsel %vm32, %v4763, 0.0
    %v4793 = vadd.f32 %v4791, %v4792
    %v4794 = vsel %vm32, %v4764, 0.0
    %v4795 = vadd.f32 %v4793, %v4794
    %v4796 = vsel %vm32, %v4765, 0.0
    %v4797 = vadd.f32 %v4795, %v4796
    %v4798 = vsel %vm32, %v4766, 0.0
    %v4799 = vadd.f32 %v4797, %v4798
    %v4800 = vsel %vm32, %v4767, 0.0
    %v4801 = vadd.f32 %v4799, %v4800
    %v4802 = vsel %vm32, %v4768, 0.0
    %v4803 = vadd.f32 %v4801, %v4802
    %v4804 = vrot.slane %v4803, 4
    %v4805 = vadd.f32 %v4803, %v4804
    %v4806 = vrot.slane %v4805, 2
    %v4807 = vadd.f32 %v4805, %v4806
    %v4808 = vrot.slane %v4807, 1
    %v4809 = vadd.f32 %v4807, %v4808
    %v4810 = vmul.f32 %v4809, 0.0076923077
    %v4811 = vsub.f32 %v4428, %v4810
    %v4812 = vsub.f32 %v4433, %v4810
    %v4813 = vsub.f32 %v4438, %v4810
    %v4814 = vsub.f32 %v4443, %v4810
    %v4815 = vsub.f32 %v4448, %v4810
    %v4816 = vsub.f32 %v4453, %v4810
    %v4817 = vsub.f32 %v4458, %v4810
    %v4818 = vsub.f32 %v4463, %v4810
    %v4819 = vsub.f32 %v4468, %v4810
    %v4820 = vsub.f32 %v4473, %v4810
    %v4821 = vsub.f32 %v4478, %v4810
    %v4822 = vsub.f32 %v4483, %v4810
    %v4823 = vsub.f32 %v4488, %v4810
    %v4824 = vsub.f32 %v4493, %v4810
    %v4825 = vsub.f32 %v4498, %v4810
    %v4826 = vsub.f32 %v4503, %v4810
    %v4827 = vsub.f32 %v4508, %v4810
    %v4828 = vsub.f32 %v4513, %v4810
    %v4829 = vmul.f32 %v4811, %v4733
    %v4830 = vmul.f32 %v4812, %v4734
    %v4831 = vmul.f32 %v4813, %v4735
    %v4832 = vmul.f32 %v4814, %v4736
    %v4833 = vmul.f32 %v4815, %v4737
    %v4834 = vmul.f32 %v4816, %v4738
    %v4835 = vmul.f32 %v4817, %v4739
    %v4836 = vmul.f32 %v4818, %v4740
    %v4837 = vmul.f32 %v4819, %v4741
    %v4838 = vmul.f32 %v4820, %v4742
    %v4839 = vmul.f32 %v4821, %v4743
    %v4840 = vmul.f32 %v4822, %v4744
    %v4841 = vmul.f32 %v4823, %v4745
    %v4842 = vmul.f32 %v4824, %v4746
    %v4843 = vmul.f32 %v4825, %v4747
    %v4844 = vmul.f32 %v4826, %v4748
    %v4845 = vmul.f32 %v4827, %v4749
    %v4846 = vmul.f32 %v4828, %v4750
    %v4847 = vmul.f32 %v4829, %v4829
    %v4848 = vmul.f32 %v4830, %v4830
    %v4849 = vmul.f32 %v4831, %v4831
    %v4850 = vmul.f32 %v4832, %v4832
    %v4851 = vmul.f32 %v4833, %v4833
    %v4852 = vmul.f32 %v4834, %v4834
    %v4853 = vmul.f32 %v4835, %v4835
    %v4854 = vmul.f32 %v4836, %v4836
    %v4855 = vmul.f32 %v4837, %v4837
    %v4856 = vmul.f32 %v4838, %v4838
    %v4857 = vmul.f32 %v4839, %v4839
    %v4858 = vmul.f32 %v4840, %v4840
    %v4859 = vmul.f32 %v4841, %v4841
    %v4860 = vmul.f32 %v4842, %v4842
    %v4861 = vmul.f32 %v4843, %v4843
    %v4862 = vmul.f32 %v4844, %v4844
    %v4863 = vmul.f32 %v4845, %v4845
    %v4864 = vmul.f32 %v4846, %v4846
    %v4865 = vsel %vm32, %v4847, 0.0
    %v4866 = vsel %vm32, %v4848, 0.0
    %v4867 = vadd.f32 %v4865, %v4866
    %v4868 = vsel %vm32, %v4849, 0.0
    %v4869 = vadd.f32 %v4867, %v4868
    %v4870 = vsel %vm32, %v4850, 0.0
    %v4871 = vadd.f32 %v4869, %v4870
    %v4872 = vsel %vm32, %v4851, 0.0
    %v4873 = vadd.f32 %v4871, %v4872
    %v4874 = vsel %vm32, %v4852, 0.0
    %v4875 = vadd.f32 %v4873, %v4874
    %v4876 = vsel %vm32, %v4853, 0.0
    %v4877 = vadd.f32 %v4875, %v4876
    %v4878 = vsel %vm32, %v4854, 0.0
    %v4879 = vadd.f32 %v4877, %v4878
    %v4880 = vsel %vm32, %v4855, 0.0
    %v4881 = vadd.f32 %v4879, %v4880
    %v4882 = vsel %vm32, %v4856, 0.0
    %v4883 = vadd.f32 %v4881, %v4882
    %v4884 = vsel %vm32, %v4857, 0.0
    %v4885 = vadd.f32 %v4883, %v4884
    %v4886 = vsel %vm32, %v4858, 0.0
    %v4887 = vadd.f32 %v4885, %v4886
    %v4888 = vsel %vm32, %v4859, 0.0
    %v4889 = vadd.f32 %v4887, %v4888
    %v4890 = vsel %vm32, %v4860, 0.0
    %v4891 = vadd.f32 %v4889, %v4890
    %v4892 = vsel %vm32, %v4861, 0.0
    %v4893 = vadd.f32 %v4891, %v4892
    %v4894 = vsel %vm32, %v4862, 0.0
    %v4895 = vadd.f32 %v4893, %v4894
    %v4896 = vsel %vm32, %v4863, 0.0
    %v4897 = vadd.f32 %v4895, %v4896
    %v4898 = vsel %vm32, %v4864, 0.0
    %v4899 = vadd.f32 %v4897, %v4898
    %v4900 = vrot.slane %v4899, 4
    %v4901 = vadd.f32 %v4899, %v4900
    %v4902 = vrot.slane %v4901, 2
    %v4903 = vadd.f32 %v4901, %v4902
    %v4904 = vrot.slane %v4903, 1
    %v4905 = vadd.f32 %v4903, %v4904
    %v4906 = vmul.f32 %v4905, 0.0076923077
    %v4907 = vadd.f32 %v4906, 1e-05
    %v4908 = vrsqrt.pop %v4907
    %v4909 = vmul.f32 %v4811, %v4908
    %v4910 = vmul.f32 %v4812, %v4908
    %v4911 = vmul.f32 %v4813, %v4908
    %v4912 = vmul.f32 %v4814, %v4908
    %v4913 = vmul.f32 %v4815, %v4908
    %v4914 = vmul.f32 %v4816, %v4908
    %v4915 = vmul.f32 %v4817, %v4908
    %v4916 = vmul.f32 %v4818, %v4908
    %v4917 = vmul.f32 %v4819, %v4908
    %v4918 = vmul.f32 %v4820, %v4908
    %v4919 = vmul.f32 %v4821, %v4908
    %v4920 = vmul.f32 %v4822, %v4908
    %v4921 = vmul.f32 %v4823, %v4908
    %v4922 = vmul.f32 %v4824, %v4908
    %v4923 = vmul.f32 %v4825, %v4908
    %v4924 = vmul.f32 %v4826, %v4908
    %v4925 = vmul.f32 %v4827, %v4908
    %v4926 = vmul.f32 %v4828, %v4908
    %v4927 = vlaneseq
    %v4928 = vshrl.u32 %v4927, 7
    %v4929 = vsub.s32 1, %v4928
    %v4930 = vrot.slane %v4280, %v4929
    %v4931 = vmul.f32 %v4909, %v4930
    %v4932 = vmul.f32 %v4910, %v4930
    %v4933 = vmul.f32 %v4911, %v4930
    %v4934 = vmul.f32 %v4912, %v4930
    %v4935 = vmul.f32 %v4913, %v4930
    %v4936 = vmul.f32 %v4914, %v4930
    %v4937 = vmul.f32 %v4915, %v4930
    %v4938 = vmul.f32 %v4916, %v4930
    %v4939 = vmul.f32 %v4917, %v4930
    %v4940 = vmul.f32 %v4918, %v4930
    %v4941 = vmul.f32 %v4919, %v4930
    %v4942 = vmul.f32 %v4920, %v4930
    %v4943 = vmul.f32 %v4921, %v4930
    %v4944 = vmul.f32 %v4922, %v4930
    %v4945 = vmul.f32 %v4923, %v4930
    %v4946 = vmul.f32 %v4924, %v4930
    %v4947 = vmul.f32 %v4925, %v4930
    %v4948 = vmul.f32 %v4926, %v4930
    %v4949 = vlaneseq
    %v4950 = vshrl.u32 %v4949, 7
    %v4951 = vsub.s32 2, %v4950
    %v4952 = vrot.slane %v4280, %v4951
    %v4953 = vadd.f32 %v4931, %v4952
    %v4954 = vadd.f32 %v4932, %v4952
    %v4955 = vadd.f32 %v4933, %v4952
    %v4956 = vadd.f32 %v4934, %v4952
    %v4957 = vadd.f32 %v4935, %v4952
    %v4958 = vadd.f32 %v4936, %v4952
    %v4959 = vadd.f32 %v4937, %v4952
    %v4960 = vadd.f32 %v4938, %v4952
    %v4961 = vadd.f32 %v4939, %v4952
    %v4962 = vadd.f32 %v4940, %v4952
    %v4963 = vadd.f32 %v4941, %v4952
    %v4964 = vadd.f32 %v4942, %v4952
    %v4965 = vadd.f32 %v4943, %v4952
    %v4966 = vadd.f32 %v4944, %v4952
    %v4967 = vadd.f32 %v4945, %v4952
    %v4968 = vadd.f32 %v4946, %v4952
    %v4969 = vadd.f32 %v4947, %v4952
    %v4970 = vadd.f32 %v4948, %v4952
    %v4971 = vld [vmem:[%s4] sm:$0xff]
    %v4972 = vld [vmem:[%s4 + $0x8] sm:$0xff]
    %v4973 = vld [vmem:[%s4 + $0x10] sm:$0xff]
    %v4974 = vld [vmem:[%s4 + $0x18] sm:$0xff]
    %v4975 = vld [vmem:[%s5] sm:$0x1]
    %v4977 = vlaneseq
    %v4978 = vshrl.u32 %v4977, 7
    %v4979 = vsub.s32 0, %v4978
    %v4980 = vrot.slane %v4975, %v4979
    %v4983 = vsel %vm32, %v4953, 0
    %v4986 = vsel %vm32, %v4954, 0
    %v4989 = vsel %vm32, %v4955, 0
    %v4992 = vsel %vm32, %v4956, 0
    %v4995 = vsel %vm32, %v4957, 0
    %v4998 = vsel %vm32, %v4958, 0
    %v5001 = vsel %vm32, %v4959, 0
    %v5004 = vsel %vm32, %v4960, 0
    %v5007 = vsel %vm32, %v4961, 0
    %v5010 = vsel %vm32, %v4962, 0
    %v5013 = vsel %vm32, %v4963, 0
    %v5016 = vsel %vm32, %v4964, 0
    %v5019 = vsel %vm32, %v4965, 0
    %v5022 = vsel %vm32, %v4966, 0
    %v5025 = vsel %vm32, %v4967, 0
    %v5028 = vsel %vm32, %v4968, 0
    %v5031 = vsel %vm32, %v4969, 0
    %v5034 = vsel %vm32, %v4970, 0
    %5036 = vmatprep.subr.mxu0 0.0
    %5037 = vmatpush1.msra.mxu0 %v4971
    %5038 = vmatprep.subr.mxu0 0.0
    %5039 = vmatpush1.msra.mxu0 %v4972
    %5040 = vmatprep.subr.mxu0 0.0
    %5041 = vmatpush1.msra.mxu0 %v4973
    %5042 = vmatprep.subr.mxu0 0.0
    %5043 = vmatpush1.msra.mxu0 %v4974
    %5044 = vmatprep.subr.mxu0 0.0
    %5045 = vmatpush1.msra.mxu0 0.0
    %5046 = vmatprep.subr.mxu0 0.0
    %5047 = vmatpush1.msra.mxu0 0.0
    %5048 = vmatprep.subr.mxu0 0.0
    %5049 = vmatpush1.msra.mxu0 0.0
    %5050 = vmatprep.subr.mxu0 0.0
    %5051 = vmatpush1.msra.mxu0 0.0
    %5052 = vmatprep.subr.mxu0 0.0
    %5053 = vmatpush1.msra.mxu0 0.0
    %5054 = vmatprep.subr.mxu0 0.0
    %5055 = vmatpush1.msra.mxu0 0.0
    %5056 = vmatprep.subr.mxu0 0.0
    %5057 = vmatpush1.msra.mxu0 0.0
    %5058 = vmatprep.subr.mxu0 0.0
    %5059 = vmatpush1.msra.mxu0 0.0
    %5060 = vmatprep.subr.mxu0 0.0
    %5061 = vmatpush1.msra.mxu0 0.0
    %5062 = vmatprep.subr.mxu0 0.0
    %5063 = vmatpush1.msra.mxu0 0.0
    %5064 = vmatprep.subr.mxu0 0.0
    %5065 = vmatpush1.msra.mxu0 0.0
    %5066 = vmatprep.subr.mxu0 0.0
    %5067 = vmatpush1.msra.mxu0 0.0
    %5068 = vmatprep.subr.mxu0 0.0
    %5069 = vmatpush1.msra.mxu0 0.0
    %5070 = vmatprep.subr.mxu0 0.0
    %5071 = vmatpush1.msra.mxu0 0.0
    %5072 = vmatprep.subr.mxu0 0.0
    %5073 = vmatpush1.msra.mxu0 0.0
    %5074 = vmatprep.subr.mxu0 0.0
    %5075 = vmatpush1.msra.mxu0 0.0
    %5076 = vmatprep.subr.mxu0 0.0
    %5077 = vmatpush1.msra.mxu0 0.0
    %5078 = vmatprep.subr.mxu0 0.0
    %5079 = vmatpush1.msra.mxu0 0.0
    %5080 = vmatprep.subr.mxu0 0.0
    %5081 = vmatpush1.msra.mxu0 0.0
    %5082 = vmatprep.subr.mxu0 0.0
    %5083 = vmatpush1.msra.mxu0 0.0
    %5084 = vmatprep.subr.mxu0 0.0
    %5085 = vmatpush1.msra.mxu0 0.0
    %5086 = vmatprep.subr.mxu0 0.0
    %5087 = vmatpush1.msra.mxu0 0.0
    %5088 = vmatprep.subr.mxu0 0.0
    %5089 = vmatpush1.msra.mxu0 0.0
    %5090 = vmatprep.subr.mxu0 0.0
    %5091 = vmatpush1.msra.mxu0 0.0
    %5092 = vmatprep.subr.mxu0 0.0
    %5093 = vmatpush1.msra.mxu0 0.0
    %5094 = vmatprep.subr.mxu0 0.0
    %5095 = vmatpush1.msra.mxu0 0.0
    %5096 = vmatprep.subr.mxu0 0.0
    %5097 = vmatpush1.msra.mxu0 0.0
    %5098 = vmatprep.subr.mxu0 0.0
    %5099 = vmatpush1.msra.mxu0 0.0
    %5100 = vmatprep.mubr.f32.mxu0 0.0
    %5101 = vmatmul.mubr.f32.gmra.mrb[0].mxu0 %v4983
    %v5102 = vpop.f32.mrb[0].mxu0
    %v5103 = vadd.f32 %v4980, %v5102
    %v5104 = vpop.f32.mrb[0].mxu0
    %5105 = vmatprep.mubr.f32.mxu0 0.0
    %5106 = vmatmul.mubr.f32.gmra.mrb[0].mxu0 %v4986
    %v5107 = vpop.f32.mrb[0].mxu0
    %v5108 = vadd.f32 %v4980, %v5107
    %v5109 = vpop.f32.mrb[0].mxu0
    %5110 = vmatprep.mubr.f32.mxu0 0.0
    %5111 = vmatmul.mubr.f32.gmra.mrb[0].mxu0 %v4989
    %v5112 = vpop.f32.mrb[0].mxu0
    %v5113 = vadd.f32 %v4980, %v5112
    %v5114 = vpop.f32.mrb[0].mxu0
    %5115 = vmatprep.mubr.f32.mxu0 0.0
    %5116 = vmatmul.mubr.f32.gmra.mrb[0].mxu0 %v4992
    %v5117 = vpop.f32.mrb[0].mxu0
    %v5118 = vadd.f32 %v4980, %v5117
    %v5119 = vpop.f32.mrb[0].mxu0
    %5120 = vmatprep.mubr.f32.mxu0 0.0
    %5121 = vmatmul.mubr.f32.gmra.mrb[0].mxu0 %v4995
    %v5122 = vpop.f32.mrb[0].mxu0
    %v5123 = vadd.f32 %v4980, %v5122
    %v5124 = vpop.f32.mrb[0].mxu0
    %5125 = vmatprep.mubr.f32.mxu0 0.0
    %5126 = vmatmul.mubr.f32.gmra.mrb[0].mxu0 %v4998
    %v5127 = vpop.f32.mrb[0].mxu0
    %v5128 = vadd.f32 %v4980, %v5127
    %v5129 = vpop.f32.mrb[0].mxu0
    %5130 = vmatprep.mubr.f32.mxu0 0.0
    %5131 = vmatmul.mubr.f32.gmra.mrb[0].mxu0 %v5001
    %v5132 = vpop.f32.mrb[0].mxu0
    %v5133 = vadd.f32 %v4980, %v5132
    %v5134 = vpop.f32.mrb[0].mxu0
    %5135 = vmatprep.mubr.f32.mxu0 0.0
    %5136 = vmatmul.mubr.f32.gmra.mrb[0].mxu0 %v5004
    %v5137 = vpop.f32.mrb[0].mxu0
    %v5138 = vadd.f32 %v4980, %v5137
    %v5139 = vpop.f32.mrb[0].mxu0
    %5140 = vmatprep.mubr.f32.mxu0 0.0
    %5141 = vmatmul.mubr.f32.gmra.mrb[0].mxu0 %v5007
    %v5142 = vpop.f32.mrb[0].mxu0
    %v5143 = vadd.f32 %v4980, %v5142
    %v5144 = vpop.f32.mrb[0].mxu0
    %5145 = vmatprep.mubr.f32.mxu0 0.0
    %5146 = vmatmul.mubr.f32.gmra.mrb[0].mxu0 %v5010
    %v5147 = vpop.f32.mrb[0].mxu0
    %v5148 = vadd.f32 %v4980, %v5147
    %v5149 = vpop.f32.mrb[0].mxu0
    %5150 = vmatprep.mubr.f32.mxu0 0.0
    %5151 = vmatmul.mubr.f32.gmra.mrb[0].mxu0 %v5013
    %v5152 = vpop.f32.mrb[0].mxu0
    %v5153 = vadd.f32 %v4980, %v5152
    %v5154 = vpop.f32.mrb[0].mxu0
    %5155 = vmatprep.mubr.f32.mxu0 0.0
    %5156 = vmatmul.mubr.f32.gmra.mrb[0].mxu0 %v5016
    %v5157 = vpop.f32.mrb[0].mxu0
    %v5158 = vadd.f32 %v4980, %v5157
    %v5159 = vpop.f32.mrb[0].mxu0
    %5160 = vmatprep.mubr.f32.mxu0 0.0
    %5161 = vmatmul.mubr.f32.gmra.mrb[0].mxu0 %v5019
    %v5162 = vpop.f32.mrb[0].mxu0
    %v5163 = vadd.f32 %v4980, %v5162
    %v5164 = vpop.f32.mrb[0].mxu0
    %5165 = vmatprep.mubr.f32.mxu0 0.0
    %5166 = vmatmul.mubr.f32.gmra.mrb[0].mxu0 %v5022
    %v5167 = vpop.f32.mrb[0].mxu0
    %v5168 = vadd.f32 %v4980, %v5167
    %v5169 = vpop.f32.mrb[0].mxu0
    %5170 = vmatprep.mubr.f32.mxu0 0.0
    %5171 = vmatmul.mubr.f32.gmra.mrb[0].mxu0 %v5025
    %v5172 = vpop.f32.mrb[0].mxu0
    %v5173 = vadd.f32 %v4980, %v5172
    %v5174 = vpop.f32.mrb[0].mxu0
    %5175 = vmatprep.mubr.f32.mxu0 0.0
    %5176 = vmatmul.mubr.f32.gmra.mrb[0].mxu0 %v5028
    %v5177 = vpop.f32.mrb[0].mxu0
    %v5178 = vadd.f32 %v4980, %v5177
    %v5179 = vpop.f32.mrb[0].mxu0
    %5180 = vmatprep.mubr.f32.mxu0 0.0
    %5181 = vmatmul.mubr.f32.gmra.mrb[0].mxu0 %v5031
    %v5182 = vpop.f32.mrb[0].mxu0
    %v5183 = vadd.f32 %v4980, %v5182
    %v5184 = vpop.f32.mrb[0].mxu0
    %5185 = vmatprep.mubr.f32.mxu0 0.0
    %5186 = vmatmul.mubr.f32.gmra.mrb[0].mxu0 %v5034
    %v5187 = vpop.f32.mrb[0].mxu0
    %v5188 = vadd.f32 %v4980, %v5187
    %v5189 = vpop.f32.mrb[0].mxu0
    %5190 = vdwg.mxu0
    %v5191 = vmul.f32 %v5103, 0.5
    %v5192 = vmul.f32 %v5108, 0.5
    %v5193 = vmul.f32 %v5113, 0.5
    %v5194 = vmul.f32 %v5118, 0.5
    %v5195 = vmul.f32 %v5123, 0.5
    %v5196 = vmul.f32 %v5128, 0.5
    %v5197 = vmul.f32 %v5133, 0.5
    %v5198 = vmul.f32 %v5138, 0.5
    %v5199 = vmul.f32 %v5143, 0.5
    %v5200 = vmul.f32 %v5148, 0.5
    %v5201 = vmul.f32 %v5153, 0.5
    %v5202 = vmul.f32 %v5158, 0.5
    %v5203 = vmul.f32 %v5163, 0.5
    %v5204 = vmul.f32 %v5168, 0.5
    %v5205 = vmul.f32 %v5173, 0.5
    %v5206 = vmul.f32 %v5178, 0.5
    %v5207 = vmul.f32 %v5183, 0.5
    %v5208 = vmul.f32 %v5188, 0.5
    %v5209 = vmul.f32 %v5103, 0.70710677
    %v5210 = vmul.f32 %v5108, 0.70710677
    %v5211 = vmul.f32 %v5113, 0.70710677
    %v5212 = vmul.f32 %v5118, 0.70710677
    %v5213 = vmul.f32 %v5123, 0.70710677
    %v5214 = vmul.f32 %v5128, 0.70710677
    %v5215 = vmul.f32 %v5133, 0.70710677
    %v5216 = vmul.f32 %v5138, 0.70710677
    %v5217 = vmul.f32 %v5143, 0.70710677
    %v5218 = vmul.f32 %v5148, 0.70710677
    %v5219 = vmul.f32 %v5153, 0.70710677
    %v5220 = vmul.f32 %v5158, 0.70710677
    %v5221 = vmul.f32 %v5163, 0.70710677
    %v5222 = vmul.f32 %v5168, 0.70710677
    %v5223 = vmul.f32 %v5173, 0.70710677
    %v5224 = vmul.f32 %v5178, 0.70710677
    %v5225 = vmul.f32 %v5183, 0.70710677
    %v5226 = vmul.f32 %v5188, 0.70710677
    %v5227 = verf.f32.pop %v5209
    %v5228 = verf.f32.pop %v5210
    %v5229 = verf.f32.pop %v5211
    %v5230 = verf.f32.pop %v5212
    %v5231 = verf.f32.pop %v5213
    %v5232 = verf.f32.pop %v5214
    %v5233 = verf.f32.pop %v5215
    %v5234 = verf.f32.pop %v5216
    %v5235 = verf.f32.pop %v5217
    %v5236 = verf.f32.pop %v5218
    %v5237 = verf.f32.pop %v5219
    %v5238 = verf.f32.pop %v5220
    %v5239 = verf.f32.pop %v5221
    %v5240 = verf.f32.pop %v5222
    %v5241 = verf.f32.pop %v5223
    %v5242 = verf.f32.pop %v5224
    %v5243 = verf.f32.pop %v5225
    %v5244 = verf.f32.pop %v5226
    %v5245 = vadd.f32 %v5227, 1.0
    %v5246 = vadd.f32 %v5228, 1.0
    %v5247 = vadd.f32 %v5229, 1.0
    %v5248 = vadd.f32 %v5230, 1.0
    %v5249 = vadd.f32 %v5231, 1.0
    %v5250 = vadd.f32 %v5232, 1.0
    %v5251 = vadd.f32 %v5233, 1.0
    %v5252 = vadd.f32 %v5234, 1.0
    %v5253 = vadd.f32 %v5235, 1.0
    %v5254 = vadd.f32 %v5236, 1.0
    %v5255 = vadd.f32 %v5237, 1.0
    %v5256 = vadd.f32 %v5238, 1.0
    %v5257 = vadd.f32 %v5239, 1.0
    %v5258 = vadd.f32 %v5240, 1.0
    %v5259 = vadd.f32 %v5241, 1.0
    %v5260 = vadd.f32 %v5242, 1.0
    %v5261 = vadd.f32 %v5243, 1.0
    %v5262 = vadd.f32 %v5244, 1.0
    %v5263 = vmul.f32 %v5191, %v5245
    %v5264 = vmul.f32 %v5192, %v5246
    %v5265 = vmul.f32 %v5193, %v5247
    %v5266 = vmul.f32 %v5194, %v5248
    %v5267 = vmul.f32 %v5195, %v5249
    %v5268 = vmul.f32 %v5196, %v5250
    %v5269 = vmul.f32 %v5197, %v5251
    %v5270 = vmul.f32 %v5198, %v5252
    %v5271 = vmul.f32 %v5199, %v5253
    %v5272 = vmul.f32 %v5200, %v5254
    %v5273 = vmul.f32 %v5201, %v5255
    %v5274 = vmul.f32 %v5202, %v5256
    %v5275 = vmul.f32 %v5203, %v5257
    %v5276 = vmul.f32 %v5204, %v5258
    %v5277 = vmul.f32 %v5205, %v5259
    %v5278 = vmul.f32 %v5206, %v5260
    %v5279 = vmul.f32 %v5207, %v5261
    %v5280 = vmul.f32 %v5208, %v5262
    %v5281 = vld [vmem:[%s6] sm:$0xff]
    %v5282 = vld [vmem:[%s6 + $0x8] sm:$0xff]
    %v5283 = vld [vmem:[%s6 + $0x10] sm:$0xff]
    %v5284 = vld [vmem:[%s6 + $0x18] sm:$0xff]
    %v5285 = vld [vmem:[%s6 + $0x20] sm:$0xff]
    %v5286 = vld [vmem:[%s6 + $0x28] sm:$0xff]
    %v5287 = vld [vmem:[%s6 + $0x30] sm:$0xff]
    %v5288 = vld [vmem:[%s6 + $0x38] sm:$0xff]
    %v5289 = vlaneseq
    %v5290 = vshrl.u32 %v5289, 7
    %v5291 = vsub.s32 3, %v5290
    %v5292 = vrot.slane %v4280, %v5291
    %vm5293 = vcmask 523264
    %v5295 = vsel %vm5293, %v5263, 0
    %v5298 = vsel %vm5293, %v5264, 0
    %v5301 = vsel %vm5293, %v5265, 0
    %v5304 = vsel %vm5293, %v5266, 0
    %v5307 = vsel %vm5293, %v5267, 0
    %v5310 = vsel %vm5293, %v5268, 0
    %v5313 = vsel %vm5293, %v5269, 0
    %v5316 = vsel %vm5293, %v5270, 0
    %v5319 = vsel %vm5293, %v5271, 0
    %v5322 = vsel %vm5293, %v5272, 0
    %v5325 = vsel %vm5293, %v5273, 0
    %v5328 = vsel %vm5293, %v5274, 0
    %v5331 = vsel %vm5293, %v5275, 0
    %v5334 = vsel %vm5293, %v5276, 0
    %v5337 = vsel %vm5293, %v5277, 0
    %v5340 = vsel %vm5293, %v5278, 0
    %v5343 = vsel %vm5293, %v5279, 0
    %v5346 = vsel %vm5293, %v5280, 0
    %5348 = vmatprep.subr.mxu0 0.0
    %5349 = vmatpush1.msra.mxu0 %v5281
    %5350 = vmatprep.subr.mxu0 0.0
    %5351 = vmatpush1.msra.mxu0 %v5282
    %5352 = vmatprep.subr.mxu0 0.0
    %5353 = vmatpush1.msra.mxu0 %v5283
    %5354 = vmatprep.subr.mxu0 0.0
    %5355 = vmatpush1.msra.mxu0 %v5284
    %5356 = vmatprep.subr.mxu0 0.0
    %5357 = vmatpush1.msra.mxu0 %v5285
    %5358 = vmatprep.subr.mxu0 0.0
    %5359 = vmatpush1.msra.mxu0 %v5286
    %5360 = vmatprep.subr.mxu0 0.0
    %5361 = vmatpush1.msra.mxu0 %v5287
    %5362 = vmatprep.subr.mxu0 0.0
    %5363 = vmatpush1.msra.mxu0 %v5288
    %5364 = vmatprep.subr.mxu0 0.0
    %5365 = vmatpush1.msra.mxu0 0.0
    %5366 = vmatprep.subr.mxu0 0.0
    %5367 = vmatpush1.msra.mxu0 0.0
    %5368 = vmatprep.subr.mxu0 0.0
    %5369 = vmatpush1.msra.mxu0 0.0
    %5370 = vmatprep.subr.mxu0 0.0
    %5371 = vmatpush1.msra.mxu0 0.0
    %5372 = vmatprep.subr.mxu0 0.0
    %5373 = vmatpush1.msra.mxu0 0.0
    %5374 = vmatprep.subr.mxu0 0.0
    %5375 = vmatpush1.msra.mxu0 0.0
    %5376 = vmatprep.subr.mxu0 0.0
    %5377 = vmatpush1.msra.mxu0 0.0
    %5378 = vmatprep.subr.mxu0 0.0
    %5379 = vmatpush1.msra.mxu0 0.0
    %5380 = vmatprep.subr.mxu0 0.0
    %5381 = vmatpush1.msra.mxu0 0.0
    %5382 = vmatprep.subr.mxu0 0.0
    %5383 = vmatpush1.msra.mxu0 0.0
    %5384 = vmatprep.subr.mxu0 0.0
    %5385 = vmatpush1.msra.mxu0 0.0
    %5386 = vmatprep.subr.mxu0 0.0
    %5387 = vmatpush1.msra.mxu0 0.0
    %5388 = vmatprep.subr.mxu0 0.0
    %5389 = vmatpush1.msra.mxu0 0.0
    %5390 = vmatprep.subr.mxu0 0.0
    %5391 = vmatpush1.msra.mxu0 0.0
    %5392 = vmatprep.subr.mxu0 0.0
    %5393 = vmatpush1.msra.mxu0 0.0
    %5394 = vmatprep.subr.mxu0 0.0
    %5395 = vmatpush1.msra.mxu0 0.0
    %5396 = vmatprep.subr.mxu0 0.0
    %5397 = vmatpush1.msra.mxu0 0.0
    %5398 = vmatprep.subr.mxu0 0.0
    %5399 = vmatpush1.msra.mxu0 0.0
    %5400 = vmatprep.subr.mxu0 0.0
    %5401 = vmatpush1.msra.mxu0 0.0
    %5402 = vmatprep.subr.mxu0 0.0
    %5403 = vmatpush1.msra.mxu0 0.0
    %5404 = vmatprep.subr.mxu0 0.0
    %5405 = vmatpush1.msra.mxu0 0.0
    %5406 = vmatprep.subr.mxu0 0.0
    %5407 = vmatpush1.msra.mxu0 0.0
    %5408 = vmatprep.subr.mxu0 0.0
    %5409 = vmatpush1.msra.mxu0 0.0
    %5410 = vmatprep.subr.mxu0 0.0
    %5411 = vmatpush1.msra.mxu0 0.0
    %5412 = vmatprep.mubr.f32.mxu0 0.0
    %5413 = vmatmul.mubr.f32.gmra.mrb[0].mxu0 %v5295
    %v5414 = vpop.f32.mrb[0].mxu0
    %v5415 = vadd.f32 %v5292, %v5414
    %v5416 = vpop.f32.mrb[0].mxu0
    %5417 = vmatprep.mubr.f32.mxu0 0.0
    %5418 = vmatmul.mubr.f32.gmra.mrb[0].mxu0 %v5298
    %v5419 = vpop.f32.mrb[0].mxu0
    %v5420 = vadd.f32 %v5292, %v5419
    %v5421 = vpop.f32.mrb[0].mxu0
    %5422 = vmatprep.mubr.f32.mxu0 0.0
    %5423 = vmatmul.mubr.f32.gmra.mrb[0].mxu0 %v5301
    %v5424 = vpop.f32.mrb[0].mxu0
    %v5425 = vadd.f32 %v5292, %v5424
    %v5426 = vpop.f32.mrb[0].mxu0
    %5427 = vmatprep.mubr.f32.mxu0 0.0
    %5428 = vmatmul.mubr.f32.gmra.mrb[0].mxu0 %v5304
    %v5429 = vpop.f32.mrb[0].mxu0
    %v5430 = vadd.f32 %v5292, %v5429
    %v5431 = vpop.f32.mrb[0].mxu0
    %5432 = vmatprep.mubr.f32.mxu0 0.0
    %5433 = vmatmul.mubr.f32.gmra.mrb[0].mxu0 %v5307
    %v5434 = vpop.f32.mrb[0].mxu0
    %v5435 = vadd.f32 %v5292, %v5434
    %v5436 = vpop.f32.mrb[0].mxu0
    %5437 = vmatprep.mubr.f32.mxu0 0.0
    %5438 = vmatmul.mubr.f32.gmra.mrb[0].mxu0 %v5310
    %v5439 = vpop.f32.mrb[0].mxu0
    %v5440 = vadd.f32 %v5292, %v5439
    %v5441 = vpop.f32.mrb[0].mxu0
    %5442 = vmatprep.mubr.f32.mxu0 0.0
    %5443 = vmatmul.mubr.f32.gmra.mrb[0].mxu0 %v5313
    %v5444 = vpop.f32.mrb[0].mxu0
    %v5445 = vadd.f32 %v5292, %v5444
    %v5446 = vpop.f32.mrb[0].mxu0
    %5447 = vmatprep.mubr.f32.mxu0 0.0
    %5448 = vmatmul.mubr.f32.gmra.mrb[0].mxu0 %v5316
    %v5449 = vpop.f32.mrb[0].mxu0
    %v5450 = vadd.f32 %v5292, %v5449
    %v5451 = vpop.f32.mrb[0].mxu0
    %5452 = vmatprep.mubr.f32.mxu0 0.0
    %5453 = vmatmul.mubr.f32.gmra.mrb[0].mxu0 %v5319
    %v5454 = vpop.f32.mrb[0].mxu0
    %v5455 = vadd.f32 %v5292, %v5454
    %v5456 = vpop.f32.mrb[0].mxu0
    %5457 = vmatprep.mubr.f32.mxu0 0.0
    %5458 = vmatmul.mubr.f32.gmra.mrb[0].mxu0 %v5322
    %v5459 = vpop.f32.mrb[0].mxu0
    %v5460 = vadd.f32 %v5292, %v5459
    %v5461 = vpop.f32.mrb[0].mxu0
    %5462 = vmatprep.mubr.f32.mxu0 0.0
    %5463 = vmatmul.mubr.f32.gmra.mrb[0].mxu0 %v5325
    %v5464 = vpop.f32.mrb[0].mxu0
    %v5465 = vadd.f32 %v5292, %v5464
    %v5466 = vpop.f32.mrb[0].mxu0
    %5467 = vmatprep.mubr.f32.mxu0 0.0
    %5468 = vmatmul.mubr.f32.gmra.mrb[0].mxu0 %v5328
    %v5469 = vpop.f32.mrb[0].mxu0
    %v5470 = vadd.f32 %v5292, %v5469
    %v5471 = vpop.f32.mrb[0].mxu0
    %5472 = vmatprep.mubr.f32.mxu0 0.0
    %5473 = vmatmul.mubr.f32.gmra.mrb[0].mxu0 %v5331
    %v5474 = vpop.f32.mrb[0].mxu0
    %v5475 = vadd.f32 %v5292, %v5474
    %v5476 = vpop.f32.mrb[0].mxu0
    %5477 = vmatprep.mubr.f32.mxu0 0.0
    %5478 = vmatmul.mubr.f32.gmra.mrb[0].mxu0 %v5334
    %v5479 = vpop.f32.mrb[0].mxu0
    %v5480 = vadd.f32 %v5292, %v5479
    %v5481 = vpop.f32.mrb[0].mxu0
    %5482 = vmatprep.mubr.f32.mxu0 0.0
    %5483 = vmatmul.mubr.f32.gmra.mrb[0].mxu0 %v5337
    %v5484 = vpop.f32.mrb[0].mxu0
    %v5485 = vadd.f32 %v5292, %v5484
    %v5486 = vpop.f32.mrb[0].mxu0
    %5487 = vmatprep.mubr.f32.mxu0 0.0
    %5488 = vmatmul.mubr.f32.gmra.mrb[0].mxu0 %v5340
    %v5489 = vpop.f32.mrb[0].mxu0
    %v5490 = vadd.f32 %v5292, %v5489
    %v5491 = vpop.f32.mrb[0].mxu0
    %5492 = vmatprep.mubr.f32.mxu0 0.0
    %5493 = vmatmul.mubr.f32.gmra.mrb[0].mxu0 %v5343
    %v5494 = vpop.f32.mrb[0].mxu0
    %v5495 = vadd.f32 %v5292, %v5494
    %v5496 = vpop.f32.mrb[0].mxu0
    %5497 = vmatprep.mubr.f32.mxu0 0.0
    %5498 = vmatmul.mubr.f32.gmra.mrb[0].mxu0 %v5346
    %v5499 = vpop.f32.mrb[0].mxu0
    %v5500 = vadd.f32 %v5292, %v5499
    %v5501 = vpop.f32.mrb[0].mxu0
    %5502 = vdwg.mxu0
    %v5503 = vmul.f32 %v5415, %v4733
    %v5504 = vmul.f32 %v5420, %v4734
    %v5505 = vmul.f32 %v5425, %v4735
    %v5506 = vmul.f32 %v5430, %v4736
    %v5507 = vmul.f32 %v5435, %v4737
    %v5508 = vmul.f32 %v5440, %v4738
    %v5509 = vmul.f32 %v5445, %v4739
    %v5510 = vmul.f32 %v5450, %v4740
    %v5511 = vmul.f32 %v5455, %v4741
    %v5512 = vmul.f32 %v5460, %v4742
    %v5513 = vmul.f32 %v5465, %v4743
    %v5514 = vmul.f32 %v5470, %v4744
    %v5515 = vmul.f32 %v5475, %v4745
    %v5516 = vmul.f32 %v5480, %v4746
    %v5517 = vmul.f32 %v5485, %v4747
    %v5518 = vmul.f32 %v5490, %v4748
    %v5519 = vmul.f32 %v5495, %v4749
    %v5520 = vmul.f32 %v5500, %v4750
    %v5521 = vsel %vm32, %v5503, 0.0
    %v5522 = vsel %vm32, %v5504, 0.0
    %v5523 = vadd.f32 %v5521, %v5522
    %v5524 = vsel %vm32, %v5505, 0.0
    %v5525 = vadd.f32 %v5523, %v5524
    %v5526 = vsel %vm32, %v5506, 0.0
    %v5527 = vadd.f32 %v5525, %v5526
    %v5528 = vsel %vm32, %v5507, 0.0
    %v5529 = vadd.f32 %v5527, %v5528
    %v5530 = vsel %vm32, %v5508, 0.0
    %v5531 = vadd.f32 %v5529, %v5530
    %v5532 = vsel %vm32, %v5509, 0.0
    %v5533 = vadd.f32 %v5531, %v5532
    %v5534 = vsel %vm32, %v5510, 0.0
    %v5535 = vadd.f32 %v5533, %v5534
    %v5536 = vsel %vm32, %v5511, 0.0
    %v5537 = vadd.f32 %v5535, %v5536
    %v5538 = vsel %vm32, %v5512, 0.0
    %v5539 = vadd.f32 %v5537, %v5538
    %v5540 = vsel %vm32, %v5513, 0.0
    %v5541 = vadd.f32 %v5539, %v5540
    %v5542 = vsel %vm32, %v5514, 0.0
    %v5543 = vadd.f32 %v5541, %v5542
    %v5544 = vsel %vm32, %v5515, 0.0
    %v5545 = vadd.f32 %v5543, %v5544
    %v5546 = vsel %vm32, %v5516, 0.0
    %v5547 = vadd.f32 %v5545, %v5546
    %v5548 = vsel %vm32, %v5517, 0.0
    %v5549 = vadd.f32 %v5547, %v5548
    %v5550 = vsel %vm32, %v5518, 0.0
    %v5551 = vadd.f32 %v5549, %v5550
    %v5552 = vsel %vm32, %v5519, 0.0
    %v5553 = vadd.f32 %v5551, %v5552
    %v5554 = vsel %vm32, %v5520, 0.0
    %v5555 = vadd.f32 %v5553, %v5554
    %v5556 = vrot.slane %v5555, 4
    %v5557 = vadd.f32 %v5555, %v5556
    %v5558 = vrot.slane %v5557, 2
    %v5559 = vadd.f32 %v5557, %v5558
    %v5560 = vrot.slane %v5559, 1
    %v5561 = vadd.f32 %v5559, %v5560
    %v5562 = vmul.f32 %v5561, 0.0076923077
    %v5563 = vsub.f32 %v5415, %v5562
    %v5564 = vsub.f32 %v5420, %v5562
    %v5565 = vsub.f32 %v5425, %v5562
    %v5566 = vsub.f32 %v5430, %v5562
    %v5567 = vsub.f32 %v5435, %v5562
    %v5568 = vsub.f32 %v5440, %v5562
    %v5569 = vsub.f32 %v5445, %v5562
    %v5570 = vsub.f32 %v5450, %v5562
    %v5571 = vsub.f32 %v5455, %v5562
    %v5572 = vsub.f32 %v5460, %v5562
    %v5573 = vsub.f32 %v5465, %v5562
    %v5574 = vsub.f32 %v5470, %v5562
    %v5575 = vsub.f32 %v5475, %v5562
    %v5576 = vsub.f32 %v5480, %v5562
    %v5577 = vsub.f32 %v5485, %v5562
    %v5578 = vsub.f32 %v5490, %v5562
    %v5579 = vsub.f32 %v5495, %v5562
    %v5580 = vsub.f32 %v5500, %v5562
    %v5581 = vmul.f32 %v5563, %v4733
    %v5582 = vmul.f32 %v5564, %v4734
    %v5583 = vmul.f32 %v5565, %v4735
    %v5584 = vmul.f32 %v5566, %v4736
    %v5585 = vmul.f32 %v5567, %v4737
    %v5586 = vmul.f32 %v5568, %v4738
    %v5587 = vmul.f32 %v5569, %v4739
    %v5588 = vmul.f32 %v5570, %v4740
    %v5589 = vmul.f32 %v5571, %v4741
    %v5590 = vmul.f32 %v5572, %v4742
    %v5591 = vmul.f32 %v5573, %v4743
    %v5592 = vmul.f32 %v5574, %v4744
    %v5593 = vmul.f32 %v5575, %v4745
    %v5594 = vmul.f32 %v5576, %v4746
    %v5595 = vmul.f32 %v5577, %v4747
    %v5596 = vmul.f32 %v5578, %v4748
    %v5597 = vmul.f32 %v5579, %v4749
    %v5598 = vmul.f32 %v5580, %v4750
    %v5599 = vmul.f32 %v5581, %v5581
    %v5600 = vmul.f32 %v5582, %v5582
    %v5601 = vmul.f32 %v5583, %v5583
    %v5602 = vmul.f32 %v5584, %v5584
    %v5603 = vmul.f32 %v5585, %v5585
    %v5604 = vmul.f32 %v5586, %v5586
    %v5605 = vmul.f32 %v5587, %v5587
    %v5606 = vmul.f32 %v5588, %v5588
    %v5607 = vmul.f32 %v5589, %v5589
    %v5608 = vmul.f32 %v5590, %v5590
    %v5609 = vmul.f32 %v5591, %v5591
    %v5610 = vmul.f32 %v5592, %v5592
    %v5611 = vmul.f32 %v5593, %v5593
    %v5612 = vmul.f32 %v5594, %v5594
    %v5613 = vmul.f32 %v5595, %v5595
    %v5614 = vmul.f32 %v5596, %v5596
    %v5615 = vmul.f32 %v5597, %v5597
    %v5616 = vmul.f32 %v5598, %v5598
    %v5617 = vsel %vm32, %v5599, 0.0
    %v5618 = vsel %vm32, %v5600, 0.0
    %v5619 = vadd.f32 %v5617, %v5618
    %v5620 = vsel %vm32, %v5601, 0.0
    %v5621 = vadd.f32 %v5619, %v5620
    %v5622 = vsel %vm32, %v5602, 0.0
    %v5623 = vadd.f32 %v5621, %v5622
    %v5624 = vsel %vm32, %v5603, 0.0
    %v5625 = vadd.f32 %v5623, %v5624
    %v5626 = vsel %vm32, %v5604, 0.0
    %v5627 = vadd.f32 %v5625, %v5626
    %v5628 = vsel %vm32, %v5605, 0.0
    %v5629 = vadd.f32 %v5627, %v5628
    %v5630 = vsel %vm32, %v5606, 0.0
    %v5631 = vadd.f32 %v5629, %v5630
    %v5632 = vsel %vm32, %v5607, 0.0
    %v5633 = vadd.f32 %v5631, %v5632
    %v5634 = vsel %vm32, %v5608, 0.0
    %v5635 = vadd.f32 %v5633, %v5634
    %v5636 = vsel %vm32, %v5609, 0.0
    %v5637 = vadd.f32 %v5635, %v5636
    %v5638 = vsel %vm32, %v5610, 0.0
    %v5639 = vadd.f32 %v5637, %v5638
    %v5640 = vsel %vm32, %v5611, 0.0
    %v5641 = vadd.f32 %v5639, %v5640
    %v5642 = vsel %vm32, %v5612, 0.0
    %v5643 = vadd.f32 %v5641, %v5642
    %v5644 = vsel %vm32, %v5613, 0.0
    %v5645 = vadd.f32 %v5643, %v5644
    %v5646 = vsel %vm32, %v5614, 0.0
    %v5647 = vadd.f32 %v5645, %v5646
    %v5648 = vsel %vm32, %v5615, 0.0
    %v5649 = vadd.f32 %v5647, %v5648
    %v5650 = vsel %vm32, %v5616, 0.0
    %v5651 = vadd.f32 %v5649, %v5650
    %v5652 = vrot.slane %v5651, 4
    %v5653 = vadd.f32 %v5651, %v5652
    %v5654 = vrot.slane %v5653, 2
    %v5655 = vadd.f32 %v5653, %v5654
    %v5656 = vrot.slane %v5655, 1
    %v5657 = vadd.f32 %v5655, %v5656
    %v5658 = vmul.f32 %v5657, 0.0076923077
    %v5659 = vadd.f32 %v5658, 1e-05
    %v5660 = vrsqrt.pop %v5659
    %v5661 = vmul.f32 %v5563, %v5660
    %v5662 = vmul.f32 %v5564, %v5660
    %v5663 = vmul.f32 %v5565, %v5660
    %v5664 = vmul.f32 %v5566, %v5660
    %v5665 = vmul.f32 %v5567, %v5660
    %v5666 = vmul.f32 %v5568, %v5660
    %v5667 = vmul.f32 %v5569, %v5660
    %v5668 = vmul.f32 %v5570, %v5660
    %v5669 = vmul.f32 %v5571, %v5660
    %v5670 = vmul.f32 %v5572, %v5660
    %v5671 = vmul.f32 %v5573, %v5660
    %v5672 = vmul.f32 %v5574, %v5660
    %v5673 = vmul.f32 %v5575, %v5660
    %v5674 = vmul.f32 %v5576, %v5660
    %v5675 = vmul.f32 %v5577, %v5660
    %v5676 = vmul.f32 %v5578, %v5660
    %v5677 = vmul.f32 %v5579, %v5660
    %v5678 = vmul.f32 %v5580, %v5660
    %v5679 = vlaneseq
    %v5680 = vshrl.u32 %v5679, 7
    %v5681 = vsub.s32 4, %v5680
    %v5682 = vrot.slane %v4280, %v5681
    %v5683 = vmul.f32 %v5661, %v5682
    %v5684 = vmul.f32 %v5662, %v5682
    %v5685 = vmul.f32 %v5663, %v5682
    %v5686 = vmul.f32 %v5664, %v5682
    %v5687 = vmul.f32 %v5665, %v5682
    %v5688 = vmul.f32 %v5666, %v5682
    %v5689 = vmul.f32 %v5667, %v5682
    %v5690 = vmul.f32 %v5668, %v5682
    %v5691 = vmul.f32 %v5669, %v5682
    %v5692 = vmul.f32 %v5670, %v5682
    %v5693 = vmul.f32 %v5671, %v5682
    %v5694 = vmul.f32 %v5672, %v5682
    %v5695 = vmul.f32 %v5673, %v5682
    %v5696 = vmul.f32 %v5674, %v5682
    %v5697 = vmul.f32 %v5675, %v5682
    %v5698 = vmul.f32 %v5676, %v5682
    %v5699 = vmul.f32 %v5677, %v5682
    %v5700 = vmul.f32 %v5678, %v5682
    %v5701 = vlaneseq
    %v5702 = vshrl.u32 %v5701, 7
    %v5703 = vsub.s32 5, %v5702
    %v5704 = vrot.slane %v4280, %v5703
    %v5705 = vadd.f32 %v5683, %v5704
    %v5706 = vadd.f32 %v5684, %v5704
    %v5707 = vadd.f32 %v5685, %v5704
    %v5708 = vadd.f32 %v5686, %v5704
    %v5709 = vadd.f32 %v5687, %v5704
    %v5710 = vadd.f32 %v5688, %v5704
    %v5711 = vadd.f32 %v5689, %v5704
    %v5712 = vadd.f32 %v5690, %v5704
    %v5713 = vadd.f32 %v5691, %v5704
    %v5714 = vadd.f32 %v5692, %v5704
    %v5715 = vadd.f32 %v5693, %v5704
    %v5716 = vadd.f32 %v5694, %v5704
    %v5717 = vadd.f32 %v5695, %v5704
    %v5718 = vadd.f32 %v5696, %v5704
    %v5719 = vadd.f32 %v5697, %v5704
    %v5720 = vadd.f32 %v5698, %v5704
    %v5721 = vadd.f32 %v5699, %v5704
    %v5722 = vadd.f32 %v5700, %v5704
    %5723 = vxpose.xlu0.b32.start [1/16] %v5705, 128
    %5724 = vxpose.xlu0.b32.cont [2/16] %v5706, 128
    %5725 = vxpose.xlu0.b32.cont [3/16] %v5707, 128
    %5726 = vxpose.xlu0.b32.cont [4/16] %v5708, 128
    %5727 = vxpose.xlu0.b32.cont [5/16] %v5709, 128
    %5728 = vxpose.xlu0.b32.cont [6/16] %v5710, 128
    %5729 = vxpose.xlu0.b32.cont [7/16] %v5711, 128
    %5730 = vxpose.xlu0.b32.cont [8/16] %v5712, 128
    %5731 = vxpose.xlu0.b32.cont [9/16] 0.0, 128
    %5732 = vxpose.xlu0.b32.cont [10/16] 0.0, 128
    %5733 = vxpose.xlu0.b32.cont [11/16] 0.0, 128
    %5734 = vxpose.xlu0.b32.cont [12/16] 0.0, 128
    %5735 = vxpose.xlu0.b32.cont [13/16] 0.0, 128
    %5736 = vxpose.xlu0.b32.cont [14/16] 0.0, 128
    %5737 = vxpose.xlu0.b32.cont [15/16] 0.0, 128
    %5738 = vxpose.xlu0.b32.end [16/16] 0.0, 128
    %v5739 = vpop.trf.xlu0
    %v5740 = vpop.trf.xlu0
    %v5741 = vpop.trf.xlu0
    %v5742 = vpop.trf.xlu0
    %v5743 = vpop.trf.xlu0
    %v5744 = vpop.trf.xlu0
    %v5745 = vpop.trf.xlu0
    %v5746 = vpop.trf.xlu0
    %v5747 = vpop.trf.xlu0
    %v5748 = vpop.trf.xlu0
    %v5749 = vpop.trf.xlu0
    %v5750 = vpop.trf.xlu0
    %v5751 = vpop.trf.xlu0
    %v5752 = vpop.trf.xlu0
    %v5753 = vpop.trf.xlu0
    %v5754 = vpop.trf.xlu0
    %5755 = vst.msk [vmem:[%s8] sm:$0xff] %vm5293, %v5739
    %5756 = vst.msk [vmem:[%s8 + $0x8] sm:$0xff] %vm5293, %v5740
    %5757 = vst.msk [vmem:[%s8 + $0x10] sm:$0xff] %vm5293, %v5741
    %5758 = vst.msk [vmem:[%s8 + $0x18] sm:$0xff] %vm5293, %v5742
    %5759 = vst.msk [vmem:[#allocation4] sm:$0x1] %vm114, %v5713
    %5760 = vxpose.xlu0.b32.start [1/16] %v5714, 128
    %5761 = vxpose.xlu0.b32.cont [2/16] %v5715, 128
    %5762 = vxpose.xlu0.b32.cont [3/16] %v5716, 128
    %5763 = vxpose.xlu0.b32.cont [4/16] %v5717, 128
    %5764 = vxpose.xlu0.b32.cont [5/16] %v5718, 128
    %5765 = vxpose.xlu0.b32.cont [6/16] %v5719, 128
    %5766 = vxpose.xlu0.b32.cont [7/16] %v5720, 128
    %5767 = vxpose.xlu0.b32.cont [8/16] %v5721, 128
    %5768 = vxpose.xlu0.b32.cont [9/16] 0.0, 128
    %5769 = vxpose.xlu0.b32.cont [10/16] 0.0, 128
    %5770 = vxpose.xlu0.b32.cont [11/16] 0.0, 128
    %5771 = vxpose.xlu0.b32.cont [12/16] 0.0, 128
    %5772 = vxpose.xlu0.b32.cont [13/16] 0.0, 128
    %5773 = vxpose.xlu0.b32.cont [14/16] 0.0, 128
    %5774 = vxpose.xlu0.b32.cont [15/16] 0.0, 128
    %5775 = vxpose.xlu0.b32.end [16/16] 0.0, 128
    %v5776 = vpop.trf.xlu0
    %v5777 = vpop.trf.xlu0
    %v5778 = vpop.trf.xlu0
    %v5779 = vpop.trf.xlu0
    %v5780 = vpop.trf.xlu0
    %v5781 = vpop.trf.xlu0
    %v5782 = vpop.trf.xlu0
    %v5783 = vpop.trf.xlu0
    %v5784 = vpop.trf.xlu0
    %v5785 = vpop.trf.xlu0
    %v5786 = vpop.trf.xlu0
    %v5787 = vpop.trf.xlu0
    %v5788 = vpop.trf.xlu0
    %v5789 = vpop.trf.xlu0
    %v5790 = vpop.trf.xlu0
    %v5791 = vpop.trf.xlu0
    %s5792 = scalar_lea.vmem %s8, 32
    %5793 = vst.msk [vmem:[%s5792] sm:$0xff] %vm5293, %v5776
    %5794 = vst.msk [vmem:[%s5792 + $0x8] sm:$0xff] %vm5293, %v5777
    %5795 = vst.msk [vmem:[%s5792 + $0x10] sm:$0xff] %vm5293, %v5778
    %5796 = vst.msk [vmem:[%s5792 + $0x18] sm:$0xff] %vm5293, %v5779
    %s5797 = scalar_lea.vmem [#allocation4], 1
    %5798 = vst.msk [vmem:[%s5797] sm:$0x1] %vm114, %v5722
    // Predicated region
    $region34: #{deep_attention_cls_forward.1} parent=1 // pred_check
      _
    $region35: #{deep_attention_cls_forward.1} parent=1 // pred_check_branch
      %5800 = sbr.rel (0) target = $region37
    $region36: #{deep_attention_cls_forward.1} parent=1 // pred_region
      _
    $region37: #{deep_attention_cls_forward.1} parent=1 // pred_fallthru
      _
    // Predicated region
    $region38: #{deep_attention_cls_forward.1} parent=1 // pred_check
      _
    $region39: #{deep_attention_cls_forward.1} parent=1 // pred_check_branch
      %5802 = sbr.rel (0) target = $region41
    $region40: #{deep_attention_cls_forward.1} parent=1 // pred_region
      %s5804 = ssub.s32 32, 32
      %5805 = vsyncadd [#allocation5], %s5804
      %s5806 = sshll.u32 [#allocation4], 4
      %s5807 = int_to_ptr.vmem [resolvable:$true] %s5806
      %5812 = dma.vmem_to_hbm [thread:$0]  %s5807, 32, %s9, [#allocation5], 16, 16, 1
    $region41: #{deep_attention_cls_forward.1} parent=1 // pred_fallthru
      _
    // Predicated region
    $region42: #{deep_attention_cls_forward.1} parent=1 // pred_check
      _
    $region43: #{deep_attention_cls_forward.1} parent=1 // pred_check_branch
      %5814 = sbr.rel (0) target = $region45
    $region44: #{deep_attention_cls_forward.1} parent=1 // pred_region
      _
    $region45: #{deep_attention_cls_forward.1} parent=1 // pred_fallthru
      _
    // Predicated region
    $region46: #{deep_attention_cls_forward.1} parent=1 // pred_check
      _
    $region47: #{deep_attention_cls_forward.1} parent=1 // pred_check_branch
      %5816 = sbr.rel (0) target = $region49
    $region48: #{deep_attention_cls_forward.1} parent=1 // pred_region
      %5817 = dma.done [#allocation5], 32
    $region49: #{deep_attention_cls_forward.1} parent=1 // pred_fallthru
      _
    %5818 = vsyncpa [#allocation5], 1

</llo_original>
